<compile_context>
chip_gen: v6e
topology: v6e:2x2x1
jax: 0.10.0
libtpu: 0.0.40
codegen_flags: <defaults>
</compile_context>

<pallas_src>
import functools
import math

import jax
import jax.numpy as jnp
from jax.experimental import pallas as pl
from jax.experimental.pallas import tpu as pltpu


def _lookup_align_conv_kernel(x_ref, w_ref, b_ref, o_ref, *,
                              kh, kw, sh, sw, oh, ow, nb):
    """One block of `nb` batch images per grid step.

    x_ref : (nb, H, W, Cin)         VMEM, bf16 (raw image block)
    w_ref : (KH*KW*Cin, Cout_pad)   VMEM, bf16 (thresholded, im2col layout, lane-padded)
    b_ref : (1, Cout_pad)           VMEM, f32
    o_ref : (nb, OH*OW, Cout_pad)   VMEM, f32 (flat, lane-dense store)
    """
    cin = x_ref.shape[-1]
    cout_p = o_ref.shape[-1]
    m = nb * oh * ow

    x = x_ref[...]                                   # (nb, H, W, Cin)

    # im2col: gather the KH*KW shifted/strided windows and concatenate them along
    # the channel (lane) axis, giving one (M, KH*KW*Cin) operand. The whole conv
    # then becomes a single MXU matmul per grid step.
    cols = []
    for i in range(kh):
        for j in range(kw):
            # TODO(synk): for sh/sw > 1 a wrapper-side (OW, sw, Cin) layout would make
            # this a contiguous slice; the test configuration uses stride (1, 1).
            patch = jax.lax.slice(
                x,
                (0, i, j, 0),
                (nb, i + (oh - 1) * sh + 1, j + (ow - 1) * sw + 1, cin),
                (1, sh, sw, 1))                      # (nb, OH, OW, Cin)
            cols.append(patch.reshape(m, cin))       # (M, Cin)
    patches = jnp.concatenate(cols, axis=-1)         # (M, KH*KW*Cin)

    # Single matmul (f32 accumulation on the MXU) + one bias pass. The per-tap
    # accumulator chain of the previous version is gone entirely.
    out = jnp.dot(patches, w_ref[...],
                  preferred_element_type=jnp.float32) + b_ref[...]
    out = out.astype(o_ref.dtype)

    # Flat lane-dense store; no in-kernel (OH, OW) reshape of the output block.
    if nb == 1:
        o_ref[0] = out                               # (OH*OW, Cout_pad)
    else:
        o_ref[...] = out.reshape(nb, oh * ow, cout_p)


def _auto_block_n(n, h, w_in, cin, oh, ow, cout_p, *, target_m=2048,
                  vmem_budget=16 * 1024 * 1024):
    """Largest batch block that (a) keeps >= 2 parallel grid steps when possible
    (v7x: 2 TensorCores), (b) keeps M = bn*OH*OW <= target_m, (c) fits VMEM."""
    best = 1
    for bn in range(1, n + 1):
        if n % bn:
            continue
        m = bn * oh * ow
        blk_bytes = 2 * (bn * h * w_in * cin * 2 + bn * oh * ow * cout_p * 4)
        if m > target_m or blk_bytes > vmem_budget:
            break
        if n // bn >= 2 or n == 1:
            best = bn
    return best


def lookup_align_conv2d(x, weight_oihw, bias, *, stride=(1, 1),
                        sparse_th=0.01, block_n=None):
    """x: (N, H, W, Cin) float32, weight_oihw: (Cout, Cin, KH, KW), bias: (Cout,)."""
    n, h, w_in, cin = x.shape
    cout, cin_w, kh, kw = weight_oihw.shape
    assert cin == cin_w, "groups != 1 not supported"  # TODO(synk): groups > 1 path
    sh, sw = stride
    oh = (h - kh + sh) // sh
    ow = (w_in - kw + sw) // sw
    assert oh > 0 and ow > 0

    lane = 128
    cout_p = ((cout + lane - 1) // lane) * lane
    k_dim = kh * kw * cin

    if block_n is None:
        block_n = _auto_block_n(n, h, w_in, cin, oh, ow, cout_p)
    assert n % block_n == 0

    # --- Grid-invariant prep done once in the wrapper (not per grid step) ---
    # 1. Sparse threshold (== the module's sparse-COO indices/values path).
    w_f32 = weight_oihw.astype(jnp.float32)
    w_f32 = jnp.where(jnp.abs(w_f32) < sparse_th, jnp.zeros_like(w_f32), w_f32)
    # 2. OIHW -> im2col layout (KH*KW*Cin, Cout_pad): Cout padded to 128 lanes so
    #    the matmul N dim and the output store are lane-dense. bf16 MXU operands.
    #    TODO(synk): K = KH*KW*Cin is far from the MXU depth here; pad K toward
    #    128 (v5e) / 256 (v6e+) only when it gets close, zero-padding adds no work.
    w_mat = jnp.transpose(w_f32, (2, 3, 1, 0)).reshape(k_dim, cout)
    w_p = jnp.pad(w_mat, ((0, 0), (0, cout_p - cout))).astype(jnp.bfloat16)
    b_p = jnp.pad(bias.astype(jnp.float32), (0, cout_p - cout)).reshape(1, cout_p)
    x_bf = x.astype(jnp.bfloat16)

    grid = (n // block_n,)

    # Explicit VMEM budget (double-buffered pipelined blocks + grid-invariant consts).
    in_block = block_n * h * w_in * cin * 2
    out_block = block_n * oh * ow * cout_p * 4
    const_bytes = k_dim * cout_p * 2 + cout_p * 4
    vmem_needed = 2 * (in_block + out_block + const_bytes)
    vmem_limit = int(min(64 * 1024 * 1024, max(2 * vmem_needed, 16 * 1024 * 1024)))

    flops = 2 * n * oh * ow * k_dim * cout
    bytes_accessed = (x_bf.size * 2 + k_dim * cout * 2 + cout * 4
                      + n * oh * ow * cout * 4)

    kernel = functools.partial(
        _lookup_align_conv_kernel,
        kh=kh, kw=kw, sh=sh, sw=sw, oh=oh, ow=ow, nb=block_n)

    out_p = pl.pallas_call(
        kernel,
        out_shape=jax.ShapeDtypeStruct((n, oh * ow, cout_p), x.dtype),
        grid_spec=pltpu.PrefetchScalarGridSpec(
            num_scalar_prefetch=0,
            grid=grid,
            in_specs=[
                # TODO(synk): Cin=4 keeps this block lane-sparse; for production
                # channel counts fold (W, Cin) into the lane dim in the wrapper.
                pl.BlockSpec((block_n, h, w_in, cin), lambda b: (b, 0, 0, 0)),
                # Grid-invariant weight / bias blocks.
                # TODO(synk): single-buffer these (pl.Buffered(1) / scratch preload)
                # once Cin*Cout is large enough for the second pipeline buffer to matter.
                pl.BlockSpec((k_dim, cout_p), lambda b: (0, 0)),
                pl.BlockSpec((1, cout_p), lambda b: (0, 0)),
            ],
            out_specs=pl.BlockSpec((block_n, oh * ow, cout_p),
                                   lambda b: (b, 0, 0)),
        ),
        compiler_params=pltpu.CompilerParams(
            dimension_semantics=("parallel",),
            vmem_limit_bytes=vmem_limit),
        cost_estimate=pl.CostEstimate(
            flops=flops, transcendentals=0, bytes_accessed=bytes_accessed),
    )(x_bf, w_p, b_p)

    # TODO(synk): for large images on v7x (64 MiB VMEM) add an OH-block grid axis
    # with a (KH-1)-row input halo; whole-image blocks are fine at these sizes.
    # TODO(synk): if Cout stays far below 128 in production, emit a bf16 output or
    # pack several spatial rows per 128-lane tile to cut HBM write amplification.
    # Un-flatten (OH, OW) and drop padded channels in the wrapper (free in XLA).
    return out_p.reshape(n, oh, ow, cout_p)[..., :cout]


def _reference(x, weight_oihw, bias, *, stride=(1, 1), sparse_th=0.01,
               cast_bf16=False):
    """Pure-JAX reference for the same semantics."""
    w = jnp.where(jnp.abs(weight_oihw) < sparse_th,
                  jnp.zeros_like(weight_oihw), weight_oihw)
    w_hwio = jnp.transpose(w, (2, 3, 1, 0))
    if cast_bf16:
        x = x.astype(jnp.bfloat16)
        w_hwio = w_hwio.astype(jnp.bfloat16)
    out = jax.lax.conv_general_dilated(
        x, w_hwio, window_strides=stride, padding="VALID",
        dimension_numbers=("NHWC", "HWIO", "NHWC"),
        preferred_element_type=jnp.float32)
    return out + bias.reshape(1, 1, 1, -1)


if __name__ == "__main__":
    # Small configuration consistent with the PyTorch module defaults.
    in_channels, out_channels = 4, 8
    kernel_size = (3, 3)
    stride = (1, 1)
    sparse_th = 0.01

    N, H, W = 2, 16, 16

    key = jax.random.PRNGKey(0)
    kx, kw_key, kb_key = jax.random.split(key, 3)

    # Input: NHWC (channels last, as the module expects).
    x = jax.random.normal(kx, (N, H, W, in_channels), dtype=jnp.float32)

    # Deterministic parameter init mirroring reset_parameters():
    #   kaiming_uniform_(a=sqrt(5)) == U(-1/sqrt(fan_in), 1/sqrt(fan_in))
    fan_in = in_channels * kernel_size[0] * kernel_size[1]
    bound = 1.0 / math.sqrt(fan_in)
    weight = jax.random.uniform(
        kw_key, (out_channels, in_channels, *kernel_size),
        dtype=jnp.float32, minval=-bound, maxval=bound)
    bias = jax.random.uniform(
        kb_key, (out_channels,), dtype=jnp.float32, minval=-bound, maxval=bound)

    oh = (H - kernel_size[0] + stride[0]) // stride[0]
    ow = (W - kernel_size[1] + stride[1]) // stride[1]

    # Auto block_n (-> block_n=1, grid of 2 "parallel" steps: both v7x TCs get work).
    out = lookup_align_conv2d(x, weight, bias, stride=stride, sparse_th=sparse_th)
    out = jax.block_until_ready(out)
    assert out.shape == (N, oh, ow, out_channels)

    # Tight check against a reference that uses the same bf16 operand precision.
    ref_bf16 = _reference(x, weight, bias, stride=stride, sparse_th=sparse_th,
                          cast_bf16=True)
    if not jnp.allclose(out, ref_bf16, atol=2e-3, rtol=2e-3):
        raise AssertionError("Pallas kernel does not match bf16-operand reference")

    # Loose sanity check against the full-f32 reference semantics.
    ref_f32 = _reference(x, weight, bias, stride=stride, sparse_th=sparse_th)
    if not jnp.allclose(out, ref_f32, atol=5e-2, rtol=5e-2):
        raise AssertionError("Pallas kernel deviates too far from f32 reference")

    # Exercise the block_n > 1 path (single grid step, multi-image store).
    out2 = lookup_align_conv2d(x, weight, bias, stride=stride,
                               sparse_th=sparse_th, block_n=2)
    out2 = jax.block_until_ready(out2)
    if not jnp.allclose(out2, ref_bf16, atol=2e-3, rtol=2e-3):
        raise AssertionError("block_n=2 path does not match bf16-operand reference")

    print("KERNEL_OK")
</pallas_src>

<mosaic_0001>
module attributes {stable_mosaic.version = 11 : i64} {
  func.func @_lookup_align_conv_kernel(%arg0: i32, %arg1: memref<1x16x16x4xbf16, #tpu.memory_space<vmem>>, %arg2: memref<36x128xbf16, #tpu.memory_space<vmem>>, %arg3: memref<1x128xf32, #tpu.memory_space<vmem>>, %arg4: memref<1x196x128xf32, #tpu.memory_space<vmem>>) attributes {dimension_semantics = [#tpu.dimension_semantics<parallel>], iteration_bounds = array<i64: 2>, scalar_prefetch = 0 : i64, scratch_operands = 0 : i64, tpu.core_type = #tpu.core_type<tc>, window_params = [{transform_indices = @transform_0, window_bounds = array<i64: 1, 16, 16, 4>}, {pipeline_mode = #tpu.pipeline_mode<synchronous>, transform_indices = @transform_1, window_bounds = array<i64: 36, 128>}, {pipeline_mode = #tpu.pipeline_mode<synchronous>, transform_indices = @transform_2, window_bounds = array<i64: 1, 128>}, {transform_indices = @transform_3, window_bounds = array<i64: 1, 196, 128>}]} {
    %c0 = arith.constant 0 : index
    %c0_0 = arith.constant 0 : index
    %c0_1 = arith.constant 0 : index
    %c0_2 = arith.constant 0 : index
    %0 = vector.load %arg1[%c0, %c0_0, %c0_1, %c0_2] : memref<1x16x16x4xbf16, #tpu.memory_space<vmem>>, vector<1x16x16x4xbf16>
    %1 = vector.extract_strided_slice %0 {offsets = [0, 0, 0, 0], sizes = [1, 14, 14, 4], strides = [1, 1, 1, 1]} : vector<1x16x16x4xbf16> to vector<1x14x14x4xbf16>
    %2 = vector.shape_cast %1 : vector<1x14x14x4xbf16> to vector<196x4xbf16>
    %3 = vector.extract_strided_slice %0 {offsets = [0, 0, 1, 0], sizes = [1, 14, 14, 4], strides = [1, 1, 1, 1]} : vector<1x16x16x4xbf16> to vector<1x14x14x4xbf16>
    %4 = vector.shape_cast %3 : vector<1x14x14x4xbf16> to vector<196x4xbf16>
    %5 = vector.extract_strided_slice %0 {offsets = [0, 0, 2, 0], sizes = [1, 14, 14, 4], strides = [1, 1, 1, 1]} : vector<1x16x16x4xbf16> to vector<1x14x14x4xbf16>
    %6 = vector.shape_cast %5 : vector<1x14x14x4xbf16> to vector<196x4xbf16>
    %7 = vector.extract_strided_slice %0 {offsets = [0, 1, 0, 0], sizes = [1, 14, 14, 4], strides = [1, 1, 1, 1]} : vector<1x16x16x4xbf16> to vector<1x14x14x4xbf16>
    %8 = vector.shape_cast %7 : vector<1x14x14x4xbf16> to vector<196x4xbf16>
    %9 = vector.extract_strided_slice %0 {offsets = [0, 1, 1, 0], sizes = [1, 14, 14, 4], strides = [1, 1, 1, 1]} : vector<1x16x16x4xbf16> to vector<1x14x14x4xbf16>
    %10 = vector.shape_cast %9 : vector<1x14x14x4xbf16> to vector<196x4xbf16>
    %11 = vector.extract_strided_slice %0 {offsets = [0, 1, 2, 0], sizes = [1, 14, 14, 4], strides = [1, 1, 1, 1]} : vector<1x16x16x4xbf16> to vector<1x14x14x4xbf16>
    %12 = vector.shape_cast %11 : vector<1x14x14x4xbf16> to vector<196x4xbf16>
    %13 = vector.extract_strided_slice %0 {offsets = [0, 2, 0, 0], sizes = [1, 14, 14, 4], strides = [1, 1, 1, 1]} : vector<1x16x16x4xbf16> to vector<1x14x14x4xbf16>
    %14 = vector.shape_cast %13 : vector<1x14x14x4xbf16> to vector<196x4xbf16>
    %15 = vector.extract_strided_slice %0 {offsets = [0, 2, 1, 0], sizes = [1, 14, 14, 4], strides = [1, 1, 1, 1]} : vector<1x16x16x4xbf16> to vector<1x14x14x4xbf16>
    %16 = vector.shape_cast %15 : vector<1x14x14x4xbf16> to vector<196x4xbf16>
    %17 = vector.extract_strided_slice %0 {offsets = [0, 2, 2, 0], sizes = [1, 14, 14, 4], strides = [1, 1, 1, 1]} : vector<1x16x16x4xbf16> to vector<1x14x14x4xbf16>
    %18 = vector.shape_cast %17 : vector<1x14x14x4xbf16> to vector<196x4xbf16>
    %19 = tpu.concatenate %2, %4, %6, %8, %10, %12, %14, %16, %18 in 1 : vector<196x4xbf16>, vector<196x4xbf16>, vector<196x4xbf16>, vector<196x4xbf16>, vector<196x4xbf16>, vector<196x4xbf16>, vector<196x4xbf16>, vector<196x4xbf16>, vector<196x4xbf16> -> vector<196x36xbf16>
    %c0_3 = arith.constant 0 : index
    %c0_4 = arith.constant 0 : index
    %20 = vector.load %arg2[%c0_3, %c0_4] : memref<36x128xbf16, #tpu.memory_space<vmem>>, vector<36x128xbf16>
    %cst = arith.constant dense<0.000000e+00> : vector<196x128xf32>
    %21 = tpu.matmul %19, %20, %cst {dimension_numbers = #tpu.dot_dimension_numbers<[1], [0], [0], [1], [0, 0, 1, 1], [], []>} : vector<196x36xbf16>, vector<36x128xbf16>, vector<196x128xf32> -> vector<196x128xf32>
    %c0_5 = arith.constant 0 : index
    %c0_6 = arith.constant 0 : index
    %22 = vector.load %arg3[%c0_5, %c0_6] : memref<1x128xf32, #tpu.memory_space<vmem>>, vector<1x128xf32>
    %23 = vector.broadcast %22 : vector<1x128xf32> to vector<196x128xf32>
    %24 = arith.addf %21, %23 : vector<196x128xf32>
    %c0_7 = arith.constant 0 : index
    %c0_8 = arith.constant 0 : index
    %c0_9 = arith.constant 0 : index
    %25 = vector.load %arg4[%c0_7, %c0_8, %c0_9] : memref<1x196x128xf32, #tpu.memory_space<vmem>>, vector<1x196x128xf32>
    %26 = vector.shape_cast %25 : vector<1x196x128xf32> to vector<196x128xf32>
    %27 = vector.shape_cast %24 : vector<196x128xf32> to vector<1x196x128xf32>
    tpu.vector_store %arg4[%c0_7, %c0_8, %c0_9], %27 {strides = array<i32>} : memref<1x196x128xf32, #tpu.memory_space<vmem>>, vector<1x196x128xf32>,
    return
  }
  func.func @transform_0(%arg0: i32) -> (i32, i32, i32, i32) {
    %c0_i32 = arith.constant 0 : i32
    %c0_i32_0 = arith.constant 0 : i32
    %c0_i32_1 = arith.constant 0 : i32
    %c0_i32_2 = arith.constant 0 : i32
    return %arg0, %c0_i32, %c0_i32_0, %c0_i32_1 : i32, i32, i32, i32
  }
  func.func @transform_1(%arg0: i32) -> (i32, i32) {
    %c0_i32 = arith.constant 0 : i32
    %c0_i32_0 = arith.constant 0 : i32
    %c0_i32_1 = arith.constant 0 : i32
    return %c0_i32, %c0_i32_0 : i32, i32
  }
  func.func @transform_2(%arg0: i32) -> (i32, i32) {
    %c0_i32 = arith.constant 0 : i32
    %c0_i32_0 = arith.constant 0 : i32
    %c0_i32_1 = arith.constant 0 : i32
    return %c0_i32, %c0_i32_0 : i32, i32
  }
  func.func @transform_3(%arg0: i32) -> (i32, i32, i32) {
    %c0_i32 = arith.constant 0 : i32
    %c0_i32_0 = arith.constant 0 : i32
    %c0_i32_1 = arith.constant 0 : i32
    return %arg0, %c0_i32, %c0_i32_0 : i32, i32, i32
  }
}

</mosaic_0001>

<llo_original>
// kernel: tpu_custom_call.1
$region0: #{tpu_custom_call.1}
  #allocation0 [shape = 'u32[]', space=smem, size = 0x4, offset = 0x4, fixed_abs, tag = 'smem constant byte address 0x4 - core index']
  #allocation1 [shape = 'u32[144,128]{1,0:T(1,128)}', space=vmem, size = 0x12000, scoped, tag = 'internal scratch']
  %s0 = inlined_call_operand.vmem [shape: bf16[2,16,16,4], index: 0, kind: input, shape index: {}]
  %s1 = inlined_call_operand.vmem [shape: bf16[36,128], index: 1, kind: input, shape index: {}]
  %s2 = inlined_call_operand.vmem [shape: f32[1,128], index: 2, kind: input, shape index: {}]
  %s3 = inlined_call_operand.vmem [shape: f32[2,196,128], index: 3, kind: output, shape index: {}]
  %s4 = sld [smem:[#allocation0]]
  $region45: #{tpu_custom_call.1} parent=0
    _
  %s6 = ssub.s32 1, %s4
  %s7 = scalar_select 0, %s6, %s4
  loop: start=0, step=1, limit=4
  $region2: #{tpu_custom_call.1} parent=0 // loop_pre_header
    _
  $region3: #{tpu_custom_call.1} parent=0 // loop_header
    %s9 = sphi 0, %s13
    %p10 = scmp.ge.s32.totalorder %s9, 4
    %s19 = sphi 0, %s21
    %s22 = sphi 0, %s19
    %s23 = sphi 0, %s22
    %s39 = sphi 0, %s23
    %s43 = sphi 0, %s43
    %s45 = sphi 0, %s43
    %s46 = sphi 0, %s45
    %s60 = sphi 0, %s46
    %s64 = sphi 0, %s64
    %s66 = sphi 0, %s64
    %s67 = sphi 0, %s66
    %s81 = sphi 0, %s67
    %s87 = sphi 0, %s89
    %s90 = sphi 0, %s87
    %s91 = sphi 0, %s90
    %s107 = sphi 0, %s91
  $region4: #{tpu_custom_call.1} parent=0 // loop_header_branch
    %12 = sbr.rel (%p10) target = $region8
  $region5: #{tpu_custom_call.1} parent=0 // loop_body
    %s14 = ssub.s32 %s9, 1
    %s15 = ssub.s32 %s9, 2
    %s16 = sadd.s32 %s9, 1
    %s17 = ssub.s32 %s9, %s16
    %p18 = scmp.eq.s32.totalorder %s17, 0
    %s20 = sadd.s32 %s19, 1
    %s21 = scalar_select %p18, %s19, %s20
    %p24 = pneg %p18
    %p25 = scmp.eq.s32.totalorder %s9, 1
    %p26 = por %p24, %p25
    %p27 = scmp.ne.s32.totalorder %s19, %s22
    %p28 = scmp.eq.s32.totalorder %s9, 0
    %p29 = por %p27, %p28
    %p30 = scmp.ne.s32.totalorder %s19, %s22
    %p31 = scmp.eq.s32.totalorder %s14, 1
    %p32 = por %p30, %p31
    %p33 = scmp.ne.s32.totalorder %s22, %s23
    %p34 = scmp.eq.s32.totalorder %s14, 0
    %p35 = por %p33, %p34
    %p36 = scmp.ne.s32.totalorder %s22, %s23
    %p37 = scmp.eq.s32.totalorder %s15, 1
    %p38 = por %p36, %p37
    %p40 = scmp.ne.s32.totalorder %s23, %s39
    %p41 = scmp.eq.s32.totalorder %s15, 0
    %p42 = por %p40, %p41
    %s44 = sadd.s32 %s43, 1
    %p47 = scmp.eq.s32.totalorder %s9, 1
    %p48 = scmp.ne.s32.totalorder %s43, %s45
    %p49 = scmp.eq.s32.totalorder %s9, 0
    %p50 = por %p48, %p49
    %p51 = scmp.ne.s32.totalorder %s43, %s45
    %p52 = scmp.eq.s32.totalorder %s14, 1
    %p53 = por %p51, %p52
    %p54 = scmp.ne.s32.totalorder %s45, %s46
    %p55 = scmp.eq.s32.totalorder %s14, 0
    %p56 = por %p54, %p55
    %p57 = scmp.ne.s32.totalorder %s45, %s46
    %p58 = scmp.eq.s32.totalorder %s15, 1
    %p59 = por %p57, %p58
    %p61 = scmp.ne.s32.totalorder %s46, %s60
    %p62 = scmp.eq.s32.totalorder %s15, 0
    %p63 = por %p61, %p62
    %s65 = sadd.s32 %s64, 1
    %p68 = scmp.eq.s32.totalorder %s9, 1
    %p69 = scmp.ne.s32.totalorder %s64, %s66
    %p70 = scmp.eq.s32.totalorder %s9, 0
    %p71 = por %p69, %p70
    %p72 = scmp.ne.s32.totalorder %s64, %s66
    %p73 = scmp.eq.s32.totalorder %s14, 1
    %p74 = por %p72, %p73
    %p75 = scmp.ne.s32.totalorder %s66, %s67
    %p76 = scmp.eq.s32.totalorder %s14, 0
    %p77 = por %p75, %p76
    %p78 = scmp.ne.s32.totalorder %s66, %s67
    %p79 = scmp.eq.s32.totalorder %s15, 1
    %p80 = por %p78, %p79
    %p82 = scmp.ne.s32.totalorder %s67, %s81
    %p83 = scmp.eq.s32.totalorder %s15, 0
    %p84 = por %p82, %p83
    %s85 = ssub.s32 %s9, %s16
    %p86 = scmp.eq.s32.totalorder %s85, 0
    %s88 = sadd.s32 %s87, 1
    %s89 = scalar_select %p86, %s87, %s88
    %p92 = pneg %p86
    %p93 = scmp.eq.s32.totalorder %s9, 1
    %p94 = por %p92, %p93
    %p95 = scmp.ne.s32.totalorder %s87, %s90
    %p96 = scmp.eq.s32.totalorder %s9, 0
    %p97 = por %p95, %p96
    %p98 = scmp.ne.s32.totalorder %s87, %s90
    %p99 = scmp.eq.s32.totalorder %s14, 1
    %p100 = por %p98, %p99
    %p101 = scmp.ne.s32.totalorder %s90, %s91
    %p102 = scmp.eq.s32.totalorder %s14, 0
    %p103 = por %p101, %p102
    %p104 = scmp.ne.s32.totalorder %s90, %s91
    %p105 = scmp.eq.s32.totalorder %s15, 1
    %p106 = por %p104, %p105
    %p108 = scmp.ne.s32.totalorder %s91, %s107
    %p109 = scmp.eq.s32.totalorder %s15, 0
    %p110 = por %p108, %p109
    %p111 = scmp.le.s32.totalorder 1, %s9
    %p112 = scmp.lt.s32.totalorder %s9, 3
    %p113 = pnand %p111, %p112
    %p114 = pneg %p113
    // Predicated region
    $region9: #{tpu_custom_call.1} parent=5 // pred_check
      _
    $region10: #{tpu_custom_call.1} parent=5 // pred_check_branch
      %116 = sbr.rel (%p113) target = $region12
    $region11: #{tpu_custom_call.1} parent=5 // pred_region
      %s117 = ssub.s32 %s9, 1
      // Predicated region
      $region13: #{tpu_custom_call.1} parent=11 // pred_check
        %p118 = pneg %p56
      $region14: #{tpu_custom_call.1} parent=11 // pred_check_branch
        %120 = sbr.rel (%p118) target = $region16
      $region15: #{tpu_custom_call.1} parent=11 // pred_region
        _
      $region16: #{tpu_custom_call.1} parent=11 // pred_fallthru
        _
      // Predicated region
      $region17: #{tpu_custom_call.1} parent=11 // pred_check
        %p121 = pneg %p77
      $region18: #{tpu_custom_call.1} parent=11 // pred_check_branch
        %123 = sbr.rel (%p121) target = $region20
      $region19: #{tpu_custom_call.1} parent=11 // pred_region
        _
      $region20: #{tpu_custom_call.1} parent=11 // pred_fallthru
        _
    $region12: #{tpu_custom_call.1} parent=5 // pred_fallthru
      _
    %p124 = scmp.lt.s32.totalorder %s9, 2
    // Predicated region
    $region21: #{tpu_custom_call.1} parent=5 // pred_check
      %p125 = pneg %p124
    $region22: #{tpu_custom_call.1} parent=5 // pred_check_branch
      %127 = sbr.rel (%p125) target = $region24
    $region23: #{tpu_custom_call.1} parent=5 // pred_region
      // Predicated region
      $region25: #{tpu_custom_call.1} parent=23 // pred_check
        %p128 = pneg %p29
      $region26: #{tpu_custom_call.1} parent=23 // pred_check_branch
        %130 = sbr.rel (%p128) target = $region28
      $region27: #{tpu_custom_call.1} parent=23 // pred_region
        %p131 = scmp.lt.s32.totalorder %s9, 1
        %s132 = scalar_select %p131, %s9, 1
        %s133 = smul.addr %s132, 32
        %s134 = smul.addr %s133, 4
        %s135 = scalar_lea.vmem %s0, %s134
      $region28: #{tpu_custom_call.1} parent=23 // pred_fallthru
        _
    $region24: #{tpu_custom_call.1} parent=5 // pred_fallthru
      _
    %p136 = scmp.le.s32.totalorder 1, %s9
    %p137 = scmp.lt.s32.totalorder %s9, 3
    %p138 = pnand %p136, %p137
    %p139 = pneg %p138
    // Predicated region
    $region29: #{tpu_custom_call.1} parent=5 // pred_check
      _
    $region30: #{tpu_custom_call.1} parent=5 // pred_check_branch
      %141 = sbr.rel (%p138) target = $region32
    $region31: #{tpu_custom_call.1} parent=5 // pred_region
      %s142 = ssub.s32 %s9, 1
      %p143 = scmp.lt.s32.totalorder %s14, 1
      %s144 = scalar_select %p143, %s14, 1
      %s145 = smul.addr %s144, 32
      %s146 = smul.addr %s145, 4
      %s147 = scalar_lea.vmem %s0, %s146
      %p148 = pneg %p35
      %p149 = pneg %p32
      %p150 = pneg %p56
      %p151 = pneg %p53
      %p152 = pneg %p77
      %p153 = pneg %p74
      %p154 = pneg %p103
      %p155 = pneg %p100
      %p156 = scmp.lt.s32.totalorder %s14, 1
      %s157 = scalar_select %p156, %s14, 1
      %s158 = smul.addr %s157, 25
      %s159 = smul.addr %s158, 8
      %s160 = scalar_lea.vmem %s3, %s159
      %p161 = scmp.lt.s32.totalorder %s14, 1
      %s162 = scalar_select %p161, %s14, 1
      %s163 = smul.addr %s162, 32
      %s164 = smul.addr %s163, 4
      %s165 = scalar_lea.vmem %s0, %s164
      %p166 = scmp.lt.s32.totalorder %s14, 1
      %s167 = scalar_select %p166, %s14, 1
      %s168 = smul.addr %s167, 25
      %s169 = smul.addr %s168, 8
      %s170 = scalar_lea.vmem %s3, %s169
      %v172 = vld [vmem:[%s165] sm:$0xf]
      %v173 = vld [vmem:[%s165 + $0x4] sm:$0xf]
      %v174 = vld [vmem:[%s165 + $0x8] sm:$0xf]
      %v175 = vld [vmem:[%s165 + $0xc] sm:$0xf]
      %v176 = vld [vmem:[%s165 + $0x10] sm:$0xf]
      %v177 = vld [vmem:[%s165 + $0x14] sm:$0xf]
      %v178 = vld [vmem:[%s165 + $0x18] sm:$0xf]
      %v179 = vld [vmem:[%s165 + $0x1c] sm:$0xf]
      %v180 = vld [vmem:[%s165 + $0x20] sm:$0xf]
      %v181 = vld [vmem:[%s165 + $0x24] sm:$0xf]
      %v182 = vld [vmem:[%s165 + $0x28] sm:$0xf]
      %v183 = vld [vmem:[%s165 + $0x2c] sm:$0xf]
      %v184 = vld [vmem:[%s165 + $0x30] sm:$0xf]
      %v185 = vld [vmem:[%s165 + $0x34] sm:$0xf]
      %v186 = vld [vmem:[%s165 + $0x38] sm:$0xf]
      %v187 = vld [vmem:[%s165 + $0x3c] sm:$0xf]
      %v188 = vld [vmem:[%s165 + $0x40] sm:$0xf]
      %v189 = vld [vmem:[%s165 + $0x44] sm:$0xf]
      %v190 = vld [vmem:[%s165 + $0x48] sm:$0xf]
      %v191 = vld [vmem:[%s165 + $0x4c] sm:$0xf]
      %v192 = vld [vmem:[%s165 + $0x50] sm:$0xf]
      %v193 = vld [vmem:[%s165 + $0x54] sm:$0xf]
      %v194 = vld [vmem:[%s165 + $0x58] sm:$0xf]
      %v195 = vld [vmem:[%s165 + $0x5c] sm:$0xf]
      %v196 = vld [vmem:[%s165 + $0x60] sm:$0xf]
      %v197 = vld [vmem:[%s165 + $0x64] sm:$0xf]
      %v198 = vld [vmem:[%s165 + $0x68] sm:$0xf]
      %v199 = vld [vmem:[%s165 + $0x6c] sm:$0xf]
      %v200 = vld [vmem:[%s165 + $0x70] sm:$0xf]
      %v201 = vld [vmem:[%s165 + $0x74] sm:$0xf]
      %v202 = vld [vmem:[%s165 + $0x78] sm:$0xf]
      %v203 = vld [vmem:[%s165 + $0x7c] sm:$0xf]
      %v233 = vunpack.c.l.s4 1966171168
      %v234 = vunpack.c.0.s8 %v233
      %v235 = vlaneseq
      %v236 = vshrl.u32 %v235, 7
      %v237 = vsub.s32 %v234, %v236
      %v238 = vrot.slane %v172, %v237
      %v239 = vcombine.high %v238, %v238
      %v241 = vunpack.c.l.s4 1966171168
      %v242 = vunpack.c.0.s8 %v241
      %v243 = vlaneseq
      %v244 = vshrl.u32 %v243, 7
      %v245 = vsub.s32 %v242, %v244
      %v246 = vrot.slane %v238, %v245
      %v248 = vunpack.c.l.s4 1966171168
      %v249 = vunpack.c.0.s8 %v248
      %v250 = vlaneseq
      %v251 = vshrl.u32 %v250, 7
      %v252 = vsub.s32 %v249, %v251
      %v253 = vrot.slane %v239, %v252
      %v254 = vcombine.high %v246, %v246
      %v255 = vcombine.high %v253, %v253
      %v257 = vunpack.c.l.s4 1966171168
      %v258 = vunpack.c.0.s8 %v257
      %v259 = vlaneseq
      %v260 = vshrl.u32 %v259, 7
      %v261 = vsub.s32 %v258, %v260
      %v262 = vrot.slane %v173, %v261
      %v263 = vcombine.high %v262, %v262
      %v265 = vunpack.c.l.s4 1966171168
      %v266 = vunpack.c.0.s8 %v265
      %v267 = vlaneseq
      %v268 = vshrl.u32 %v267, 7
      %v269 = vsub.s32 %v266, %v268
      %v270 = vrot.slane %v262, %v269
      %v272 = vunpack.c.l.s4 1966171168
      %v273 = vunpack.c.0.s8 %v272
      %v274 = vlaneseq
      %v275 = vshrl.u32 %v274, 7
      %v276 = vsub.s32 %v273, %v275
      %v277 = vrot.slane %v263, %v276
      %v278 = vcombine.high %v270, %v270
      %v280 = vunpack.c.l.s4 1966171168
      %v281 = vunpack.c.0.s8 %v280
      %v282 = vlaneseq
      %v283 = vshrl.u32 %v282, 7
      %v284 = vsub.s32 %v281, %v283
      %v285 = vrot.slane %v174, %v284
      %v286 = vcombine.high %v285, %v285
      %v288 = vunpack.c.l.s4 1966171168
      %v289 = vunpack.c.0.s8 %v288
      %v290 = vlaneseq
      %v291 = vshrl.u32 %v290, 7
      %v292 = vsub.s32 %v289, %v291
      %v293 = vrot.slane %v285, %v292
      %v295 = vunpack.c.l.s4 1966171168
      %v296 = vunpack.c.0.s8 %v295
      %v297 = vlaneseq
      %v298 = vshrl.u32 %v297, 7
      %v299 = vsub.s32 %v296, %v298
      %v300 = vrot.slane %v286, %v299
      %v301 = vcombine.high %v293, %v293
      %v302 = vcombine.high %v300, %v300
      %v304 = vunpack.c.l.s4 1966171168
      %v305 = vunpack.c.0.s8 %v304
      %v306 = vlaneseq
      %v307 = vshrl.u32 %v306, 7
      %v308 = vsub.s32 %v305, %v307
      %v309 = vrot.slane %v175, %v308
      %v310 = vcombine.high %v309, %v309
      %v312 = vunpack.c.l.s4 1966171168
      %v313 = vunpack.c.0.s8 %v312
      %v314 = vlaneseq
      %v315 = vshrl.u32 %v314, 7
      %v316 = vsub.s32 %v313, %v315
      %v317 = vrot.slane %v309, %v316
      %v319 = vunpack.c.l.s4 1966171168
      %v320 = vunpack.c.0.s8 %v319
      %v321 = vlaneseq
      %v322 = vshrl.u32 %v321, 7
      %v323 = vsub.s32 %v320, %v322
      %v324 = vrot.slane %v310, %v323
      %v325 = vcombine.high %v317, %v317
      %v327 = vunpack.c.l.s4 1966171168
      %v328 = vunpack.c.0.s8 %v327
      %v329 = vlaneseq
      %v330 = vshrl.u32 %v329, 7
      %v331 = vsub.s32 %v328, %v330
      %v332 = vrot.slane %v176, %v331
      %v333 = vcombine.high %v332, %v332
      %v335 = vunpack.c.l.s4 1966171168
      %v336 = vunpack.c.0.s8 %v335
      %v337 = vlaneseq
      %v338 = vshrl.u32 %v337, 7
      %v339 = vsub.s32 %v336, %v338
      %v340 = vrot.slane %v332, %v339
      %v342 = vunpack.c.l.s4 1966171168
      %v343 = vunpack.c.0.s8 %v342
      %v344 = vlaneseq
      %v345 = vshrl.u32 %v344, 7
      %v346 = vsub.s32 %v343, %v345
      %v347 = vrot.slane %v333, %v346
      %v348 = vcombine.high %v340, %v340
      %v349 = vcombine.high %v347, %v347
      %v351 = vunpack.c.l.s4 1966171168
      %v352 = vunpack.c.0.s8 %v351
      %v353 = vlaneseq
      %v354 = vshrl.u32 %v353, 7
      %v355 = vsub.s32 %v352, %v354
      %v356 = vrot.slane %v177, %v355
      %v357 = vcombine.high %v356, %v356
      %v359 = vunpack.c.l.s4 1966171168
      %v360 = vunpack.c.0.s8 %v359
      %v361 = vlaneseq
      %v362 = vshrl.u32 %v361, 7
      %v363 = vsub.s32 %v360, %v362
      %v364 = vrot.slane %v356, %v363
      %v366 = vunpack.c.l.s4 1966171168
      %v367 = vunpack.c.0.s8 %v366
      %v368 = vlaneseq
      %v369 = vshrl.u32 %v368, 7
      %v370 = vsub.s32 %v367, %v369
      %v371 = vrot.slane %v357, %v370
      %v372 = vcombine.high %v364, %v364
      %v374 = vunpack.c.l.s4 1966171168
      %v375 = vunpack.c.0.s8 %v374
      %v376 = vlaneseq
      %v377 = vshrl.u32 %v376, 7
      %v378 = vsub.s32 %v375, %v377
      %v379 = vrot.slane %v178, %v378
      %v380 = vcombine.high %v379, %v379
      %v382 = vunpack.c.l.s4 1966171168
      %v383 = vunpack.c.0.s8 %v382
      %v384 = vlaneseq
      %v385 = vshrl.u32 %v384, 7
      %v386 = vsub.s32 %v383, %v385
      %v387 = vrot.slane %v379, %v386
      %v389 = vunpack.c.l.s4 1966171168
      %v390 = vunpack.c.0.s8 %v389
      %v391 = vlaneseq
      %v392 = vshrl.u32 %v391, 7
      %v393 = vsub.s32 %v390, %v392
      %v394 = vrot.slane %v380, %v393
      %v395 = vcombine.high %v387, %v387
      %v396 = vcombine.high %v394, %v394
      %v398 = vunpack.c.l.s4 1966171168
      %v399 = vunpack.c.0.s8 %v398
      %v400 = vlaneseq
      %v401 = vshrl.u32 %v400, 7
      %v402 = vsub.s32 %v399, %v401
      %v403 = vrot.slane %v179, %v402
      %v404 = vcombine.high %v403, %v403
      %v406 = vunpack.c.l.s4 1966171168
      %v407 = vunpack.c.0.s8 %v406
      %v408 = vlaneseq
      %v409 = vshrl.u32 %v408, 7
      %v410 = vsub.s32 %v407, %v409
      %v411 = vrot.slane %v403, %v410
      %v413 = vunpack.c.l.s4 1966171168
      %v414 = vunpack.c.0.s8 %v413
      %v415 = vlaneseq
      %v416 = vshrl.u32 %v415, 7
      %v417 = vsub.s32 %v414, %v416
      %v418 = vrot.slane %v404, %v417
      %v419 = vcombine.high %v411, %v411
      %v421 = vunpack.c.l.s4 1966171168
      %v422 = vunpack.c.0.s8 %v421
      %v423 = vlaneseq
      %v424 = vshrl.u32 %v423, 7
      %v425 = vsub.s32 %v422, %v424
      %v426 = vrot.slane %v180, %v425
      %v427 = vcombine.high %v426, %v426
      %v429 = vunpack.c.l.s4 1966171168
      %v430 = vunpack.c.0.s8 %v429
      %v431 = vlaneseq
      %v432 = vshrl.u32 %v431, 7
      %v433 = vsub.s32 %v430, %v432
      %v434 = vrot.slane %v426, %v433
      %v436 = vunpack.c.l.s4 1966171168
      %v437 = vunpack.c.0.s8 %v436
      %v438 = vlaneseq
      %v439 = vshrl.u32 %v438, 7
      %v440 = vsub.s32 %v437, %v439
      %v441 = vrot.slane %v427, %v440
      %v442 = vcombine.high %v434, %v434
      %v443 = vcombine.high %v441, %v441
      %v445 = vunpack.c.l.s4 1966171168
      %v446 = vunpack.c.0.s8 %v445
      %v447 = vlaneseq
      %v448 = vshrl.u32 %v447, 7
      %v449 = vsub.s32 %v446, %v448
      %v450 = vrot.slane %v181, %v449
      %v451 = vcombine.high %v450, %v450
      %v453 = vunpack.c.l.s4 1966171168
      %v454 = vunpack.c.0.s8 %v453
      %v455 = vlaneseq
      %v456 = vshrl.u32 %v455, 7
      %v457 = vsub.s32 %v454, %v456
      %v458 = vrot.slane %v450, %v457
      %v460 = vunpack.c.l.s4 1966171168
      %v461 = vunpack.c.0.s8 %v460
      %v462 = vlaneseq
      %v463 = vshrl.u32 %v462, 7
      %v464 = vsub.s32 %v461, %v463
      %v465 = vrot.slane %v451, %v464
      %v466 = vcombine.high %v458, %v458
      %v468 = vunpack.c.l.s4 1966171168
      %v469 = vunpack.c.0.s8 %v468
      %v470 = vlaneseq
      %v471 = vshrl.u32 %v470, 7
      %v472 = vsub.s32 %v469, %v471
      %v473 = vrot.slane %v182, %v472
      %v474 = vcombine.high %v473, %v473
      %v476 = vunpack.c.l.s4 1966171168
      %v477 = vunpack.c.0.s8 %v476
      %v478 = vlaneseq
      %v479 = vshrl.u32 %v478, 7
      %v480 = vsub.s32 %v477, %v479
      %v481 = vrot.slane %v473, %v480
      %v483 = vunpack.c.l.s4 1966171168
      %v484 = vunpack.c.0.s8 %v483
      %v485 = vlaneseq
      %v486 = vshrl.u32 %v485, 7
      %v487 = vsub.s32 %v484, %v486
      %v488 = vrot.slane %v474, %v487
      %v489 = vcombine.high %v481, %v481
      %v490 = vcombine.high %v488, %v488
      %v492 = vunpack.c.l.s4 1966171168
      %v493 = vunpack.c.0.s8 %v492
      %v494 = vlaneseq
      %v495 = vshrl.u32 %v494, 7
      %v496 = vsub.s32 %v493, %v495
      %v497 = vrot.slane %v183, %v496
      %v498 = vcombine.high %v497, %v497
      %v500 = vunpack.c.l.s4 1966171168
      %v501 = vunpack.c.0.s8 %v500
      %v502 = vlaneseq
      %v503 = vshrl.u32 %v502, 7
      %v504 = vsub.s32 %v501, %v503
      %v505 = vrot.slane %v497, %v504
      %v507 = vunpack.c.l.s4 1966171168
      %v508 = vunpack.c.0.s8 %v507
      %v509 = vlaneseq
      %v510 = vshrl.u32 %v509, 7
      %v511 = vsub.s32 %v508, %v510
      %v512 = vrot.slane %v498, %v511
      %v513 = vcombine.high %v505, %v505
      %v515 = vunpack.c.l.s4 1966171168
      %v516 = vunpack.c.0.s8 %v515
      %v517 = vlaneseq
      %v518 = vshrl.u32 %v517, 7
      %v519 = vsub.s32 %v516, %v518
      %v520 = vrot.slane %v184, %v519
      %v521 = vcombine.high %v520, %v520
      %v523 = vunpack.c.l.s4 1966171168
      %v524 = vunpack.c.0.s8 %v523
      %v525 = vlaneseq
      %v526 = vshrl.u32 %v525, 7
      %v527 = vsub.s32 %v524, %v526
      %v528 = vrot.slane %v520, %v527
      %v530 = vunpack.c.l.s4 1966171168
      %v531 = vunpack.c.0.s8 %v530
      %v532 = vlaneseq
      %v533 = vshrl.u32 %v532, 7
      %v534 = vsub.s32 %v531, %v533
      %v535 = vrot.slane %v521, %v534
      %v536 = vcombine.high %v528, %v528
      %v537 = vcombine.high %v535, %v535
      %v539 = vunpack.c.l.s4 1966171168
      %v540 = vunpack.c.0.s8 %v539
      %v541 = vlaneseq
      %v542 = vshrl.u32 %v541, 7
      %v543 = vsub.s32 %v540, %v542
      %v544 = vrot.slane %v185, %v543
      %v545 = vcombine.high %v544, %v544
      %v547 = vunpack.c.l.s4 1966171168
      %v548 = vunpack.c.0.s8 %v547
      %v549 = vlaneseq
      %v550 = vshrl.u32 %v549, 7
      %v551 = vsub.s32 %v548, %v550
      %v552 = vrot.slane %v544, %v551
      %v554 = vunpack.c.l.s4 1966171168
      %v555 = vunpack.c.0.s8 %v554
      %v556 = vlaneseq
      %v557 = vshrl.u32 %v556, 7
      %v558 = vsub.s32 %v555, %v557
      %v559 = vrot.slane %v545, %v558
      %v560 = vcombine.high %v552, %v552
      %v562 = vunpack.c.l.s4 1966171168
      %v563 = vunpack.c.0.s8 %v562
      %v564 = vlaneseq
      %v565 = vshrl.u32 %v564, 7
      %v566 = vsub.s32 %v563, %v565
      %v567 = vrot.slane %v186, %v566
      %v568 = vcombine.high %v567, %v567
      %v570 = vunpack.c.l.s4 1966171168
      %v571 = vunpack.c.0.s8 %v570
      %v572 = vlaneseq
      %v573 = vshrl.u32 %v572, 7
      %v574 = vsub.s32 %v571, %v573
      %v575 = vrot.slane %v567, %v574
      %v577 = vunpack.c.l.s4 1966171168
      %v578 = vunpack.c.0.s8 %v577
      %v579 = vlaneseq
      %v580 = vshrl.u32 %v579, 7
      %v581 = vsub.s32 %v578, %v580
      %v582 = vrot.slane %v568, %v581
      %v583 = vcombine.high %v575, %v575
      %v584 = vcombine.high %v582, %v582
      %v586 = vunpack.c.l.s4 1966171168
      %v587 = vunpack.c.0.s8 %v586
      %v588 = vlaneseq
      %v589 = vshrl.u32 %v588, 7
      %v590 = vsub.s32 %v587, %v589
      %v591 = vrot.slane %v187, %v590
      %v592 = vcombine.high %v591, %v591
      %v594 = vunpack.c.l.s4 1966171168
      %v595 = vunpack.c.0.s8 %v594
      %v596 = vlaneseq
      %v597 = vshrl.u32 %v596, 7
      %v598 = vsub.s32 %v595, %v597
      %v599 = vrot.slane %v591, %v598
      %v601 = vunpack.c.l.s4 1966171168
      %v602 = vunpack.c.0.s8 %v601
      %v603 = vlaneseq
      %v604 = vshrl.u32 %v603, 7
      %v605 = vsub.s32 %v602, %v604
      %v606 = vrot.slane %v592, %v605
      %v607 = vcombine.high %v599, %v599
      %v609 = vunpack.c.l.s4 1966171168
      %v610 = vunpack.c.0.s8 %v609
      %v611 = vlaneseq
      %v612 = vshrl.u32 %v611, 7
      %v613 = vsub.s32 %v610, %v612
      %v614 = vrot.slane %v188, %v613
      %v615 = vcombine.high %v614, %v614
      %v617 = vunpack.c.l.s4 1966171168
      %v618 = vunpack.c.0.s8 %v617
      %v619 = vlaneseq
      %v620 = vshrl.u32 %v619, 7
      %v621 = vsub.s32 %v618, %v620
      %v622 = vrot.slane %v614, %v621
      %v624 = vunpack.c.l.s4 1966171168
      %v625 = vunpack.c.0.s8 %v624
      %v626 = vlaneseq
      %v627 = vshrl.u32 %v626, 7
      %v628 = vsub.s32 %v625, %v627
      %v629 = vrot.slane %v615, %v628
      %v630 = vcombine.high %v622, %v622
      %v631 = vcombine.high %v629, %v629
      %v633 = vunpack.c.l.s4 1966171168
      %v634 = vunpack.c.0.s8 %v633
      %v635 = vlaneseq
      %v636 = vshrl.u32 %v635, 7
      %v637 = vsub.s32 %v634, %v636
      %v638 = vrot.slane %v189, %v637
      %v639 = vcombine.high %v638, %v638
      %v641 = vunpack.c.l.s4 1966171168
      %v642 = vunpack.c.0.s8 %v641
      %v643 = vlaneseq
      %v644 = vshrl.u32 %v643, 7
      %v645 = vsub.s32 %v642, %v644
      %v646 = vrot.slane %v638, %v645
      %v648 = vunpack.c.l.s4 1966171168
      %v649 = vunpack.c.0.s8 %v648
      %v650 = vlaneseq
      %v651 = vshrl.u32 %v650, 7
      %v652 = vsub.s32 %v649, %v651
      %v653 = vrot.slane %v639, %v652
      %v654 = vcombine.high %v646, %v646
      %v656 = vunpack.c.l.s4 1966171168
      %v657 = vunpack.c.0.s8 %v656
      %v658 = vlaneseq
      %v659 = vshrl.u32 %v658, 7
      %v660 = vsub.s32 %v657, %v659
      %v661 = vrot.slane %v190, %v660
      %v662 = vcombine.high %v661, %v661
      %v664 = vunpack.c.l.s4 1966171168
      %v665 = vunpack.c.0.s8 %v664
      %v666 = vlaneseq
      %v667 = vshrl.u32 %v666, 7
      %v668 = vsub.s32 %v665, %v667
      %v669 = vrot.slane %v661, %v668
      %v671 = vunpack.c.l.s4 1966171168
      %v672 = vunpack.c.0.s8 %v671
      %v673 = vlaneseq
      %v674 = vshrl.u32 %v673, 7
      %v675 = vsub.s32 %v672, %v674
      %v676 = vrot.slane %v662, %v675
      %v677 = vcombine.high %v669, %v669
      %v678 = vcombine.high %v676, %v676
      %v680 = vunpack.c.l.s4 1966171168
      %v681 = vunpack.c.0.s8 %v680
      %v682 = vlaneseq
      %v683 = vshrl.u32 %v682, 7
      %v684 = vsub.s32 %v681, %v683
      %v685 = vrot.slane %v191, %v684
      %v686 = vcombine.high %v685, %v685
      %v688 = vunpack.c.l.s4 1966171168
      %v689 = vunpack.c.0.s8 %v688
      %v690 = vlaneseq
      %v691 = vshrl.u32 %v690, 7
      %v692 = vsub.s32 %v689, %v691
      %v693 = vrot.slane %v685, %v692
      %v695 = vunpack.c.l.s4 1966171168
      %v696 = vunpack.c.0.s8 %v695
      %v697 = vlaneseq
      %v698 = vshrl.u32 %v697, 7
      %v699 = vsub.s32 %v696, %v698
      %v700 = vrot.slane %v686, %v699
      %v701 = vcombine.high %v693, %v693
      %v703 = vunpack.c.l.s4 1966171168
      %v704 = vunpack.c.0.s8 %v703
      %v705 = vlaneseq
      %v706 = vshrl.u32 %v705, 7
      %v707 = vsub.s32 %v704, %v706
      %v708 = vrot.slane %v192, %v707
      %v709 = vcombine.high %v708, %v708
      %v711 = vunpack.c.l.s4 1966171168
      %v712 = vunpack.c.0.s8 %v711
      %v713 = vlaneseq
      %v714 = vshrl.u32 %v713, 7
      %v715 = vsub.s32 %v712, %v714
      %v716 = vrot.slane %v708, %v715
      %v718 = vunpack.c.l.s4 1966171168
      %v719 = vunpack.c.0.s8 %v718
      %v720 = vlaneseq
      %v721 = vshrl.u32 %v720, 7
      %v722 = vsub.s32 %v719, %v721
      %v723 = vrot.slane %v709, %v722
      %v724 = vcombine.high %v716, %v716
      %v725 = vcombine.high %v723, %v723
      %v727 = vunpack.c.l.s4 1966171168
      %v728 = vunpack.c.0.s8 %v727
      %v729 = vlaneseq
      %v730 = vshrl.u32 %v729, 7
      %v731 = vsub.s32 %v728, %v730
      %v732 = vrot.slane %v193, %v731
      %v733 = vcombine.high %v732, %v732
      %v735 = vunpack.c.l.s4 1966171168
      %v736 = vunpack.c.0.s8 %v735
      %v737 = vlaneseq
      %v738 = vshrl.u32 %v737, 7
      %v739 = vsub.s32 %v736, %v738
      %v740 = vrot.slane %v732, %v739
      %v742 = vunpack.c.l.s4 1966171168
      %v743 = vunpack.c.0.s8 %v742
      %v744 = vlaneseq
      %v745 = vshrl.u32 %v744, 7
      %v746 = vsub.s32 %v743, %v745
      %v747 = vrot.slane %v733, %v746
      %v748 = vcombine.high %v740, %v740
      %v750 = vunpack.c.l.s4 1966171168
      %v751 = vunpack.c.0.s8 %v750
      %v752 = vlaneseq
      %v753 = vshrl.u32 %v752, 7
      %v754 = vsub.s32 %v751, %v753
      %v755 = vrot.slane %v194, %v754
      %v756 = vcombine.high %v755, %v755
      %v758 = vunpack.c.l.s4 1966171168
      %v759 = vunpack.c.0.s8 %v758
      %v760 = vlaneseq
      %v761 = vshrl.u32 %v760, 7
      %v762 = vsub.s32 %v759, %v761
      %v763 = vrot.slane %v755, %v762
      %v765 = vunpack.c.l.s4 1966171168
      %v766 = vunpack.c.0.s8 %v765
      %v767 = vlaneseq
      %v768 = vshrl.u32 %v767, 7
      %v769 = vsub.s32 %v766, %v768
      %v770 = vrot.slane %v756, %v769
      %v771 = vcombine.high %v763, %v763
      %v772 = vcombine.high %v770, %v770
      %v774 = vunpack.c.l.s4 1966171168
      %v775 = vunpack.c.0.s8 %v774
      %v776 = vlaneseq
      %v777 = vshrl.u32 %v776, 7
      %v778 = vsub.s32 %v775, %v777
      %v779 = vrot.slane %v195, %v778
      %v780 = vcombine.high %v779, %v779
      %v782 = vunpack.c.l.s4 1966171168
      %v783 = vunpack.c.0.s8 %v782
      %v784 = vlaneseq
      %v785 = vshrl.u32 %v784, 7
      %v786 = vsub.s32 %v783, %v785
      %v787 = vrot.slane %v779, %v786
      %v789 = vunpack.c.l.s4 1966171168
      %v790 = vunpack.c.0.s8 %v789
      %v791 = vlaneseq
      %v792 = vshrl.u32 %v791, 7
      %v793 = vsub.s32 %v790, %v792
      %v794 = vrot.slane %v780, %v793
      %v795 = vcombine.high %v787, %v787
      %v797 = vunpack.c.l.s4 1966171168
      %v798 = vunpack.c.0.s8 %v797
      %v799 = vlaneseq
      %v800 = vshrl.u32 %v799, 7
      %v801 = vsub.s32 %v798, %v800
      %v802 = vrot.slane %v196, %v801
      %v803 = vcombine.high %v802, %v802
      %v805 = vunpack.c.l.s4 1966171168
      %v806 = vunpack.c.0.s8 %v805
      %v807 = vlaneseq
      %v808 = vshrl.u32 %v807, 7
      %v809 = vsub.s32 %v806, %v808
      %v810 = vrot.slane %v802, %v809
      %v812 = vunpack.c.l.s4 1966171168
      %v813 = vunpack.c.0.s8 %v812
      %v814 = vlaneseq
      %v815 = vshrl.u32 %v814, 7
      %v816 = vsub.s32 %v813, %v815
      %v817 = vrot.slane %v803, %v816
      %v818 = vcombine.high %v810, %v810
      %v819 = vcombine.high %v817, %v817
      %v821 = vunpack.c.l.s4 1966171168
      %v822 = vunpack.c.0.s8 %v821
      %v823 = vlaneseq
      %v824 = vshrl.u32 %v823, 7
      %v825 = vsub.s32 %v822, %v824
      %v826 = vrot.slane %v197, %v825
      %v827 = vcombine.high %v826, %v826
      %v829 = vunpack.c.l.s4 1966171168
      %v830 = vunpack.c.0.s8 %v829
      %v831 = vlaneseq
      %v832 = vshrl.u32 %v831, 7
      %v833 = vsub.s32 %v830, %v832
      %v834 = vrot.slane %v826, %v833
      %v836 = vunpack.c.l.s4 1966171168
      %v837 = vunpack.c.0.s8 %v836
      %v838 = vlaneseq
      %v839 = vshrl.u32 %v838, 7
      %v840 = vsub.s32 %v837, %v839
      %v841 = vrot.slane %v827, %v840
      %v842 = vcombine.high %v834, %v834
      %v844 = vunpack.c.l.s4 1966171168
      %v845 = vunpack.c.0.s8 %v844
      %v846 = vlaneseq
      %v847 = vshrl.u32 %v846, 7
      %v848 = vsub.s32 %v845, %v847
      %v849 = vrot.slane %v198, %v848
      %v850 = vcombine.high %v849, %v849
      %v852 = vunpack.c.l.s4 1966171168
      %v853 = vunpack.c.0.s8 %v852
      %v854 = vlaneseq
      %v855 = vshrl.u32 %v854, 7
      %v856 = vsub.s32 %v853, %v855
      %v857 = vrot.slane %v849, %v856
      %v859 = vunpack.c.l.s4 1966171168
      %v860 = vunpack.c.0.s8 %v859
      %v861 = vlaneseq
      %v862 = vshrl.u32 %v861, 7
      %v863 = vsub.s32 %v860, %v862
      %v864 = vrot.slane %v850, %v863
      %v865 = vcombine.high %v857, %v857
      %v866 = vcombine.high %v864, %v864
      %v868 = vunpack.c.l.s4 1966171168
      %v869 = vunpack.c.0.s8 %v868
      %v870 = vlaneseq
      %v871 = vshrl.u32 %v870, 7
      %v872 = vsub.s32 %v869, %v871
      %v873 = vrot.slane %v199, %v872
      %v874 = vcombine.high %v873, %v873
      %v876 = vunpack.c.l.s4 1966171168
      %v877 = vunpack.c.0.s8 %v876
      %v878 = vlaneseq
      %v879 = vshrl.u32 %v878, 7
      %v880 = vsub.s32 %v877, %v879
      %v881 = vrot.slane %v873, %v880
      %v883 = vunpack.c.l.s4 1966171168
      %v884 = vunpack.c.0.s8 %v883
      %v885 = vlaneseq
      %v886 = vshrl.u32 %v885, 7
      %v887 = vsub.s32 %v884, %v886
      %v888 = vrot.slane %v874, %v887
      %v889 = vcombine.high %v881, %v881
      %v890 = vcombine.high %v277, %v277
      %v891 = vcombine.high %v324, %v324
      %v892 = vcombine.high %v371, %v371
      %v893 = vcombine.high %v418, %v418
      %v894 = vcombine.high %v465, %v465
      %v895 = vcombine.high %v512, %v512
      %v896 = vcombine.high %v559, %v559
      %v897 = vcombine.high %v606, %v606
      %v898 = vcombine.high %v653, %v653
      %v899 = vcombine.high %v700, %v700
      %v900 = vcombine.high %v747, %v747
      %v901 = vcombine.high %v794, %v794
      %v902 = vcombine.high %v841, %v841
      %v903 = vcombine.high %v888, %v888
      %vm904 = vsmask.f32 256
      %vm905 = vsmask.f32 1284
      %vm906 = vmor %vm904, %vm905
      %vm907 = vsmask.f32 2312
      %vm908 = vmor %vm906, %vm907
      %vm909 = vsmask.f32 3340
      %vm910 = vmor %vm908, %vm909
      %vm911 = vsmask.f32 4368
      %vm912 = vmor %vm910, %vm911
      %vm913 = vsmask.f32 5396
      %vm914 = vmor %vm912, %vm913
      %vm915 = vsmask.f32 6424
      %vm916 = vmor %vm914, %vm915
      %vm917 = vsmask.f32 7452
      %vm918 = vmor %vm916, %vm917
      %v920 = vshrl.u32 %v246, 16
      %v922 = vrot.slane %v920, 7
      %v923 = vrot.slane %v922, 1
      %v925 = vshll.u32 %v253, 16
      %v927 = vsel %vm918, %v923, %v925
      %v928 = vshrl.u32 %v253, 16
      %v930 = vrot.slane %v928, 7
      %v931 = vrot.slane %v930, 1
      %v933 = vshll.u32 %v254, 16
      %v935 = vsel %vm918, %v931, %v933
      %v936 = vshrl.u32 %v254, 16
      %v938 = vrot.slane %v936, 7
      %v939 = vrot.slane %v938, 1
      %v941 = vshll.u32 %v255, 16
      %v943 = vsel %vm918, %v939, %v941
      %v944 = vshrl.u32 %v255, 16
      %v946 = vrot.slane %v944, 7
      %v947 = vrot.slane %v946, 1
      %v949 = vshll.u32 %v270, 16
      %v951 = vsel %vm918, %v947, %v949
      %v952 = vshrl.u32 %v270, 16
      %v954 = vrot.slane %v952, 7
      %v955 = vrot.slane %v954, 1
      %v957 = vshll.u32 %v277, 16
      %v959 = vsel %vm918, %v955, %v957
      %v960 = vshrl.u32 %v277, 16
      %v962 = vrot.slane %v960, 7
      %v963 = vrot.slane %v962, 1
      %v965 = vshll.u32 %v278, 16
      %v967 = vsel %vm918, %v963, %v965
      %v968 = vshrl.u32 %v278, 16
      %v970 = vrot.slane %v968, 7
      %v971 = vrot.slane %v970, 1
      %v973 = vshll.u32 %v890, 16
      %v975 = vsel %vm918, %v971, %v973
      %v977 = vshrl.u32 %v293, 16
      %v979 = vrot.slane %v977, 7
      %v980 = vrot.slane %v979, 1
      %v982 = vshll.u32 %v300, 16
      %v984 = vsel %vm918, %v980, %v982
      %v985 = vshrl.u32 %v300, 16
      %v987 = vrot.slane %v985, 7
      %v988 = vrot.slane %v987, 1
      %v990 = vshll.u32 %v301, 16
      %v992 = vsel %vm918, %v988, %v990
      %v993 = vshrl.u32 %v301, 16
      %v995 = vrot.slane %v993, 7
      %v996 = vrot.slane %v995, 1
      %v998 = vshll.u32 %v302, 16
      %v1000 = vsel %vm918, %v996, %v998
      %v1001 = vshrl.u32 %v302, 16
      %v1003 = vrot.slane %v1001, 7
      %v1004 = vrot.slane %v1003, 1
      %v1006 = vshll.u32 %v317, 16
      %v1008 = vsel %vm918, %v1004, %v1006
      %v1009 = vshrl.u32 %v317, 16
      %v1011 = vrot.slane %v1009, 7
      %v1012 = vrot.slane %v1011, 1
      %v1014 = vshll.u32 %v324, 16
      %v1016 = vsel %vm918, %v1012, %v1014
      %v1017 = vshrl.u32 %v324, 16
      %v1019 = vrot.slane %v1017, 7
      %v1020 = vrot.slane %v1019, 1
      %v1022 = vshll.u32 %v325, 16
      %v1024 = vsel %vm918, %v1020, %v1022
      %v1025 = vshrl.u32 %v325, 16
      %v1027 = vrot.slane %v1025, 7
      %v1028 = vrot.slane %v1027, 1
      %v1030 = vshll.u32 %v891, 16
      %v1032 = vsel %vm918, %v1028, %v1030
      %v1034 = vshrl.u32 %v340, 16
      %v1036 = vrot.slane %v1034, 7
      %v1037 = vrot.slane %v1036, 1
      %v1039 = vshll.u32 %v347, 16
      %v1041 = vsel %vm918, %v1037, %v1039
      %v1042 = vshrl.u32 %v347, 16
      %v1044 = vrot.slane %v1042, 7
      %v1045 = vrot.slane %v1044, 1
      %v1047 = vshll.u32 %v348, 16
      %v1049 = vsel %vm918, %v1045, %v1047
      %v1050 = vshrl.u32 %v348, 16
      %v1052 = vrot.slane %v1050, 7
      %v1053 = vrot.slane %v1052, 1
      %v1055 = vshll.u32 %v349, 16
      %v1057 = vsel %vm918, %v1053, %v1055
      %v1058 = vshrl.u32 %v349, 16
      %v1060 = vrot.slane %v1058, 7
      %v1061 = vrot.slane %v1060, 1
      %v1063 = vshll.u32 %v364, 16
      %v1065 = vsel %vm918, %v1061, %v1063
      %v1066 = vshrl.u32 %v364, 16
      %v1068 = vrot.slane %v1066, 7
      %v1069 = vrot.slane %v1068, 1
      %v1071 = vshll.u32 %v371, 16
      %v1073 = vsel %vm918, %v1069, %v1071
      %v1074 = vshrl.u32 %v371, 16
      %v1076 = vrot.slane %v1074, 7
      %v1077 = vrot.slane %v1076, 1
      %v1079 = vshll.u32 %v372, 16
      %v1081 = vsel %vm918, %v1077, %v1079
      %v1082 = vshrl.u32 %v372, 16
      %v1084 = vrot.slane %v1082, 7
      %v1085 = vrot.slane %v1084, 1
      %v1087 = vshll.u32 %v892, 16
      %v1089 = vsel %vm918, %v1085, %v1087
      %v1091 = vshrl.u32 %v387, 16
      %v1093 = vrot.slane %v1091, 7
      %v1094 = vrot.slane %v1093, 1
      %v1096 = vshll.u32 %v394, 16
      %v1098 = vsel %vm918, %v1094, %v1096
      %v1099 = vshrl.u32 %v394, 16
      %v1101 = vrot.slane %v1099, 7
      %v1102 = vrot.slane %v1101, 1
      %v1104 = vshll.u32 %v395, 16
      %v1106 = vsel %vm918, %v1102, %v1104
      %v1107 = vshrl.u32 %v395, 16
      %v1109 = vrot.slane %v1107, 7
      %v1110 = vrot.slane %v1109, 1
      %v1112 = vshll.u32 %v396, 16
      %v1114 = vsel %vm918, %v1110, %v1112
      %v1115 = vshrl.u32 %v396, 16
      %v1117 = vrot.slane %v1115, 7
      %v1118 = vrot.slane %v1117, 1
      %v1120 = vshll.u32 %v411, 16
      %v1122 = vsel %vm918, %v1118, %v1120
      %v1123 = vshrl.u32 %v411, 16
      %v1125 = vrot.slane %v1123, 7
      %v1126 = vrot.slane %v1125, 1
      %v1128 = vshll.u32 %v418, 16
      %v1130 = vsel %vm918, %v1126, %v1128
      %v1131 = vshrl.u32 %v418, 16
      %v1133 = vrot.slane %v1131, 7
      %v1134 = vrot.slane %v1133, 1
      %v1136 = vshll.u32 %v419, 16
      %v1138 = vsel %vm918, %v1134, %v1136
      %v1139 = vshrl.u32 %v419, 16
      %v1141 = vrot.slane %v1139, 7
      %v1142 = vrot.slane %v1141, 1
      %v1144 = vshll.u32 %v893, 16
      %v1146 = vsel %vm918, %v1142, %v1144
      %v1148 = vshrl.u32 %v434, 16
      %v1150 = vrot.slane %v1148, 7
      %v1151 = vrot.slane %v1150, 1
      %v1153 = vshll.u32 %v441, 16
      %v1155 = vsel %vm918, %v1151, %v1153
      %v1156 = vshrl.u32 %v441, 16
      %v1158 = vrot.slane %v1156, 7
      %v1159 = vrot.slane %v1158, 1
      %v1161 = vshll.u32 %v442, 16
      %v1163 = vsel %vm918, %v1159, %v1161
      %v1164 = vshrl.u32 %v442, 16
      %v1166 = vrot.slane %v1164, 7
      %v1167 = vrot.slane %v1166, 1
      %v1169 = vshll.u32 %v443, 16
      %v1171 = vsel %vm918, %v1167, %v1169
      %v1172 = vshrl.u32 %v443, 16
      %v1174 = vrot.slane %v1172, 7
      %v1175 = vrot.slane %v1174, 1
      %v1177 = vshll.u32 %v458, 16
      %v1179 = vsel %vm918, %v1175, %v1177
      %v1180 = vshrl.u32 %v458, 16
      %v1182 = vrot.slane %v1180, 7
      %v1183 = vrot.slane %v1182, 1
      %v1185 = vshll.u32 %v465, 16
      %v1187 = vsel %vm918, %v1183, %v1185
      %v1188 = vshrl.u32 %v465, 16
      %v1190 = vrot.slane %v1188, 7
      %v1191 = vrot.slane %v1190, 1
      %v1193 = vshll.u32 %v466, 16
      %v1195 = vsel %vm918, %v1191, %v1193
      %v1196 = vshrl.u32 %v466, 16
      %v1198 = vrot.slane %v1196, 7
      %v1199 = vrot.slane %v1198, 1
      %v1201 = vshll.u32 %v894, 16
      %v1203 = vsel %vm918, %v1199, %v1201
      %v1205 = vshrl.u32 %v481, 16
      %v1207 = vrot.slane %v1205, 7
      %v1208 = vrot.slane %v1207, 1
      %v1210 = vshll.u32 %v488, 16
      %v1212 = vsel %vm918, %v1208, %v1210
      %v1213 = vshrl.u32 %v488, 16
      %v1215 = vrot.slane %v1213, 7
      %v1216 = vrot.slane %v1215, 1
      %v1218 = vshll.u32 %v489, 16
      %v1220 = vsel %vm918, %v1216, %v1218
      %v1221 = vshrl.u32 %v489, 16
      %v1223 = vrot.slane %v1221, 7
      %v1224 = vrot.slane %v1223, 1
      %v1226 = vshll.u32 %v490, 16
      %v1228 = vsel %vm918, %v1224, %v1226
      %v1229 = vshrl.u32 %v490, 16
      %v1231 = vrot.slane %v1229, 7
      %v1232 = vrot.slane %v1231, 1
      %v1234 = vshll.u32 %v505, 16
      %v1236 = vsel %vm918, %v1232, %v1234
      %v1237 = vshrl.u32 %v505, 16
      %v1239 = vrot.slane %v1237, 7
      %v1240 = vrot.slane %v1239, 1
      %v1242 = vshll.u32 %v512, 16
      %v1244 = vsel %vm918, %v1240, %v1242
      %v1245 = vshrl.u32 %v512, 16
      %v1247 = vrot.slane %v1245, 7
      %v1248 = vrot.slane %v1247, 1
      %v1250 = vshll.u32 %v513, 16
      %v1252 = vsel %vm918, %v1248, %v1250
      %v1253 = vshrl.u32 %v513, 16
      %v1255 = vrot.slane %v1253, 7
      %v1256 = vrot.slane %v1255, 1
      %v1258 = vshll.u32 %v895, 16
      %v1260 = vsel %vm918, %v1256, %v1258
      %v1262 = vshrl.u32 %v528, 16
      %v1264 = vrot.slane %v1262, 7
      %v1265 = vrot.slane %v1264, 1
      %v1267 = vshll.u32 %v535, 16
      %v1269 = vsel %vm918, %v1265, %v1267
      %v1270 = vshrl.u32 %v535, 16
      %v1272 = vrot.slane %v1270, 7
      %v1273 = vrot.slane %v1272, 1
      %v1275 = vshll.u32 %v536, 16
      %v1277 = vsel %vm918, %v1273, %v1275
      %v1278 = vshrl.u32 %v536, 16
      %v1280 = vrot.slane %v1278, 7
      %v1281 = vrot.slane %v1280, 1
      %v1283 = vshll.u32 %v537, 16
      %v1285 = vsel %vm918, %v1281, %v1283
      %v1286 = vshrl.u32 %v537, 16
      %v1288 = vrot.slane %v1286, 7
      %v1289 = vrot.slane %v1288, 1
      %v1291 = vshll.u32 %v552, 16
      %v1293 = vsel %vm918, %v1289, %v1291
      %v1294 = vshrl.u32 %v552, 16
      %v1296 = vrot.slane %v1294, 7
      %v1297 = vrot.slane %v1296, 1
      %v1299 = vshll.u32 %v559, 16
      %v1301 = vsel %vm918, %v1297, %v1299
      %v1302 = vshrl.u32 %v559, 16
      %v1304 = vrot.slane %v1302, 7
      %v1305 = vrot.slane %v1304, 1
      %v1307 = vshll.u32 %v560, 16
      %v1309 = vsel %vm918, %v1305, %v1307
      %v1310 = vshrl.u32 %v560, 16
      %v1312 = vrot.slane %v1310, 7
      %v1313 = vrot.slane %v1312, 1
      %v1315 = vshll.u32 %v896, 16
      %v1317 = vsel %vm918, %v1313, %v1315
      %v1319 = vshrl.u32 %v575, 16
      %v1321 = vrot.slane %v1319, 7
      %v1322 = vrot.slane %v1321, 1
      %v1324 = vshll.u32 %v582, 16
      %v1326 = vsel %vm918, %v1322, %v1324
      %v1327 = vshrl.u32 %v582, 16
      %v1329 = vrot.slane %v1327, 7
      %v1330 = vrot.slane %v1329, 1
      %v1332 = vshll.u32 %v583, 16
      %v1334 = vsel %vm918, %v1330, %v1332
      %v1335 = vshrl.u32 %v583, 16
      %v1337 = vrot.slane %v1335, 7
      %v1338 = vrot.slane %v1337, 1
      %v1340 = vshll.u32 %v584, 16
      %v1342 = vsel %vm918, %v1338, %v1340
      %v1343 = vshrl.u32 %v584, 16
      %v1345 = vrot.slane %v1343, 7
      %v1346 = vrot.slane %v1345, 1
      %v1348 = vshll.u32 %v599, 16
      %v1350 = vsel %vm918, %v1346, %v1348
      %v1351 = vshrl.u32 %v599, 16
      %v1353 = vrot.slane %v1351, 7
      %v1354 = vrot.slane %v1353, 1
      %v1356 = vshll.u32 %v606, 16
      %v1358 = vsel %vm918, %v1354, %v1356
      %v1359 = vshrl.u32 %v606, 16
      %v1361 = vrot.slane %v1359, 7
      %v1362 = vrot.slane %v1361, 1
      %v1364 = vshll.u32 %v607, 16
      %v1366 = vsel %vm918, %v1362, %v1364
      %v1367 = vshrl.u32 %v607, 16
      %v1369 = vrot.slane %v1367, 7
      %v1370 = vrot.slane %v1369, 1
      %v1372 = vshll.u32 %v897, 16
      %v1374 = vsel %vm918, %v1370, %v1372
      %v1376 = vshrl.u32 %v622, 16
      %v1378 = vrot.slane %v1376, 7
      %v1379 = vrot.slane %v1378, 1
      %v1381 = vshll.u32 %v629, 16
      %v1383 = vsel %vm918, %v1379, %v1381
      %v1384 = vshrl.u32 %v629, 16
      %v1386 = vrot.slane %v1384, 7
      %v1387 = vrot.slane %v1386, 1
      %v1389 = vshll.u32 %v630, 16
      %v1391 = vsel %vm918, %v1387, %v1389
      %v1392 = vshrl.u32 %v630, 16
      %v1394 = vrot.slane %v1392, 7
      %v1395 = vrot.slane %v1394, 1
      %v1397 = vshll.u32 %v631, 16
      %v1399 = vsel %vm918, %v1395, %v1397
      %v1400 = vshrl.u32 %v631, 16
      %v1402 = vrot.slane %v1400, 7
      %v1403 = vrot.slane %v1402, 1
      %v1405 = vshll.u32 %v646, 16
      %v1407 = vsel %vm918, %v1403, %v1405
      %v1408 = vshrl.u32 %v646, 16
      %v1410 = vrot.slane %v1408, 7
      %v1411 = vrot.slane %v1410, 1
      %v1413 = vshll.u32 %v653, 16
      %v1415 = vsel %vm918, %v1411, %v1413
      %v1416 = vshrl.u32 %v653, 16
      %v1418 = vrot.slane %v1416, 7
      %v1419 = vrot.slane %v1418, 1
      %v1421 = vshll.u32 %v654, 16
      %v1423 = vsel %vm918, %v1419, %v1421
      %v1424 = vshrl.u32 %v654, 16
      %v1426 = vrot.slane %v1424, 7
      %v1427 = vrot.slane %v1426, 1
      %v1429 = vshll.u32 %v898, 16
      %v1431 = vsel %vm918, %v1427, %v1429
      %v1433 = vshrl.u32 %v669, 16
      %v1435 = vrot.slane %v1433, 7
      %v1436 = vrot.slane %v1435, 1
      %v1438 = vshll.u32 %v676, 16
      %v1440 = vsel %vm918, %v1436, %v1438
      %v1441 = vshrl.u32 %v676, 16
      %v1443 = vrot.slane %v1441, 7
      %v1444 = vrot.slane %v1443, 1
      %v1446 = vshll.u32 %v677, 16
      %v1448 = vsel %vm918, %v1444, %v1446
      %v1449 = vshrl.u32 %v677, 16
      %v1451 = vrot.slane %v1449, 7
      %v1452 = vrot.slane %v1451, 1
      %v1454 = vshll.u32 %v678, 16
      %v1456 = vsel %vm918, %v1452, %v1454
      %v1457 = vshrl.u32 %v678, 16
      %v1459 = vrot.slane %v1457, 7
      %v1460 = vrot.slane %v1459, 1
      %v1462 = vshll.u32 %v693, 16
      %v1464 = vsel %vm918, %v1460, %v1462
      %v1465 = vshrl.u32 %v693, 16
      %v1467 = vrot.slane %v1465, 7
      %v1468 = vrot.slane %v1467, 1
      %v1470 = vshll.u32 %v700, 16
      %v1472 = vsel %vm918, %v1468, %v1470
      %v1473 = vshrl.u32 %v700, 16
      %v1475 = vrot.slane %v1473, 7
      %v1476 = vrot.slane %v1475, 1
      %v1478 = vshll.u32 %v701, 16
      %v1480 = vsel %vm918, %v1476, %v1478
      %v1481 = vshrl.u32 %v701, 16
      %v1483 = vrot.slane %v1481, 7
      %v1484 = vrot.slane %v1483, 1
      %v1486 = vshll.u32 %v899, 16
      %v1488 = vsel %vm918, %v1484, %v1486
      %v1490 = vshrl.u32 %v716, 16
      %v1492 = vrot.slane %v1490, 7
      %v1493 = vrot.slane %v1492, 1
      %v1495 = vshll.u32 %v723, 16
      %v1497 = vsel %vm918, %v1493, %v1495
      %v1498 = vshrl.u32 %v723, 16
      %v1500 = vrot.slane %v1498, 7
      %v1501 = vrot.slane %v1500, 1
      %v1503 = vshll.u32 %v724, 16
      %v1505 = vsel %vm918, %v1501, %v1503
      %v1506 = vshrl.u32 %v724, 16
      %v1508 = vrot.slane %v1506, 7
      %v1509 = vrot.slane %v1508, 1
      %v1511 = vshll.u32 %v725, 16
      %v1513 = vsel %vm918, %v1509, %v1511
      %v1514 = vshrl.u32 %v725, 16
      %v1516 = vrot.slane %v1514, 7
      %v1517 = vrot.slane %v1516, 1
      %v1519 = vshll.u32 %v740, 16
      %v1521 = vsel %vm918, %v1517, %v1519
      %v1522 = vshrl.u32 %v740, 16
      %v1524 = vrot.slane %v1522, 7
      %v1525 = vrot.slane %v1524, 1
      %v1527 = vshll.u32 %v747, 16
      %v1529 = vsel %vm918, %v1525, %v1527
      %v1530 = vshrl.u32 %v747, 16
      %v1532 = vrot.slane %v1530, 7
      %v1533 = vrot.slane %v1532, 1
      %v1535 = vshll.u32 %v748, 16
      %v1537 = vsel %vm918, %v1533, %v1535
      %v1538 = vshrl.u32 %v748, 16
      %v1540 = vrot.slane %v1538, 7
      %v1541 = vrot.slane %v1540, 1
      %v1543 = vshll.u32 %v900, 16
      %v1545 = vsel %vm918, %v1541, %v1543
      %v1547 = vshrl.u32 %v763, 16
      %v1549 = vrot.slane %v1547, 7
      %v1550 = vrot.slane %v1549, 1
      %v1552 = vshll.u32 %v770, 16
      %v1554 = vsel %vm918, %v1550, %v1552
      %v1555 = vshrl.u32 %v770, 16
      %v1557 = vrot.slane %v1555, 7
      %v1558 = vrot.slane %v1557, 1
      %v1560 = vshll.u32 %v771, 16
      %v1562 = vsel %vm918, %v1558, %v1560
      %v1563 = vshrl.u32 %v771, 16
      %v1565 = vrot.slane %v1563, 7
      %v1566 = vrot.slane %v1565, 1
      %v1568 = vshll.u32 %v772, 16
      %v1570 = vsel %vm918, %v1566, %v1568
      %v1571 = vshrl.u32 %v772, 16
      %v1573 = vrot.slane %v1571, 7
      %v1574 = vrot.slane %v1573, 1
      %v1576 = vshll.u32 %v787, 16
      %v1578 = vsel %vm918, %v1574, %v1576
      %v1579 = vshrl.u32 %v787, 16
      %v1581 = vrot.slane %v1579, 7
      %v1582 = vrot.slane %v1581, 1
      %v1584 = vshll.u32 %v794, 16
      %v1586 = vsel %vm918, %v1582, %v1584
      %v1587 = vshrl.u32 %v794, 16
      %v1589 = vrot.slane %v1587, 7
      %v1590 = vrot.slane %v1589, 1
      %v1592 = vshll.u32 %v795, 16
      %v1594 = vsel %vm918, %v1590, %v1592
      %v1595 = vshrl.u32 %v795, 16
      %v1597 = vrot.slane %v1595, 7
      %v1598 = vrot.slane %v1597, 1
      %v1600 = vshll.u32 %v901, 16
      %v1602 = vsel %vm918, %v1598, %v1600
      %v1604 = vshrl.u32 %v810, 16
      %v1606 = vrot.slane %v1604, 7
      %v1607 = vrot.slane %v1606, 1
      %v1609 = vshll.u32 %v817, 16
      %v1611 = vsel %vm918, %v1607, %v1609
      %v1612 = vshrl.u32 %v817, 16
      %v1614 = vrot.slane %v1612, 7
      %v1615 = vrot.slane %v1614, 1
      %v1617 = vshll.u32 %v818, 16
      %v1619 = vsel %vm918, %v1615, %v1617
      %v1620 = vshrl.u32 %v818, 16
      %v1622 = vrot.slane %v1620, 7
      %v1623 = vrot.slane %v1622, 1
      %v1625 = vshll.u32 %v819, 16
      %v1627 = vsel %vm918, %v1623, %v1625
      %v1628 = vshrl.u32 %v819, 16
      %v1630 = vrot.slane %v1628, 7
      %v1631 = vrot.slane %v1630, 1
      %v1633 = vshll.u32 %v834, 16
      %v1635 = vsel %vm918, %v1631, %v1633
      %v1636 = vshrl.u32 %v834, 16
      %v1638 = vrot.slane %v1636, 7
      %v1639 = vrot.slane %v1638, 1
      %v1641 = vshll.u32 %v841, 16
      %v1643 = vsel %vm918, %v1639, %v1641
      %v1644 = vshrl.u32 %v841, 16
      %v1646 = vrot.slane %v1644, 7
      %v1647 = vrot.slane %v1646, 1
      %v1649 = vshll.u32 %v842, 16
      %v1651 = vsel %vm918, %v1647, %v1649
      %v1652 = vshrl.u32 %v842, 16
      %v1654 = vrot.slane %v1652, 7
      %v1655 = vrot.slane %v1654, 1
      %v1657 = vshll.u32 %v902, 16
      %v1659 = vsel %vm918, %v1655, %v1657
      %v1661 = vshrl.u32 %v857, 16
      %v1663 = vrot.slane %v1661, 7
      %v1664 = vrot.slane %v1663, 1
      %v1666 = vshll.u32 %v864, 16
      %v1668 = vsel %vm918, %v1664, %v1666
      %v1669 = vshrl.u32 %v864, 16
      %v1671 = vrot.slane %v1669, 7
      %v1672 = vrot.slane %v1671, 1
      %v1674 = vshll.u32 %v865, 16
      %v1676 = vsel %vm918, %v1672, %v1674
      %v1677 = vshrl.u32 %v865, 16
      %v1679 = vrot.slane %v1677, 7
      %v1680 = vrot.slane %v1679, 1
      %v1682 = vshll.u32 %v866, 16
      %v1684 = vsel %vm918, %v1680, %v1682
      %v1685 = vshrl.u32 %v866, 16
      %v1687 = vrot.slane %v1685, 7
      %v1688 = vrot.slane %v1687, 1
      %v1690 = vshll.u32 %v881, 16
      %v1692 = vsel %vm918, %v1688, %v1690
      %v1693 = vshrl.u32 %v881, 16
      %v1695 = vrot.slane %v1693, 7
      %v1696 = vrot.slane %v1695, 1
      %v1698 = vshll.u32 %v888, 16
      %v1700 = vsel %vm918, %v1696, %v1698
      %v1701 = vshrl.u32 %v888, 16
      %v1703 = vrot.slane %v1701, 7
      %v1704 = vrot.slane %v1703, 1
      %v1706 = vshll.u32 %v889, 16
      %v1708 = vsel %vm918, %v1704, %v1706
      %v1709 = vshrl.u32 %v889, 16
      %v1711 = vrot.slane %v1709, 7
      %v1712 = vrot.slane %v1711, 1
      %v1714 = vshll.u32 %v903, 16
      %v1716 = vsel %vm918, %v1712, %v1714
      %v1720 = vunpack.c.l.s4 1966171168
      %v1721 = vunpack.c.0.s8 %v1720
      %v1722 = vlaneseq
      %v1723 = vshrl.u32 %v1722, 7
      %v1724 = vsub.s32 %v1721, %v1723
      %v1725 = vrot.slane %v200, %v1724
      %v1726 = vcombine.high %v1725, %v1725
      %v1728 = vunpack.c.l.s4 1966171168
      %v1729 = vunpack.c.0.s8 %v1728
      %v1730 = vlaneseq
      %v1731 = vshrl.u32 %v1730, 7
      %v1732 = vsub.s32 %v1729, %v1731
      %v1733 = vrot.slane %v1725, %v1732
      %v1735 = vunpack.c.l.s4 1966171168
      %v1736 = vunpack.c.0.s8 %v1735
      %v1737 = vlaneseq
      %v1738 = vshrl.u32 %v1737, 7
      %v1739 = vsub.s32 %v1736, %v1738
      %v1740 = vrot.slane %v1726, %v1739
      %v1741 = vcombine.high %v1733, %v1733
      %v1742 = vcombine.high %v1740, %v1740
      %v1744 = vunpack.c.l.s4 1966171168
      %v1745 = vunpack.c.0.s8 %v1744
      %v1746 = vlaneseq
      %v1747 = vshrl.u32 %v1746, 7
      %v1748 = vsub.s32 %v1745, %v1747
      %v1749 = vrot.slane %v201, %v1748
      %v1750 = vcombine.high %v1749, %v1749
      %v1752 = vunpack.c.l.s4 1966171168
      %v1753 = vunpack.c.0.s8 %v1752
      %v1754 = vlaneseq
      %v1755 = vshrl.u32 %v1754, 7
      %v1756 = vsub.s32 %v1753, %v1755
      %v1757 = vrot.slane %v1749, %v1756
      %v1759 = vunpack.c.l.s4 1966171168
      %v1760 = vunpack.c.0.s8 %v1759
      %v1761 = vlaneseq
      %v1762 = vshrl.u32 %v1761, 7
      %v1763 = vsub.s32 %v1760, %v1762
      %v1764 = vrot.slane %v1750, %v1763
      %v1765 = vcombine.high %v1757, %v1757
      %v1766 = vcombine.high %v1764, %v1764
      %v1768 = vshrl.u32 %v1733, 16
      %v1770 = vrot.slane %v1768, 7
      %v1771 = vrot.slane %v1770, 1
      %v1773 = vshll.u32 %v1740, 16
      %v1775 = vsel %vm918, %v1771, %v1773
      %v1776 = vshrl.u32 %v1740, 16
      %v1778 = vrot.slane %v1776, 7
      %v1779 = vrot.slane %v1778, 1
      %v1781 = vshll.u32 %v1741, 16
      %v1783 = vsel %vm918, %v1779, %v1781
      %v1784 = vshrl.u32 %v1741, 16
      %v1786 = vrot.slane %v1784, 7
      %v1787 = vrot.slane %v1786, 1
      %v1789 = vshll.u32 %v1742, 16
      %v1791 = vsel %vm918, %v1787, %v1789
      %v1792 = vshrl.u32 %v1742, 16
      %v1794 = vrot.slane %v1792, 7
      %v1795 = vrot.slane %v1794, 1
      %v1797 = vshll.u32 %v1757, 16
      %v1799 = vsel %vm918, %v1795, %v1797
      %v1800 = vshrl.u32 %v1757, 16
      %v1802 = vrot.slane %v1800, 7
      %v1803 = vrot.slane %v1802, 1
      %v1805 = vshll.u32 %v1764, 16
      %v1807 = vsel %vm918, %v1803, %v1805
      %v1808 = vshrl.u32 %v1764, 16
      %v1810 = vrot.slane %v1808, 7
      %v1811 = vrot.slane %v1810, 1
      %v1813 = vshll.u32 %v1765, 16
      %v1815 = vsel %vm918, %v1811, %v1813
      %v1816 = vshrl.u32 %v1765, 16
      %v1818 = vrot.slane %v1816, 7
      %v1819 = vrot.slane %v1818, 1
      %v1821 = vshll.u32 %v1766, 16
      %v1823 = vsel %vm918, %v1819, %v1821
      %v1827 = vunpack.c.l.s4 1966171168
      %v1828 = vunpack.c.0.s8 %v1827
      %v1829 = vlaneseq
      %v1830 = vshrl.u32 %v1829, 7
      %v1831 = vsub.s32 %v1828, %v1830
      %v1832 = vrot.slane %v202, %v1831
      %v1833 = vcombine.high %v1832, %v1832
      %v1835 = vunpack.c.l.s4 1966171168
      %v1836 = vunpack.c.0.s8 %v1835
      %v1837 = vlaneseq
      %v1838 = vshrl.u32 %v1837, 7
      %v1839 = vsub.s32 %v1836, %v1838
      %v1840 = vrot.slane %v1832, %v1839
      %v1842 = vunpack.c.l.s4 1966171168
      %v1843 = vunpack.c.0.s8 %v1842
      %v1844 = vlaneseq
      %v1845 = vshrl.u32 %v1844, 7
      %v1846 = vsub.s32 %v1843, %v1845
      %v1847 = vrot.slane %v1833, %v1846
      %v1848 = vcombine.high %v1840, %v1840
      %v1849 = vcombine.high %v1847, %v1847
      %v1851 = vunpack.c.l.s4 1966171168
      %v1852 = vunpack.c.0.s8 %v1851
      %v1853 = vlaneseq
      %v1854 = vshrl.u32 %v1853, 7
      %v1855 = vsub.s32 %v1852, %v1854
      %v1856 = vrot.slane %v203, %v1855
      %v1857 = vcombine.high %v1856, %v1856
      %v1859 = vunpack.c.l.s4 1966171168
      %v1860 = vunpack.c.0.s8 %v1859
      %v1861 = vlaneseq
      %v1862 = vshrl.u32 %v1861, 7
      %v1863 = vsub.s32 %v1860, %v1862
      %v1864 = vrot.slane %v1856, %v1863
      %v1866 = vunpack.c.l.s4 1966171168
      %v1867 = vunpack.c.0.s8 %v1866
      %v1868 = vlaneseq
      %v1869 = vshrl.u32 %v1868, 7
      %v1870 = vsub.s32 %v1867, %v1869
      %v1871 = vrot.slane %v1857, %v1870
      %v1872 = vcombine.high %v1864, %v1864
      %v1873 = vcombine.high %v1871, %v1871
      %v1875 = vshrl.u32 %v1840, 16
      %v1877 = vrot.slane %v1875, 7
      %v1878 = vrot.slane %v1877, 1
      %v1880 = vshll.u32 %v1847, 16
      %v1882 = vsel %vm918, %v1878, %v1880
      %v1883 = vshrl.u32 %v1847, 16
      %v1885 = vrot.slane %v1883, 7
      %v1886 = vrot.slane %v1885, 1
      %v1888 = vshll.u32 %v1848, 16
      %v1890 = vsel %vm918, %v1886, %v1888
      %v1891 = vshrl.u32 %v1848, 16
      %v1893 = vrot.slane %v1891, 7
      %v1894 = vrot.slane %v1893, 1
      %v1896 = vshll.u32 %v1849, 16
      %v1898 = vsel %vm918, %v1894, %v1896
      %v1899 = vshrl.u32 %v1849, 16
      %v1901 = vrot.slane %v1899, 7
      %v1902 = vrot.slane %v1901, 1
      %v1904 = vshll.u32 %v1864, 16
      %v1906 = vsel %vm918, %v1902, %v1904
      %v1907 = vshrl.u32 %v1864, 16
      %v1909 = vrot.slane %v1907, 7
      %v1910 = vrot.slane %v1909, 1
      %v1912 = vshll.u32 %v1871, 16
      %v1914 = vsel %vm918, %v1910, %v1912
      %v1915 = vshrl.u32 %v1871, 16
      %v1917 = vrot.slane %v1915, 7
      %v1918 = vrot.slane %v1917, 1
      %v1920 = vshll.u32 %v1872, 16
      %v1922 = vsel %vm918, %v1918, %v1920
      %v1923 = vshrl.u32 %v1872, 16
      %v1925 = vrot.slane %v1923, 7
      %v1926 = vrot.slane %v1925, 1
      %v1928 = vshll.u32 %v1873, 16
      %v1930 = vsel %vm918, %v1926, %v1928
      %v1931 = vcombine.low %v246, %v253
      %v1932 = vcombine.low %v254, %v255
      %v1933 = vcombine.low %v270, %v277
      %v1934 = vcombine.low %v278, %v293
      %v1936 = vunpack.c.l.s4 1966171168
      %v1937 = vunpack.c.0.s8 %v1936
      %v1938 = vlaneseq
      %v1939 = vshrl.u32 %v1938, 7
      %v1940 = vsub.s32 %v1937, %v1939
      %v1941 = vrot.slane %v1931, %v1940
      %v1943 = vunpack.c.l.s4 1966171168
      %v1944 = vunpack.c.0.s8 %v1943
      %v1945 = vlaneseq
      %v1946 = vshrl.u32 %v1945, 7
      %v1947 = vsub.s32 %v1944, %v1946
      %v1948 = vrot.slane %v1932, %v1947
      %v1950 = vunpack.c.l.s4 1966171168
      %v1951 = vunpack.c.0.s8 %v1950
      %v1952 = vlaneseq
      %v1953 = vshrl.u32 %v1952, 7
      %v1954 = vsub.s32 %v1951, %v1953
      %v1955 = vrot.slane %v1933, %v1954
      %v1957 = vunpack.c.l.s4 1966171168
      %v1958 = vunpack.c.0.s8 %v1957
      %v1959 = vlaneseq
      %v1960 = vshrl.u32 %v1959, 7
      %v1961 = vsub.s32 %v1958, %v1960
      %v1962 = vrot.slane %v1934, %v1961
      %v1963 = vcombine.low %v1941, %v1948
      %v1964 = vcombine.low %v1955, %v1962
      %v1966 = vunpack.c.l.s4 1966171168
      %v1967 = vunpack.c.0.s8 %v1966
      %v1968 = vlaneseq
      %v1969 = vshrl.u32 %v1968, 7
      %v1970 = vsub.s32 %v1967, %v1969
      %v1971 = vrot.slane %v1963, %v1970
      %v1973 = vunpack.c.l.s4 1966171168
      %v1974 = vunpack.c.0.s8 %v1973
      %v1975 = vlaneseq
      %v1976 = vshrl.u32 %v1975, 7
      %v1977 = vsub.s32 %v1974, %v1976
      %v1978 = vrot.slane %v1964, %v1977
      %v1979 = vcombine.low %v1971, %v1978
      %v1980 = vcombine.low %v300, %v301
      %v1981 = vcombine.low %v302, %v317
      %v1982 = vcombine.low %v324, %v325
      %v1983 = vcombine.low %v340, %v347
      %v1985 = vunpack.c.l.s4 1966171168
      %v1986 = vunpack.c.0.s8 %v1985
      %v1987 = vlaneseq
      %v1988 = vshrl.u32 %v1987, 7
      %v1989 = vsub.s32 %v1986, %v1988
      %v1990 = vrot.slane %v1980, %v1989
      %v1992 = vunpack.c.l.s4 1966171168
      %v1993 = vunpack.c.0.s8 %v1992
      %v1994 = vlaneseq
      %v1995 = vshrl.u32 %v1994, 7
      %v1996 = vsub.s32 %v1993, %v1995
      %v1997 = vrot.slane %v1981, %v1996
      %v1999 = vunpack.c.l.s4 1966171168
      %v2000 = vunpack.c.0.s8 %v1999
      %v2001 = vlaneseq
      %v2002 = vshrl.u32 %v2001, 7
      %v2003 = vsub.s32 %v2000, %v2002
      %v2004 = vrot.slane %v1982, %v2003
      %v2006 = vunpack.c.l.s4 1966171168
      %v2007 = vunpack.c.0.s8 %v2006
      %v2008 = vlaneseq
      %v2009 = vshrl.u32 %v2008, 7
      %v2010 = vsub.s32 %v2007, %v2009
      %v2011 = vrot.slane %v1983, %v2010
      %v2012 = vcombine.low %v1990, %v1997
      %v2013 = vcombine.low %v2004, %v2011
      %v2015 = vunpack.c.l.s4 1966171168
      %v2016 = vunpack.c.0.s8 %v2015
      %v2017 = vlaneseq
      %v2018 = vshrl.u32 %v2017, 7
      %v2019 = vsub.s32 %v2016, %v2018
      %v2020 = vrot.slane %v2012, %v2019
      %v2022 = vunpack.c.l.s4 1966171168
      %v2023 = vunpack.c.0.s8 %v2022
      %v2024 = vlaneseq
      %v2025 = vshrl.u32 %v2024, 7
      %v2026 = vsub.s32 %v2023, %v2025
      %v2027 = vrot.slane %v2013, %v2026
      %v2028 = vcombine.low %v2020, %v2027
      %v2029 = vcombine.low %v348, %v349
      %v2030 = vcombine.low %v364, %v371
      %v2031 = vcombine.low %v372, %v387
      %v2032 = vcombine.low %v394, %v395
      %v2034 = vunpack.c.l.s4 1966171168
      %v2035 = vunpack.c.0.s8 %v2034
      %v2036 = vlaneseq
      %v2037 = vshrl.u32 %v2036, 7
      %v2038 = vsub.s32 %v2035, %v2037
      %v2039 = vrot.slane %v2029, %v2038
      %v2041 = vunpack.c.l.s4 1966171168
      %v2042 = vunpack.c.0.s8 %v2041
      %v2043 = vlaneseq
      %v2044 = vshrl.u32 %v2043, 7
      %v2045 = vsub.s32 %v2042, %v2044
      %v2046 = vrot.slane %v2030, %v2045
      %v2048 = vunpack.c.l.s4 1966171168
      %v2049 = vunpack.c.0.s8 %v2048
      %v2050 = vlaneseq
      %v2051 = vshrl.u32 %v2050, 7
      %v2052 = vsub.s32 %v2049, %v2051
      %v2053 = vrot.slane %v2031, %v2052
      %v2055 = vunpack.c.l.s4 1966171168
      %v2056 = vunpack.c.0.s8 %v2055
      %v2057 = vlaneseq
      %v2058 = vshrl.u32 %v2057, 7
      %v2059 = vsub.s32 %v2056, %v2058
      %v2060 = vrot.slane %v2032, %v2059
      %v2061 = vcombine.low %v2039, %v2046
      %v2062 = vcombine.low %v2053, %v2060
      %v2064 = vunpack.c.l.s4 1966171168
      %v2065 = vunpack.c.0.s8 %v2064
      %v2066 = vlaneseq
      %v2067 = vshrl.u32 %v2066, 7
      %v2068 = vsub.s32 %v2065, %v2067
      %v2069 = vrot.slane %v2061, %v2068
      %v2071 = vunpack.c.l.s4 1966171168
      %v2072 = vunpack.c.0.s8 %v2071
      %v2073 = vlaneseq
      %v2074 = vshrl.u32 %v2073, 7
      %v2075 = vsub.s32 %v2072, %v2074
      %v2076 = vrot.slane %v2062, %v2075
      %v2077 = vcombine.low %v2069, %v2076
      %v2078 = vcombine.low %v396, %v411
      %v2079 = vcombine.low %v418, %v419
      %v2080 = vcombine.low %v434, %v441
      %v2081 = vcombine.low %v442, %v443
      %v2083 = vunpack.c.l.s4 1966171168
      %v2084 = vunpack.c.0.s8 %v2083
      %v2085 = vlaneseq
      %v2086 = vshrl.u32 %v2085, 7
      %v2087 = vsub.s32 %v2084, %v2086
      %v2088 = vrot.slane %v2078, %v2087
      %v2090 = vunpack.c.l.s4 1966171168
      %v2091 = vunpack.c.0.s8 %v2090
      %v2092 = vlaneseq
      %v2093 = vshrl.u32 %v2092, 7
      %v2094 = vsub.s32 %v2091, %v2093
      %v2095 = vrot.slane %v2079, %v2094
      %v2097 = vunpack.c.l.s4 1966171168
      %v2098 = vunpack.c.0.s8 %v2097
      %v2099 = vlaneseq
      %v2100 = vshrl.u32 %v2099, 7
      %v2101 = vsub.s32 %v2098, %v2100
      %v2102 = vrot.slane %v2080, %v2101
      %v2104 = vunpack.c.l.s4 1966171168
      %v2105 = vunpack.c.0.s8 %v2104
      %v2106 = vlaneseq
      %v2107 = vshrl.u32 %v2106, 7
      %v2108 = vsub.s32 %v2105, %v2107
      %v2109 = vrot.slane %v2081, %v2108
      %v2110 = vcombine.low %v2088, %v2095
      %v2111 = vcombine.low %v2102, %v2109
      %v2113 = vunpack.c.l.s4 1966171168
      %v2114 = vunpack.c.0.s8 %v2113
      %v2115 = vlaneseq
      %v2116 = vshrl.u32 %v2115, 7
      %v2117 = vsub.s32 %v2114, %v2116
      %v2118 = vrot.slane %v2110, %v2117
      %v2120 = vunpack.c.l.s4 1966171168
      %v2121 = vunpack.c.0.s8 %v2120
      %v2122 = vlaneseq
      %v2123 = vshrl.u32 %v2122, 7
      %v2124 = vsub.s32 %v2121, %v2123
      %v2125 = vrot.slane %v2111, %v2124
      %v2126 = vcombine.low %v2118, %v2125
      %v2127 = vcombine.low %v458, %v465
      %v2128 = vcombine.low %v466, %v481
      %v2129 = vcombine.low %v488, %v489
      %v2130 = vcombine.low %v490, %v505
      %v2132 = vunpack.c.l.s4 1966171168
      %v2133 = vunpack.c.0.s8 %v2132
      %v2134 = vlaneseq
      %v2135 = vshrl.u32 %v2134, 7
      %v2136 = vsub.s32 %v2133, %v2135
      %v2137 = vrot.slane %v2127, %v2136
      %v2139 = vunpack.c.l.s4 1966171168
      %v2140 = vunpack.c.0.s8 %v2139
      %v2141 = vlaneseq
      %v2142 = vshrl.u32 %v2141, 7
      %v2143 = vsub.s32 %v2140, %v2142
      %v2144 = vrot.slane %v2128, %v2143
      %v2146 = vunpack.c.l.s4 1966171168
      %v2147 = vunpack.c.0.s8 %v2146
      %v2148 = vlaneseq
      %v2149 = vshrl.u32 %v2148, 7
      %v2150 = vsub.s32 %v2147, %v2149
      %v2151 = vrot.slane %v2129, %v2150
      %v2153 = vunpack.c.l.s4 1966171168
      %v2154 = vunpack.c.0.s8 %v2153
      %v2155 = vlaneseq
      %v2156 = vshrl.u32 %v2155, 7
      %v2157 = vsub.s32 %v2154, %v2156
      %v2158 = vrot.slane %v2130, %v2157
      %v2159 = vcombine.low %v2137, %v2144
      %v2160 = vcombine.low %v2151, %v2158
      %v2162 = vunpack.c.l.s4 1966171168
      %v2163 = vunpack.c.0.s8 %v2162
      %v2164 = vlaneseq
      %v2165 = vshrl.u32 %v2164, 7
      %v2166 = vsub.s32 %v2163, %v2165
      %v2167 = vrot.slane %v2159, %v2166
      %v2169 = vunpack.c.l.s4 1966171168
      %v2170 = vunpack.c.0.s8 %v2169
      %v2171 = vlaneseq
      %v2172 = vshrl.u32 %v2171, 7
      %v2173 = vsub.s32 %v2170, %v2172
      %v2174 = vrot.slane %v2160, %v2173
      %v2175 = vcombine.low %v2167, %v2174
      %v2176 = vcombine.low %v512, %v513
      %v2177 = vcombine.low %v528, %v535
      %v2178 = vcombine.low %v536, %v537
      %v2179 = vcombine.low %v552, %v559
      %v2181 = vunpack.c.l.s4 1966171168
      %v2182 = vunpack.c.0.s8 %v2181
      %v2183 = vlaneseq
      %v2184 = vshrl.u32 %v2183, 7
      %v2185 = vsub.s32 %v2182, %v2184
      %v2186 = vrot.slane %v2176, %v2185
      %v2188 = vunpack.c.l.s4 1966171168
      %v2189 = vunpack.c.0.s8 %v2188
      %v2190 = vlaneseq
      %v2191 = vshrl.u32 %v2190, 7
      %v2192 = vsub.s32 %v2189, %v2191
      %v2193 = vrot.slane %v2177, %v2192
      %v2195 = vunpack.c.l.s4 1966171168
      %v2196 = vunpack.c.0.s8 %v2195
      %v2197 = vlaneseq
      %v2198 = vshrl.u32 %v2197, 7
      %v2199 = vsub.s32 %v2196, %v2198
      %v2200 = vrot.slane %v2178, %v2199
      %v2202 = vunpack.c.l.s4 1966171168
      %v2203 = vunpack.c.0.s8 %v2202
      %v2204 = vlaneseq
      %v2205 = vshrl.u32 %v2204, 7
      %v2206 = vsub.s32 %v2203, %v2205
      %v2207 = vrot.slane %v2179, %v2206
      %v2208 = vcombine.low %v2186, %v2193
      %v2209 = vcombine.low %v2200, %v2207
      %v2211 = vunpack.c.l.s4 1966171168
      %v2212 = vunpack.c.0.s8 %v2211
      %v2213 = vlaneseq
      %v2214 = vshrl.u32 %v2213, 7
      %v2215 = vsub.s32 %v2212, %v2214
      %v2216 = vrot.slane %v2208, %v2215
      %v2218 = vunpack.c.l.s4 1966171168
      %v2219 = vunpack.c.0.s8 %v2218
      %v2220 = vlaneseq
      %v2221 = vshrl.u32 %v2220, 7
      %v2222 = vsub.s32 %v2219, %v2221
      %v2223 = vrot.slane %v2209, %v2222
      %v2224 = vcombine.low %v2216, %v2223
      %v2225 = vcombine.low %v560, %v575
      %v2226 = vcombine.low %v582, %v583
      %v2227 = vcombine.low %v584, %v599
      %v2228 = vcombine.low %v606, %v607
      %v2230 = vunpack.c.l.s4 1966171168
      %v2231 = vunpack.c.0.s8 %v2230
      %v2232 = vlaneseq
      %v2233 = vshrl.u32 %v2232, 7
      %v2234 = vsub.s32 %v2231, %v2233
      %v2235 = vrot.slane %v2225, %v2234
      %v2237 = vunpack.c.l.s4 1966171168
      %v2238 = vunpack.c.0.s8 %v2237
      %v2239 = vlaneseq
      %v2240 = vshrl.u32 %v2239, 7
      %v2241 = vsub.s32 %v2238, %v2240
      %v2242 = vrot.slane %v2226, %v2241
      %v2244 = vunpack.c.l.s4 1966171168
      %v2245 = vunpack.c.0.s8 %v2244
      %v2246 = vlaneseq
      %v2247 = vshrl.u32 %v2246, 7
      %v2248 = vsub.s32 %v2245, %v2247
      %v2249 = vrot.slane %v2227, %v2248
      %v2251 = vunpack.c.l.s4 1966171168
      %v2252 = vunpack.c.0.s8 %v2251
      %v2253 = vlaneseq
      %v2254 = vshrl.u32 %v2253, 7
      %v2255 = vsub.s32 %v2252, %v2254
      %v2256 = vrot.slane %v2228, %v2255
      %v2257 = vcombine.low %v2235, %v2242
      %v2258 = vcombine.low %v2249, %v2256
      %v2260 = vunpack.c.l.s4 1966171168
      %v2261 = vunpack.c.0.s8 %v2260
      %v2262 = vlaneseq
      %v2263 = vshrl.u32 %v2262, 7
      %v2264 = vsub.s32 %v2261, %v2263
      %v2265 = vrot.slane %v2257, %v2264
      %v2267 = vunpack.c.l.s4 1966171168
      %v2268 = vunpack.c.0.s8 %v2267
      %v2269 = vlaneseq
      %v2270 = vshrl.u32 %v2269, 7
      %v2271 = vsub.s32 %v2268, %v2270
      %v2272 = vrot.slane %v2258, %v2271
      %v2273 = vcombine.low %v2265, %v2272
      %v2274 = vcombine.low %v622, %v629
      %v2275 = vcombine.low %v630, %v631
      %v2276 = vcombine.low %v646, %v653
      %v2277 = vcombine.low %v654, %v669
      %v2279 = vunpack.c.l.s4 1966171168
      %v2280 = vunpack.c.0.s8 %v2279
      %v2281 = vlaneseq
      %v2282 = vshrl.u32 %v2281, 7
      %v2283 = vsub.s32 %v2280, %v2282
      %v2284 = vrot.slane %v2274, %v2283
      %v2286 = vunpack.c.l.s4 1966171168
      %v2287 = vunpack.c.0.s8 %v2286
      %v2288 = vlaneseq
      %v2289 = vshrl.u32 %v2288, 7
      %v2290 = vsub.s32 %v2287, %v2289
      %v2291 = vrot.slane %v2275, %v2290
      %v2293 = vunpack.c.l.s4 1966171168
      %v2294 = vunpack.c.0.s8 %v2293
      %v2295 = vlaneseq
      %v2296 = vshrl.u32 %v2295, 7
      %v2297 = vsub.s32 %v2294, %v2296
      %v2298 = vrot.slane %v2276, %v2297
      %v2300 = vunpack.c.l.s4 1966171168
      %v2301 = vunpack.c.0.s8 %v2300
      %v2302 = vlaneseq
      %v2303 = vshrl.u32 %v2302, 7
      %v2304 = vsub.s32 %v2301, %v2303
      %v2305 = vrot.slane %v2277, %v2304
      %v2306 = vcombine.low %v2284, %v2291
      %v2307 = vcombine.low %v2298, %v2305
      %v2309 = vunpack.c.l.s4 1966171168
      %v2310 = vunpack.c.0.s8 %v2309
      %v2311 = vlaneseq
      %v2312 = vshrl.u32 %v2311, 7
      %v2313 = vsub.s32 %v2310, %v2312
      %v2314 = vrot.slane %v2306, %v2313
      %v2316 = vunpack.c.l.s4 1966171168
      %v2317 = vunpack.c.0.s8 %v2316
      %v2318 = vlaneseq
      %v2319 = vshrl.u32 %v2318, 7
      %v2320 = vsub.s32 %v2317, %v2319
      %v2321 = vrot.slane %v2307, %v2320
      %v2322 = vcombine.low %v2314, %v2321
      %v2323 = vcombine.low %v676, %v677
      %v2324 = vcombine.low %v678, %v693
      %v2325 = vcombine.low %v700, %v701
      %v2326 = vcombine.low %v716, %v723
      %v2328 = vunpack.c.l.s4 1966171168
      %v2329 = vunpack.c.0.s8 %v2328
      %v2330 = vlaneseq
      %v2331 = vshrl.u32 %v2330, 7
      %v2332 = vsub.s32 %v2329, %v2331
      %v2333 = vrot.slane %v2323, %v2332
      %v2335 = vunpack.c.l.s4 1966171168
      %v2336 = vunpack.c.0.s8 %v2335
      %v2337 = vlaneseq
      %v2338 = vshrl.u32 %v2337, 7
      %v2339 = vsub.s32 %v2336, %v2338
      %v2340 = vrot.slane %v2324, %v2339
      %v2342 = vunpack.c.l.s4 1966171168
      %v2343 = vunpack.c.0.s8 %v2342
      %v2344 = vlaneseq
      %v2345 = vshrl.u32 %v2344, 7
      %v2346 = vsub.s32 %v2343, %v2345
      %v2347 = vrot.slane %v2325, %v2346
      %v2349 = vunpack.c.l.s4 1966171168
      %v2350 = vunpack.c.0.s8 %v2349
      %v2351 = vlaneseq
      %v2352 = vshrl.u32 %v2351, 7
      %v2353 = vsub.s32 %v2350, %v2352
      %v2354 = vrot.slane %v2326, %v2353
      %v2355 = vcombine.low %v2333, %v2340
      %v2356 = vcombine.low %v2347, %v2354
      %v2358 = vunpack.c.l.s4 1966171168
      %v2359 = vunpack.c.0.s8 %v2358
      %v2360 = vlaneseq
      %v2361 = vshrl.u32 %v2360, 7
      %v2362 = vsub.s32 %v2359, %v2361
      %v2363 = vrot.slane %v2355, %v2362
      %v2365 = vunpack.c.l.s4 1966171168
      %v2366 = vunpack.c.0.s8 %v2365
      %v2367 = vlaneseq
      %v2368 = vshrl.u32 %v2367, 7
      %v2369 = vsub.s32 %v2366, %v2368
      %v2370 = vrot.slane %v2356, %v2369
      %v2371 = vcombine.low %v2363, %v2370
      %v2372 = vcombine.low %v724, %v725
      %v2373 = vcombine.low %v740, %v747
      %v2374 = vcombine.low %v748, %v763
      %v2375 = vcombine.low %v770, %v771
      %v2377 = vunpack.c.l.s4 1966171168
      %v2378 = vunpack.c.0.s8 %v2377
      %v2379 = vlaneseq
      %v2380 = vshrl.u32 %v2379, 7
      %v2381 = vsub.s32 %v2378, %v2380
      %v2382 = vrot.slane %v2372, %v2381
      %v2384 = vunpack.c.l.s4 1966171168
      %v2385 = vunpack.c.0.s8 %v2384
      %v2386 = vlaneseq
      %v2387 = vshrl.u32 %v2386, 7
      %v2388 = vsub.s32 %v2385, %v2387
      %v2389 = vrot.slane %v2373, %v2388
      %v2391 = vunpack.c.l.s4 1966171168
      %v2392 = vunpack.c.0.s8 %v2391
      %v2393 = vlaneseq
      %v2394 = vshrl.u32 %v2393, 7
      %v2395 = vsub.s32 %v2392, %v2394
      %v2396 = vrot.slane %v2374, %v2395
      %v2398 = vunpack.c.l.s4 1966171168
      %v2399 = vunpack.c.0.s8 %v2398
      %v2400 = vlaneseq
      %v2401 = vshrl.u32 %v2400, 7
      %v2402 = vsub.s32 %v2399, %v2401
      %v2403 = vrot.slane %v2375, %v2402
      %v2404 = vcombine.low %v2382, %v2389
      %v2405 = vcombine.low %v2396, %v2403
      %v2407 = vunpack.c.l.s4 1966171168
      %v2408 = vunpack.c.0.s8 %v2407
      %v2409 = vlaneseq
      %v2410 = vshrl.u32 %v2409, 7
      %v2411 = vsub.s32 %v2408, %v2410
      %v2412 = vrot.slane %v2404, %v2411
      %v2414 = vunpack.c.l.s4 1966171168
      %v2415 = vunpack.c.0.s8 %v2414
      %v2416 = vlaneseq
      %v2417 = vshrl.u32 %v2416, 7
      %v2418 = vsub.s32 %v2415, %v2417
      %v2419 = vrot.slane %v2405, %v2418
      %v2420 = vcombine.low %v2412, %v2419
      %v2421 = vcombine.low %v772, %v787
      %v2422 = vcombine.low %v794, %v795
      %v2423 = vcombine.low %v810, %v817
      %v2424 = vcombine.low %v818, %v819
      %v2426 = vunpack.c.l.s4 1966171168
      %v2427 = vunpack.c.0.s8 %v2426
      %v2428 = vlaneseq
      %v2429 = vshrl.u32 %v2428, 7
      %v2430 = vsub.s32 %v2427, %v2429
      %v2431 = vrot.slane %v2421, %v2430
      %v2433 = vunpack.c.l.s4 1966171168
      %v2434 = vunpack.c.0.s8 %v2433
      %v2435 = vlaneseq
      %v2436 = vshrl.u32 %v2435, 7
      %v2437 = vsub.s32 %v2434, %v2436
      %v2438 = vrot.slane %v2422, %v2437
      %v2440 = vunpack.c.l.s4 1966171168
      %v2441 = vunpack.c.0.s8 %v2440
      %v2442 = vlaneseq
      %v2443 = vshrl.u32 %v2442, 7
      %v2444 = vsub.s32 %v2441, %v2443
      %v2445 = vrot.slane %v2423, %v2444
      %v2447 = vunpack.c.l.s4 1966171168
      %v2448 = vunpack.c.0.s8 %v2447
      %v2449 = vlaneseq
      %v2450 = vshrl.u32 %v2449, 7
      %v2451 = vsub.s32 %v2448, %v2450
      %v2452 = vrot.slane %v2424, %v2451
      %v2453 = vcombine.low %v2431, %v2438
      %v2454 = vcombine.low %v2445, %v2452
      %v2456 = vunpack.c.l.s4 1966171168
      %v2457 = vunpack.c.0.s8 %v2456
      %v2458 = vlaneseq
      %v2459 = vshrl.u32 %v2458, 7
      %v2460 = vsub.s32 %v2457, %v2459
      %v2461 = vrot.slane %v2453, %v2460
      %v2463 = vunpack.c.l.s4 1966171168
      %v2464 = vunpack.c.0.s8 %v2463
      %v2465 = vlaneseq
      %v2466 = vshrl.u32 %v2465, 7
      %v2467 = vsub.s32 %v2464, %v2466
      %v2468 = vrot.slane %v2454, %v2467
      %v2469 = vcombine.low %v2461, %v2468
      %v2470 = vcombine.low %v834, %v841
      %v2471 = vcombine.low %v842, %v857
      %v2472 = vcombine.low %v864, %v865
      %v2473 = vcombine.low %v866, %v881
      %v2475 = vunpack.c.l.s4 1966171168
      %v2476 = vunpack.c.0.s8 %v2475
      %v2477 = vlaneseq
      %v2478 = vshrl.u32 %v2477, 7
      %v2479 = vsub.s32 %v2476, %v2478
      %v2480 = vrot.slane %v2470, %v2479
      %v2482 = vunpack.c.l.s4 1966171168
      %v2483 = vunpack.c.0.s8 %v2482
      %v2484 = vlaneseq
      %v2485 = vshrl.u32 %v2484, 7
      %v2486 = vsub.s32 %v2483, %v2485
      %v2487 = vrot.slane %v2471, %v2486
      %v2489 = vunpack.c.l.s4 1966171168
      %v2490 = vunpack.c.0.s8 %v2489
      %v2491 = vlaneseq
      %v2492 = vshrl.u32 %v2491, 7
      %v2493 = vsub.s32 %v2490, %v2492
      %v2494 = vrot.slane %v2472, %v2493
      %v2496 = vunpack.c.l.s4 1966171168
      %v2497 = vunpack.c.0.s8 %v2496
      %v2498 = vlaneseq
      %v2499 = vshrl.u32 %v2498, 7
      %v2500 = vsub.s32 %v2497, %v2499
      %v2501 = vrot.slane %v2473, %v2500
      %v2502 = vcombine.low %v2480, %v2487
      %v2503 = vcombine.low %v2494, %v2501
      %v2505 = vunpack.c.l.s4 1966171168
      %v2506 = vunpack.c.0.s8 %v2505
      %v2507 = vlaneseq
      %v2508 = vshrl.u32 %v2507, 7
      %v2509 = vsub.s32 %v2506, %v2508
      %v2510 = vrot.slane %v2502, %v2509
      %v2512 = vunpack.c.l.s4 1966171168
      %v2513 = vunpack.c.0.s8 %v2512
      %v2514 = vlaneseq
      %v2515 = vshrl.u32 %v2514, 7
      %v2516 = vsub.s32 %v2513, %v2515
      %v2517 = vrot.slane %v2503, %v2516
      %v2518 = vcombine.low %v2510, %v2517
      %v2519 = vcombine.low %v888, %v889
      %v2521 = vunpack.c.l.s4 1966171168
      %v2522 = vunpack.c.0.s8 %v2521
      %v2523 = vlaneseq
      %v2524 = vshrl.u32 %v2523, 7
      %v2525 = vsub.s32 %v2522, %v2524
      %v2526 = vrot.slane %v2519, %v2525
      %v2528 = vunpack.c.l.s4 1966171168
      %v2529 = vunpack.c.0.s8 %v2528
      %v2530 = vlaneseq
      %v2531 = vshrl.u32 %v2530, 7
      %v2532 = vsub.s32 %v2529, %v2531
      %v2533 = vrot.slane %v2526, %v2532
      %v2534 = vcombine.low %v927, %v935
      %v2535 = vcombine.low %v943, %v951
      %v2536 = vcombine.low %v959, %v967
      %v2537 = vcombine.low %v975, %v984
      %v2539 = vunpack.c.l.s4 1966171168
      %v2540 = vunpack.c.0.s8 %v2539
      %v2541 = vlaneseq
      %v2542 = vshrl.u32 %v2541, 7
      %v2543 = vsub.s32 %v2540, %v2542
      %v2544 = vrot.slane %v2534, %v2543
      %v2546 = vunpack.c.l.s4 1966171168
      %v2547 = vunpack.c.0.s8 %v2546
      %v2548 = vlaneseq
      %v2549 = vshrl.u32 %v2548, 7
      %v2550 = vsub.s32 %v2547, %v2549
      %v2551 = vrot.slane %v2535, %v2550
      %v2553 = vunpack.c.l.s4 1966171168
      %v2554 = vunpack.c.0.s8 %v2553
      %v2555 = vlaneseq
      %v2556 = vshrl.u32 %v2555, 7
      %v2557 = vsub.s32 %v2554, %v2556
      %v2558 = vrot.slane %v2536, %v2557
      %v2560 = vunpack.c.l.s4 1966171168
      %v2561 = vunpack.c.0.s8 %v2560
      %v2562 = vlaneseq
      %v2563 = vshrl.u32 %v2562, 7
      %v2564 = vsub.s32 %v2561, %v2563
      %v2565 = vrot.slane %v2537, %v2564
      %v2566 = vcombine.low %v2544, %v2551
      %v2567 = vcombine.low %v2558, %v2565
      %v2569 = vunpack.c.l.s4 1966171168
      %v2570 = vunpack.c.0.s8 %v2569
      %v2571 = vlaneseq
      %v2572 = vshrl.u32 %v2571, 7
      %v2573 = vsub.s32 %v2570, %v2572
      %v2574 = vrot.slane %v2566, %v2573
      %v2576 = vunpack.c.l.s4 1966171168
      %v2577 = vunpack.c.0.s8 %v2576
      %v2578 = vlaneseq
      %v2579 = vshrl.u32 %v2578, 7
      %v2580 = vsub.s32 %v2577, %v2579
      %v2581 = vrot.slane %v2567, %v2580
      %v2582 = vcombine.low %v2574, %v2581
      %v2583 = vcombine.low %v992, %v1000
      %v2584 = vcombine.low %v1008, %v1016
      %v2585 = vcombine.low %v1024, %v1032
      %v2586 = vcombine.low %v1041, %v1049
      %v2588 = vunpack.c.l.s4 1966171168
      %v2589 = vunpack.c.0.s8 %v2588
      %v2590 = vlaneseq
      %v2591 = vshrl.u32 %v2590, 7
      %v2592 = vsub.s32 %v2589, %v2591
      %v2593 = vrot.slane %v2583, %v2592
      %v2595 = vunpack.c.l.s4 1966171168
      %v2596 = vunpack.c.0.s8 %v2595
      %v2597 = vlaneseq
      %v2598 = vshrl.u32 %v2597, 7
      %v2599 = vsub.s32 %v2596, %v2598
      %v2600 = vrot.slane %v2584, %v2599
      %v2602 = vunpack.c.l.s4 1966171168
      %v2603 = vunpack.c.0.s8 %v2602
      %v2604 = vlaneseq
      %v2605 = vshrl.u32 %v2604, 7
      %v2606 = vsub.s32 %v2603, %v2605
      %v2607 = vrot.slane %v2585, %v2606
      %v2609 = vunpack.c.l.s4 1966171168
      %v2610 = vunpack.c.0.s8 %v2609
      %v2611 = vlaneseq
      %v2612 = vshrl.u32 %v2611, 7
      %v2613 = vsub.s32 %v2610, %v2612
      %v2614 = vrot.slane %v2586, %v2613
      %v2615 = vcombine.low %v2593, %v2600
      %v2616 = vcombine.low %v2607, %v2614
      %v2618 = vunpack.c.l.s4 1966171168
      %v2619 = vunpack.c.0.s8 %v2618
      %v2620 = vlaneseq
      %v2621 = vshrl.u32 %v2620, 7
      %v2622 = vsub.s32 %v2619, %v2621
      %v2623 = vrot.slane %v2615, %v2622
      %v2625 = vunpack.c.l.s4 1966171168
      %v2626 = vunpack.c.0.s8 %v2625
      %v2627 = vlaneseq
      %v2628 = vshrl.u32 %v2627, 7
      %v2629 = vsub.s32 %v2626, %v2628
      %v2630 = vrot.slane %v2616, %v2629
      %v2631 = vcombine.low %v2623, %v2630
      %v2632 = vcombine.low %v1057, %v1065
      %v2633 = vcombine.low %v1073, %v1081
      %v2634 = vcombine.low %v1089, %v1098
      %v2635 = vcombine.low %v1106, %v1114
      %v2637 = vunpack.c.l.s4 1966171168
      %v2638 = vunpack.c.0.s8 %v2637
      %v2639 = vlaneseq
      %v2640 = vshrl.u32 %v2639, 7
      %v2641 = vsub.s32 %v2638, %v2640
      %v2642 = vrot.slane %v2632, %v2641
      %v2644 = vunpack.c.l.s4 1966171168
      %v2645 = vunpack.c.0.s8 %v2644
      %v2646 = vlaneseq
      %v2647 = vshrl.u32 %v2646, 7
      %v2648 = vsub.s32 %v2645, %v2647
      %v2649 = vrot.slane %v2633, %v2648
      %v2651 = vunpack.c.l.s4 1966171168
      %v2652 = vunpack.c.0.s8 %v2651
      %v2653 = vlaneseq
      %v2654 = vshrl.u32 %v2653, 7
      %v2655 = vsub.s32 %v2652, %v2654
      %v2656 = vrot.slane %v2634, %v2655
      %v2658 = vunpack.c.l.s4 1966171168
      %v2659 = vunpack.c.0.s8 %v2658
      %v2660 = vlaneseq
      %v2661 = vshrl.u32 %v2660, 7
      %v2662 = vsub.s32 %v2659, %v2661
      %v2663 = vrot.slane %v2635, %v2662
      %v2664 = vcombine.low %v2642, %v2649
      %v2665 = vcombine.low %v2656, %v2663
      %v2667 = vunpack.c.l.s4 1966171168
      %v2668 = vunpack.c.0.s8 %v2667
      %v2669 = vlaneseq
      %v2670 = vshrl.u32 %v2669, 7
      %v2671 = vsub.s32 %v2668, %v2670
      %v2672 = vrot.slane %v2664, %v2671
      %v2674 = vunpack.c.l.s4 1966171168
      %v2675 = vunpack.c.0.s8 %v2674
      %v2676 = vlaneseq
      %v2677 = vshrl.u32 %v2676, 7
      %v2678 = vsub.s32 %v2675, %v2677
      %v2679 = vrot.slane %v2665, %v2678
      %v2680 = vcombine.low %v2672, %v2679
      %v2681 = vcombine.low %v1122, %v1130
      %v2682 = vcombine.low %v1138, %v1146
      %v2683 = vcombine.low %v1155, %v1163
      %v2684 = vcombine.low %v1171, %v1179
      %v2686 = vunpack.c.l.s4 1966171168
      %v2687 = vunpack.c.0.s8 %v2686
      %v2688 = vlaneseq
      %v2689 = vshrl.u32 %v2688, 7
      %v2690 = vsub.s32 %v2687, %v2689
      %v2691 = vrot.slane %v2681, %v2690
      %v2693 = vunpack.c.l.s4 1966171168
      %v2694 = vunpack.c.0.s8 %v2693
      %v2695 = vlaneseq
      %v2696 = vshrl.u32 %v2695, 7
      %v2697 = vsub.s32 %v2694, %v2696
      %v2698 = vrot.slane %v2682, %v2697
      %v2700 = vunpack.c.l.s4 1966171168
      %v2701 = vunpack.c.0.s8 %v2700
      %v2702 = vlaneseq
      %v2703 = vshrl.u32 %v2702, 7
      %v2704 = vsub.s32 %v2701, %v2703
      %v2705 = vrot.slane %v2683, %v2704
      %v2707 = vunpack.c.l.s4 1966171168
      %v2708 = vunpack.c.0.s8 %v2707
      %v2709 = vlaneseq
      %v2710 = vshrl.u32 %v2709, 7
      %v2711 = vsub.s32 %v2708, %v2710
      %v2712 = vrot.slane %v2684, %v2711
      %v2713 = vcombine.low %v2691, %v2698
      %v2714 = vcombine.low %v2705, %v2712
      %v2716 = vunpack.c.l.s4 1966171168
      %v2717 = vunpack.c.0.s8 %v2716
      %v2718 = vlaneseq
      %v2719 = vshrl.u32 %v2718, 7
      %v2720 = vsub.s32 %v2717, %v2719
      %v2721 = vrot.slane %v2713, %v2720
      %v2723 = vunpack.c.l.s4 1966171168
      %v2724 = vunpack.c.0.s8 %v2723
      %v2725 = vlaneseq
      %v2726 = vshrl.u32 %v2725, 7
      %v2727 = vsub.s32 %v2724, %v2726
      %v2728 = vrot.slane %v2714, %v2727
      %v2729 = vcombine.low %v2721, %v2728
      %v2730 = vcombine.low %v1187, %v1195
      %v2731 = vcombine.low %v1203, %v1212
      %v2732 = vcombine.low %v1220, %v1228
      %v2733 = vcombine.low %v1236, %v1244
      %v2735 = vunpack.c.l.s4 1966171168
      %v2736 = vunpack.c.0.s8 %v2735
      %v2737 = vlaneseq
      %v2738 = vshrl.u32 %v2737, 7
      %v2739 = vsub.s32 %v2736, %v2738
      %v2740 = vrot.slane %v2730, %v2739
      %v2742 = vunpack.c.l.s4 1966171168
      %v2743 = vunpack.c.0.s8 %v2742
      %v2744 = vlaneseq
      %v2745 = vshrl.u32 %v2744, 7
      %v2746 = vsub.s32 %v2743, %v2745
      %v2747 = vrot.slane %v2731, %v2746
      %v2749 = vunpack.c.l.s4 1966171168
      %v2750 = vunpack.c.0.s8 %v2749
      %v2751 = vlaneseq
      %v2752 = vshrl.u32 %v2751, 7
      %v2753 = vsub.s32 %v2750, %v2752
      %v2754 = vrot.slane %v2732, %v2753
      %v2756 = vunpack.c.l.s4 1966171168
      %v2757 = vunpack.c.0.s8 %v2756
      %v2758 = vlaneseq
      %v2759 = vshrl.u32 %v2758, 7
      %v2760 = vsub.s32 %v2757, %v2759
      %v2761 = vrot.slane %v2733, %v2760
      %v2762 = vcombine.low %v2740, %v2747
      %v2763 = vcombine.low %v2754, %v2761
      %v2765 = vunpack.c.l.s4 1966171168
      %v2766 = vunpack.c.0.s8 %v2765
      %v2767 = vlaneseq
      %v2768 = vshrl.u32 %v2767, 7
      %v2769 = vsub.s32 %v2766, %v2768
      %v2770 = vrot.slane %v2762, %v2769
      %v2772 = vunpack.c.l.s4 1966171168
      %v2773 = vunpack.c.0.s8 %v2772
      %v2774 = vlaneseq
      %v2775 = vshrl.u32 %v2774, 7
      %v2776 = vsub.s32 %v2773, %v2775
      %v2777 = vrot.slane %v2763, %v2776
      %v2778 = vcombine.low %v2770, %v2777
      %v2779 = vcombine.low %v1252, %v1260
      %v2780 = vcombine.low %v1269, %v1277
      %v2781 = vcombine.low %v1285, %v1293
      %v2782 = vcombine.low %v1301, %v1309
      %v2784 = vunpack.c.l.s4 1966171168
      %v2785 = vunpack.c.0.s8 %v2784
      %v2786 = vlaneseq
      %v2787 = vshrl.u32 %v2786, 7
      %v2788 = vsub.s32 %v2785, %v2787
      %v2789 = vrot.slane %v2779, %v2788
      %v2791 = vunpack.c.l.s4 1966171168
      %v2792 = vunpack.c.0.s8 %v2791
      %v2793 = vlaneseq
      %v2794 = vshrl.u32 %v2793, 7
      %v2795 = vsub.s32 %v2792, %v2794
      %v2796 = vrot.slane %v2780, %v2795
      %v2798 = vunpack.c.l.s4 1966171168
      %v2799 = vunpack.c.0.s8 %v2798
      %v2800 = vlaneseq
      %v2801 = vshrl.u32 %v2800, 7
      %v2802 = vsub.s32 %v2799, %v2801
      %v2803 = vrot.slane %v2781, %v2802
      %v2805 = vunpack.c.l.s4 1966171168
      %v2806 = vunpack.c.0.s8 %v2805
      %v2807 = vlaneseq
      %v2808 = vshrl.u32 %v2807, 7
      %v2809 = vsub.s32 %v2806, %v2808
      %v2810 = vrot.slane %v2782, %v2809
      %v2811 = vcombine.low %v2789, %v2796
      %v2812 = vcombine.low %v2803, %v2810
      %v2814 = vunpack.c.l.s4 1966171168
      %v2815 = vunpack.c.0.s8 %v2814
      %v2816 = vlaneseq
      %v2817 = vshrl.u32 %v2816, 7
      %v2818 = vsub.s32 %v2815, %v2817
      %v2819 = vrot.slane %v2811, %v2818
      %v2821 = vunpack.c.l.s4 1966171168
      %v2822 = vunpack.c.0.s8 %v2821
      %v2823 = vlaneseq
      %v2824 = vshrl.u32 %v2823, 7
      %v2825 = vsub.s32 %v2822, %v2824
      %v2826 = vrot.slane %v2812, %v2825
      %v2827 = vcombine.low %v2819, %v2826
      %v2828 = vcombine.low %v1317, %v1326
      %v2829 = vcombine.low %v1334, %v1342
      %v2830 = vcombine.low %v1350, %v1358
      %v2831 = vcombine.low %v1366, %v1374
      %v2833 = vunpack.c.l.s4 1966171168
      %v2834 = vunpack.c.0.s8 %v2833
      %v2835 = vlaneseq
      %v2836 = vshrl.u32 %v2835, 7
      %v2837 = vsub.s32 %v2834, %v2836
      %v2838 = vrot.slane %v2828, %v2837
      %v2840 = vunpack.c.l.s4 1966171168
      %v2841 = vunpack.c.0.s8 %v2840
      %v2842 = vlaneseq
      %v2843 = vshrl.u32 %v2842, 7
      %v2844 = vsub.s32 %v2841, %v2843
      %v2845 = vrot.slane %v2829, %v2844
      %v2847 = vunpack.c.l.s4 1966171168
      %v2848 = vunpack.c.0.s8 %v2847
      %v2849 = vlaneseq
      %v2850 = vshrl.u32 %v2849, 7
      %v2851 = vsub.s32 %v2848, %v2850
      %v2852 = vrot.slane %v2830, %v2851
      %v2854 = vunpack.c.l.s4 1966171168
      %v2855 = vunpack.c.0.s8 %v2854
      %v2856 = vlaneseq
      %v2857 = vshrl.u32 %v2856, 7
      %v2858 = vsub.s32 %v2855, %v2857
      %v2859 = vrot.slane %v2831, %v2858
      %v2860 = vcombine.low %v2838, %v2845
      %v2861 = vcombine.low %v2852, %v2859
      %v2863 = vunpack.c.l.s4 1966171168
      %v2864 = vunpack.c.0.s8 %v2863
      %v2865 = vlaneseq
      %v2866 = vshrl.u32 %v2865, 7
      %v2867 = vsub.s32 %v2864, %v2866
      %v2868 = vrot.slane %v2860, %v2867
      %v2870 = vunpack.c.l.s4 1966171168
      %v2871 = vunpack.c.0.s8 %v2870
      %v2872 = vlaneseq
      %v2873 = vshrl.u32 %v2872, 7
      %v2874 = vsub.s32 %v2871, %v2873
      %v2875 = vrot.slane %v2861, %v2874
      %v2876 = vcombine.low %v2868, %v2875
      %v2877 = vcombine.low %v1383, %v1391
      %v2878 = vcombine.low %v1399, %v1407
      %v2879 = vcombine.low %v1415, %v1423
      %v2880 = vcombine.low %v1431, %v1440
      %v2882 = vunpack.c.l.s4 1966171168
      %v2883 = vunpack.c.0.s8 %v2882
      %v2884 = vlaneseq
      %v2885 = vshrl.u32 %v2884, 7
      %v2886 = vsub.s32 %v2883, %v2885
      %v2887 = vrot.slane %v2877, %v2886
      %v2889 = vunpack.c.l.s4 1966171168
      %v2890 = vunpack.c.0.s8 %v2889
      %v2891 = vlaneseq
      %v2892 = vshrl.u32 %v2891, 7
      %v2893 = vsub.s32 %v2890, %v2892
      %v2894 = vrot.slane %v2878, %v2893
      %v2896 = vunpack.c.l.s4 1966171168
      %v2897 = vunpack.c.0.s8 %v2896
      %v2898 = vlaneseq
      %v2899 = vshrl.u32 %v2898, 7
      %v2900 = vsub.s32 %v2897, %v2899
      %v2901 = vrot.slane %v2879, %v2900
      %v2903 = vunpack.c.l.s4 1966171168
      %v2904 = vunpack.c.0.s8 %v2903
      %v2905 = vlaneseq
      %v2906 = vshrl.u32 %v2905, 7
      %v2907 = vsub.s32 %v2904, %v2906
      %v2908 = vrot.slane %v2880, %v2907
      %v2909 = vcombine.low %v2887, %v2894
      %v2910 = vcombine.low %v2901, %v2908
      %v2912 = vunpack.c.l.s4 1966171168
      %v2913 = vunpack.c.0.s8 %v2912
      %v2914 = vlaneseq
      %v2915 = vshrl.u32 %v2914, 7
      %v2916 = vsub.s32 %v2913, %v2915
      %v2917 = vrot.slane %v2909, %v2916
      %v2919 = vunpack.c.l.s4 1966171168
      %v2920 = vunpack.c.0.s8 %v2919
      %v2921 = vlaneseq
      %v2922 = vshrl.u32 %v2921, 7
      %v2923 = vsub.s32 %v2920, %v2922
      %v2924 = vrot.slane %v2910, %v2923
      %v2925 = vcombine.low %v2917, %v2924
      %v2926 = vcombine.low %v1448, %v1456
      %v2927 = vcombine.low %v1464, %v1472
      %v2928 = vcombine.low %v1480, %v1488
      %v2929 = vcombine.low %v1497, %v1505
      %v2931 = vunpack.c.l.s4 1966171168
      %v2932 = vunpack.c.0.s8 %v2931
      %v2933 = vlaneseq
      %v2934 = vshrl.u32 %v2933, 7
      %v2935 = vsub.s32 %v2932, %v2934
      %v2936 = vrot.slane %v2926, %v2935
      %v2938 = vunpack.c.l.s4 1966171168
      %v2939 = vunpack.c.0.s8 %v2938
      %v2940 = vlaneseq
      %v2941 = vshrl.u32 %v2940, 7
      %v2942 = vsub.s32 %v2939, %v2941
      %v2943 = vrot.slane %v2927, %v2942
      %v2945 = vunpack.c.l.s4 1966171168
      %v2946 = vunpack.c.0.s8 %v2945
      %v2947 = vlaneseq
      %v2948 = vshrl.u32 %v2947, 7
      %v2949 = vsub.s32 %v2946, %v2948
      %v2950 = vrot.slane %v2928, %v2949
      %v2952 = vunpack.c.l.s4 1966171168
      %v2953 = vunpack.c.0.s8 %v2952
      %v2954 = vlaneseq
      %v2955 = vshrl.u32 %v2954, 7
      %v2956 = vsub.s32 %v2953, %v2955
      %v2957 = vrot.slane %v2929, %v2956
      %v2958 = vcombine.low %v2936, %v2943
      %v2959 = vcombine.low %v2950, %v2957
      %v2961 = vunpack.c.l.s4 1966171168
      %v2962 = vunpack.c.0.s8 %v2961
      %v2963 = vlaneseq
      %v2964 = vshrl.u32 %v2963, 7
      %v2965 = vsub.s32 %v2962, %v2964
      %v2966 = vrot.slane %v2958, %v2965
      %v2968 = vunpack.c.l.s4 1966171168
      %v2969 = vunpack.c.0.s8 %v2968
      %v2970 = vlaneseq
      %v2971 = vshrl.u32 %v2970, 7
      %v2972 = vsub.s32 %v2969, %v2971
      %v2973 = vrot.slane %v2959, %v2972
      %v2974 = vcombine.low %v2966, %v2973
      %v2975 = vcombine.low %v1513, %v1521
      %v2976 = vcombine.low %v1529, %v1537
      %v2977 = vcombine.low %v1545, %v1554
      %v2978 = vcombine.low %v1562, %v1570
      %v2980 = vunpack.c.l.s4 1966171168
      %v2981 = vunpack.c.0.s8 %v2980
      %v2982 = vlaneseq
      %v2983 = vshrl.u32 %v2982, 7
      %v2984 = vsub.s32 %v2981, %v2983
      %v2985 = vrot.slane %v2975, %v2984
      %v2987 = vunpack.c.l.s4 1966171168
      %v2988 = vunpack.c.0.s8 %v2987
      %v2989 = vlaneseq
      %v2990 = vshrl.u32 %v2989, 7
      %v2991 = vsub.s32 %v2988, %v2990
      %v2992 = vrot.slane %v2976, %v2991
      %v2994 = vunpack.c.l.s4 1966171168
      %v2995 = vunpack.c.0.s8 %v2994
      %v2996 = vlaneseq
      %v2997 = vshrl.u32 %v2996, 7
      %v2998 = vsub.s32 %v2995, %v2997
      %v2999 = vrot.slane %v2977, %v2998
      %v3001 = vunpack.c.l.s4 1966171168
      %v3002 = vunpack.c.0.s8 %v3001
      %v3003 = vlaneseq
      %v3004 = vshrl.u32 %v3003, 7
      %v3005 = vsub.s32 %v3002, %v3004
      %v3006 = vrot.slane %v2978, %v3005
      %v3007 = vcombine.low %v2985, %v2992
      %v3008 = vcombine.low %v2999, %v3006
      %v3010 = vunpack.c.l.s4 1966171168
      %v3011 = vunpack.c.0.s8 %v3010
      %v3012 = vlaneseq
      %v3013 = vshrl.u32 %v3012, 7
      %v3014 = vsub.s32 %v3011, %v3013
      %v3015 = vrot.slane %v3007, %v3014
      %v3017 = vunpack.c.l.s4 1966171168
      %v3018 = vunpack.c.0.s8 %v3017
      %v3019 = vlaneseq
      %v3020 = vshrl.u32 %v3019, 7
      %v3021 = vsub.s32 %v3018, %v3020
      %v3022 = vrot.slane %v3008, %v3021
      %v3023 = vcombine.low %v3015, %v3022
      %v3024 = vcombine.low %v1578, %v1586
      %v3025 = vcombine.low %v1594, %v1602
      %v3026 = vcombine.low %v1611, %v1619
      %v3027 = vcombine.low %v1627, %v1635
      %v3029 = vunpack.c.l.s4 1966171168
      %v3030 = vunpack.c.0.s8 %v3029
      %v3031 = vlaneseq
      %v3032 = vshrl.u32 %v3031, 7
      %v3033 = vsub.s32 %v3030, %v3032
      %v3034 = vrot.slane %v3024, %v3033
      %v3036 = vunpack.c.l.s4 1966171168
      %v3037 = vunpack.c.0.s8 %v3036
      %v3038 = vlaneseq
      %v3039 = vshrl.u32 %v3038, 7
      %v3040 = vsub.s32 %v3037, %v3039
      %v3041 = vrot.slane %v3025, %v3040
      %v3043 = vunpack.c.l.s4 1966171168
      %v3044 = vunpack.c.0.s8 %v3043
      %v3045 = vlaneseq
      %v3046 = vshrl.u32 %v3045, 7
      %v3047 = vsub.s32 %v3044, %v3046
      %v3048 = vrot.slane %v3026, %v3047
      %v3050 = vunpack.c.l.s4 1966171168
      %v3051 = vunpack.c.0.s8 %v3050
      %v3052 = vlaneseq
      %v3053 = vshrl.u32 %v3052, 7
      %v3054 = vsub.s32 %v3051, %v3053
      %v3055 = vrot.slane %v3027, %v3054
      %v3056 = vcombine.low %v3034, %v3041
      %v3057 = vcombine.low %v3048, %v3055
      %v3059 = vunpack.c.l.s4 1966171168
      %v3060 = vunpack.c.0.s8 %v3059
      %v3061 = vlaneseq
      %v3062 = vshrl.u32 %v3061, 7
      %v3063 = vsub.s32 %v3060, %v3062
      %v3064 = vrot.slane %v3056, %v3063
      %v3066 = vunpack.c.l.s4 1966171168
      %v3067 = vunpack.c.0.s8 %v3066
      %v3068 = vlaneseq
      %v3069 = vshrl.u32 %v3068, 7
      %v3070 = vsub.s32 %v3067, %v3069
      %v3071 = vrot.slane %v3057, %v3070
      %v3072 = vcombine.low %v3064, %v3071
      %v3073 = vcombine.low %v1643, %v1651
      %v3074 = vcombine.low %v1659, %v1668
      %v3075 = vcombine.low %v1676, %v1684
      %v3076 = vcombine.low %v1692, %v1700
      %v3078 = vunpack.c.l.s4 1966171168
      %v3079 = vunpack.c.0.s8 %v3078
      %v3080 = vlaneseq
      %v3081 = vshrl.u32 %v3080, 7
      %v3082 = vsub.s32 %v3079, %v3081
      %v3083 = vrot.slane %v3073, %v3082
      %v3085 = vunpack.c.l.s4 1966171168
      %v3086 = vunpack.c.0.s8 %v3085
      %v3087 = vlaneseq
      %v3088 = vshrl.u32 %v3087, 7
      %v3089 = vsub.s32 %v3086, %v3088
      %v3090 = vrot.slane %v3074, %v3089
      %v3092 = vunpack.c.l.s4 1966171168
      %v3093 = vunpack.c.0.s8 %v3092
      %v3094 = vlaneseq
      %v3095 = vshrl.u32 %v3094, 7
      %v3096 = vsub.s32 %v3093, %v3095
      %v3097 = vrot.slane %v3075, %v3096
      %v3099 = vunpack.c.l.s4 1966171168
      %v3100 = vunpack.c.0.s8 %v3099
      %v3101 = vlaneseq
      %v3102 = vshrl.u32 %v3101, 7
      %v3103 = vsub.s32 %v3100, %v3102
      %v3104 = vrot.slane %v3076, %v3103
      %v3105 = vcombine.low %v3083, %v3090
      %v3106 = vcombine.low %v3097, %v3104
      %v3108 = vunpack.c.l.s4 1966171168
      %v3109 = vunpack.c.0.s8 %v3108
      %v3110 = vlaneseq
      %v3111 = vshrl.u32 %v3110, 7
      %v3112 = vsub.s32 %v3109, %v3111
      %v3113 = vrot.slane %v3105, %v3112
      %v3115 = vunpack.c.l.s4 1966171168
      %v3116 = vunpack.c.0.s8 %v3115
      %v3117 = vlaneseq
      %v3118 = vshrl.u32 %v3117, 7
      %v3119 = vsub.s32 %v3116, %v3118
      %v3120 = vrot.slane %v3106, %v3119
      %v3121 = vcombine.low %v3113, %v3120
      %v3122 = vcombine.low %v1708, %v1716
      %v3124 = vunpack.c.l.s4 1966171168
      %v3125 = vunpack.c.0.s8 %v3124
      %v3126 = vlaneseq
      %v3127 = vshrl.u32 %v3126, 7
      %v3128 = vsub.s32 %v3125, %v3127
      %v3129 = vrot.slane %v3122, %v3128
      %v3131 = vunpack.c.l.s4 1966171168
      %v3132 = vunpack.c.0.s8 %v3131
      %v3133 = vlaneseq
      %v3134 = vshrl.u32 %v3133, 7
      %v3135 = vsub.s32 %v3132, %v3134
      %v3136 = vrot.slane %v3129, %v3135
      %3137 = vrot.lane.b32.xlu0 %v2582, 4
      %v3138 = vpop.permute.xlu0 %3137
      %3139 = vrot.lane.b32.xlu0 %v2631, 4
      %v3140 = vpop.permute.xlu0 %3139
      %3141 = vrot.lane.b32.xlu0 %v2680, 4
      %v3142 = vpop.permute.xlu0 %3141
      %3143 = vrot.lane.b32.xlu0 %v2729, 4
      %v3144 = vpop.permute.xlu0 %3143
      %3145 = vrot.lane.b32.xlu0 %v2778, 4
      %v3146 = vpop.permute.xlu0 %3145
      %3147 = vrot.lane.b32.xlu0 %v2827, 4
      %v3148 = vpop.permute.xlu0 %3147
      %3149 = vrot.lane.b32.xlu0 %v2876, 4
      %v3150 = vpop.permute.xlu0 %3149
      %3151 = vrot.lane.b32.xlu0 %v2925, 4
      %v3152 = vpop.permute.xlu0 %3151
      %3153 = vrot.lane.b32.xlu0 %v2974, 4
      %v3154 = vpop.permute.xlu0 %3153
      %3155 = vrot.lane.b32.xlu0 %v3023, 4
      %v3156 = vpop.permute.xlu0 %3155
      %3157 = vrot.lane.b32.xlu0 %v3072, 4
      %v3158 = vpop.permute.xlu0 %3157
      %3159 = vrot.lane.b32.xlu0 %v3121, 4
      %v3160 = vpop.permute.xlu0 %3159
      %3161 = vrot.lane.b32.xlu0 %v3136, 4
      %v3162 = vpop.permute.xlu0 %3161
      %v3163 = vcombine.low %v253, %v254
      %v3164 = vcombine.low %v255, %v270
      %v3165 = vcombine.low %v277, %v278
      %v3166 = vcombine.low %v890, %v300
      %v3168 = vunpack.c.l.s4 1966171168
      %v3169 = vunpack.c.0.s8 %v3168
      %v3170 = vlaneseq
      %v3171 = vshrl.u32 %v3170, 7
      %v3172 = vsub.s32 %v3169, %v3171
      %v3173 = vrot.slane %v3163, %v3172
      %v3175 = vunpack.c.l.s4 1966171168
      %v3176 = vunpack.c.0.s8 %v3175
      %v3177 = vlaneseq
      %v3178 = vshrl.u32 %v3177, 7
      %v3179 = vsub.s32 %v3176, %v3178
      %v3180 = vrot.slane %v3164, %v3179
      %v3182 = vunpack.c.l.s4 1966171168
      %v3183 = vunpack.c.0.s8 %v3182
      %v3184 = vlaneseq
      %v3185 = vshrl.u32 %v3184, 7
      %v3186 = vsub.s32 %v3183, %v3185
      %v3187 = vrot.slane %v3165, %v3186
      %v3189 = vunpack.c.l.s4 1966171168
      %v3190 = vunpack.c.0.s8 %v3189
      %v3191 = vlaneseq
      %v3192 = vshrl.u32 %v3191, 7
      %v3193 = vsub.s32 %v3190, %v3192
      %v3194 = vrot.slane %v3166, %v3193
      %v3195 = vcombine.low %v3173, %v3180
      %v3196 = vcombine.low %v3187, %v3194
      %v3198 = vunpack.c.l.s4 1966171168
      %v3199 = vunpack.c.0.s8 %v3198
      %v3200 = vlaneseq
      %v3201 = vshrl.u32 %v3200, 7
      %v3202 = vsub.s32 %v3199, %v3201
      %v3203 = vrot.slane %v3195, %v3202
      %v3205 = vunpack.c.l.s4 1966171168
      %v3206 = vunpack.c.0.s8 %v3205
      %v3207 = vlaneseq
      %v3208 = vshrl.u32 %v3207, 7
      %v3209 = vsub.s32 %v3206, %v3208
      %v3210 = vrot.slane %v3196, %v3209
      %v3211 = vcombine.low %v3203, %v3210
      %v3212 = vcombine.low %v301, %v302
      %v3213 = vcombine.low %v317, %v324
      %v3214 = vcombine.low %v325, %v891
      %v3215 = vcombine.low %v347, %v348
      %v3217 = vunpack.c.l.s4 1966171168
      %v3218 = vunpack.c.0.s8 %v3217
      %v3219 = vlaneseq
      %v3220 = vshrl.u32 %v3219, 7
      %v3221 = vsub.s32 %v3218, %v3220
      %v3222 = vrot.slane %v3212, %v3221
      %v3224 = vunpack.c.l.s4 1966171168
      %v3225 = vunpack.c.0.s8 %v3224
      %v3226 = vlaneseq
      %v3227 = vshrl.u32 %v3226, 7
      %v3228 = vsub.s32 %v3225, %v3227
      %v3229 = vrot.slane %v3213, %v3228
      %v3231 = vunpack.c.l.s4 1966171168
      %v3232 = vunpack.c.0.s8 %v3231
      %v3233 = vlaneseq
      %v3234 = vshrl.u32 %v3233, 7
      %v3235 = vsub.s32 %v3232, %v3234
      %v3236 = vrot.slane %v3214, %v3235
      %v3238 = vunpack.c.l.s4 1966171168
      %v3239 = vunpack.c.0.s8 %v3238
      %v3240 = vlaneseq
      %v3241 = vshrl.u32 %v3240, 7
      %v3242 = vsub.s32 %v3239, %v3241
      %v3243 = vrot.slane %v3215, %v3242
      %v3244 = vcombine.low %v3222, %v3229
      %v3245 = vcombine.low %v3236, %v3243
      %v3247 = vunpack.c.l.s4 1966171168
      %v3248 = vunpack.c.0.s8 %v3247
      %v3249 = vlaneseq
      %v3250 = vshrl.u32 %v3249, 7
      %v3251 = vsub.s32 %v3248, %v3250
      %v3252 = vrot.slane %v3244, %v3251
      %v3254 = vunpack.c.l.s4 1966171168
      %v3255 = vunpack.c.0.s8 %v3254
      %v3256 = vlaneseq
      %v3257 = vshrl.u32 %v3256, 7
      %v3258 = vsub.s32 %v3255, %v3257
      %v3259 = vrot.slane %v3245, %v3258
      %v3260 = vcombine.low %v3252, %v3259
      %v3261 = vcombine.low %v349, %v364
      %v3262 = vcombine.low %v371, %v372
      %v3263 = vcombine.low %v892, %v394
      %v3264 = vcombine.low %v395, %v396
      %v3266 = vunpack.c.l.s4 1966171168
      %v3267 = vunpack.c.0.s8 %v3266
      %v3268 = vlaneseq
      %v3269 = vshrl.u32 %v3268, 7
      %v3270 = vsub.s32 %v3267, %v3269
      %v3271 = vrot.slane %v3261, %v3270
      %v3273 = vunpack.c.l.s4 1966171168
      %v3274 = vunpack.c.0.s8 %v3273
      %v3275 = vlaneseq
      %v3276 = vshrl.u32 %v3275, 7
      %v3277 = vsub.s32 %v3274, %v3276
      %v3278 = vrot.slane %v3262, %v3277
      %v3280 = vunpack.c.l.s4 1966171168
      %v3281 = vunpack.c.0.s8 %v3280
      %v3282 = vlaneseq
      %v3283 = vshrl.u32 %v3282, 7
      %v3284 = vsub.s32 %v3281, %v3283
      %v3285 = vrot.slane %v3263, %v3284
      %v3287 = vunpack.c.l.s4 1966171168
      %v3288 = vunpack.c.0.s8 %v3287
      %v3289 = vlaneseq
      %v3290 = vshrl.u32 %v3289, 7
      %v3291 = vsub.s32 %v3288, %v3290
      %v3292 = vrot.slane %v3264, %v3291
      %v3293 = vcombine.low %v3271, %v3278
      %v3294 = vcombine.low %v3285, %v3292
      %v3296 = vunpack.c.l.s4 1966171168
      %v3297 = vunpack.c.0.s8 %v3296
      %v3298 = vlaneseq
      %v3299 = vshrl.u32 %v3298, 7
      %v3300 = vsub.s32 %v3297, %v3299
      %v3301 = vrot.slane %v3293, %v3300
      %v3303 = vunpack.c.l.s4 1966171168
      %v3304 = vunpack.c.0.s8 %v3303
      %v3305 = vlaneseq
      %v3306 = vshrl.u32 %v3305, 7
      %v3307 = vsub.s32 %v3304, %v3306
      %v3308 = vrot.slane %v3294, %v3307
      %v3309 = vcombine.low %v3301, %v3308
      %v3310 = vcombine.low %v411, %v418
      %v3311 = vcombine.low %v419, %v893
      %v3312 = vcombine.low %v441, %v442
      %v3313 = vcombine.low %v443, %v458
      %v3315 = vunpack.c.l.s4 1966171168
      %v3316 = vunpack.c.0.s8 %v3315
      %v3317 = vlaneseq
      %v3318 = vshrl.u32 %v3317, 7
      %v3319 = vsub.s32 %v3316, %v3318
      %v3320 = vrot.slane %v3310, %v3319
      %v3322 = vunpack.c.l.s4 1966171168
      %v3323 = vunpack.c.0.s8 %v3322
      %v3324 = vlaneseq
      %v3325 = vshrl.u32 %v3324, 7
      %v3326 = vsub.s32 %v3323, %v3325
      %v3327 = vrot.slane %v3311, %v3326
      %v3329 = vunpack.c.l.s4 1966171168
      %v3330 = vunpack.c.0.s8 %v3329
      %v3331 = vlaneseq
      %v3332 = vshrl.u32 %v3331, 7
      %v3333 = vsub.s32 %v3330, %v3332
      %v3334 = vrot.slane %v3312, %v3333
      %v3336 = vunpack.c.l.s4 1966171168
      %v3337 = vunpack.c.0.s8 %v3336
      %v3338 = vlaneseq
      %v3339 = vshrl.u32 %v3338, 7
      %v3340 = vsub.s32 %v3337, %v3339
      %v3341 = vrot.slane %v3313, %v3340
      %v3342 = vcombine.low %v3320, %v3327
      %v3343 = vcombine.low %v3334, %v3341
      %v3345 = vunpack.c.l.s4 1966171168
      %v3346 = vunpack.c.0.s8 %v3345
      %v3347 = vlaneseq
      %v3348 = vshrl.u32 %v3347, 7
      %v3349 = vsub.s32 %v3346, %v3348
      %v3350 = vrot.slane %v3342, %v3349
      %v3352 = vunpack.c.l.s4 1966171168
      %v3353 = vunpack.c.0.s8 %v3352
      %v3354 = vlaneseq
      %v3355 = vshrl.u32 %v3354, 7
      %v3356 = vsub.s32 %v3353, %v3355
      %v3357 = vrot.slane %v3343, %v3356
      %v3358 = vcombine.low %v3350, %v3357
      %v3359 = vcombine.low %v465, %v466
      %v3360 = vcombine.low %v894, %v488
      %v3361 = vcombine.low %v489, %v490
      %v3362 = vcombine.low %v505, %v512
      %v3364 = vunpack.c.l.s4 1966171168
      %v3365 = vunpack.c.0.s8 %v3364
      %v3366 = vlaneseq
      %v3367 = vshrl.u32 %v3366, 7
      %v3368 = vsub.s32 %v3365, %v3367
      %v3369 = vrot.slane %v3359, %v3368
      %v3371 = vunpack.c.l.s4 1966171168
      %v3372 = vunpack.c.0.s8 %v3371
      %v3373 = vlaneseq
      %v3374 = vshrl.u32 %v3373, 7
      %v3375 = vsub.s32 %v3372, %v3374
      %v3376 = vrot.slane %v3360, %v3375
      %v3378 = vunpack.c.l.s4 1966171168
      %v3379 = vunpack.c.0.s8 %v3378
      %v3380 = vlaneseq
      %v3381 = vshrl.u32 %v3380, 7
      %v3382 = vsub.s32 %v3379, %v3381
      %v3383 = vrot.slane %v3361, %v3382
      %v3385 = vunpack.c.l.s4 1966171168
      %v3386 = vunpack.c.0.s8 %v3385
      %v3387 = vlaneseq
      %v3388 = vshrl.u32 %v3387, 7
      %v3389 = vsub.s32 %v3386, %v3388
      %v3390 = vrot.slane %v3362, %v3389
      %v3391 = vcombine.low %v3369, %v3376
      %v3392 = vcombine.low %v3383, %v3390
      %v3394 = vunpack.c.l.s4 1966171168
      %v3395 = vunpack.c.0.s8 %v3394
      %v3396 = vlaneseq
      %v3397 = vshrl.u32 %v3396, 7
      %v3398 = vsub.s32 %v3395, %v3397
      %v3399 = vrot.slane %v3391, %v3398
      %v3401 = vunpack.c.l.s4 1966171168
      %v3402 = vunpack.c.0.s8 %v3401
      %v3403 = vlaneseq
      %v3404 = vshrl.u32 %v3403, 7
      %v3405 = vsub.s32 %v3402, %v3404
      %v3406 = vrot.slane %v3392, %v3405
      %v3407 = vcombine.low %v3399, %v3406
      %v3408 = vcombine.low %v513, %v895
      %v3409 = vcombine.low %v535, %v536
      %v3410 = vcombine.low %v537, %v552
      %v3411 = vcombine.low %v559, %v560
      %v3413 = vunpack.c.l.s4 1966171168
      %v3414 = vunpack.c.0.s8 %v3413
      %v3415 = vlaneseq
      %v3416 = vshrl.u32 %v3415, 7
      %v3417 = vsub.s32 %v3414, %v3416
      %v3418 = vrot.slane %v3408, %v3417
      %v3420 = vunpack.c.l.s4 1966171168
      %v3421 = vunpack.c.0.s8 %v3420
      %v3422 = vlaneseq
      %v3423 = vshrl.u32 %v3422, 7
      %v3424 = vsub.s32 %v3421, %v3423
      %v3425 = vrot.slane %v3409, %v3424
      %v3427 = vunpack.c.l.s4 1966171168
      %v3428 = vunpack.c.0.s8 %v3427
      %v3429 = vlaneseq
      %v3430 = vshrl.u32 %v3429, 7
      %v3431 = vsub.s32 %v3428, %v3430
      %v3432 = vrot.slane %v3410, %v3431
      %v3434 = vunpack.c.l.s4 1966171168
      %v3435 = vunpack.c.0.s8 %v3434
      %v3436 = vlaneseq
      %v3437 = vshrl.u32 %v3436, 7
      %v3438 = vsub.s32 %v3435, %v3437
      %v3439 = vrot.slane %v3411, %v3438
      %v3440 = vcombine.low %v3418, %v3425
      %v3441 = vcombine.low %v3432, %v3439
      %v3443 = vunpack.c.l.s4 1966171168
      %v3444 = vunpack.c.0.s8 %v3443
      %v3445 = vlaneseq
      %v3446 = vshrl.u32 %v3445, 7
      %v3447 = vsub.s32 %v3444, %v3446
      %v3448 = vrot.slane %v3440, %v3447
      %v3450 = vunpack.c.l.s4 1966171168
      %v3451 = vunpack.c.0.s8 %v3450
      %v3452 = vlaneseq
      %v3453 = vshrl.u32 %v3452, 7
      %v3454 = vsub.s32 %v3451, %v3453
      %v3455 = vrot.slane %v3441, %v3454
      %v3456 = vcombine.low %v3448, %v3455
      %v3457 = vcombine.low %v896, %v582
      %v3458 = vcombine.low %v583, %v584
      %v3459 = vcombine.low %v599, %v606
      %v3460 = vcombine.low %v607, %v897
      %v3462 = vunpack.c.l.s4 1966171168
      %v3463 = vunpack.c.0.s8 %v3462
      %v3464 = vlaneseq
      %v3465 = vshrl.u32 %v3464, 7
      %v3466 = vsub.s32 %v3463, %v3465
      %v3467 = vrot.slane %v3457, %v3466
      %v3469 = vunpack.c.l.s4 1966171168
      %v3470 = vunpack.c.0.s8 %v3469
      %v3471 = vlaneseq
      %v3472 = vshrl.u32 %v3471, 7
      %v3473 = vsub.s32 %v3470, %v3472
      %v3474 = vrot.slane %v3458, %v3473
      %v3476 = vunpack.c.l.s4 1966171168
      %v3477 = vunpack.c.0.s8 %v3476
      %v3478 = vlaneseq
      %v3479 = vshrl.u32 %v3478, 7
      %v3480 = vsub.s32 %v3477, %v3479
      %v3481 = vrot.slane %v3459, %v3480
      %v3483 = vunpack.c.l.s4 1966171168
      %v3484 = vunpack.c.0.s8 %v3483
      %v3485 = vlaneseq
      %v3486 = vshrl.u32 %v3485, 7
      %v3487 = vsub.s32 %v3484, %v3486
      %v3488 = vrot.slane %v3460, %v3487
      %v3489 = vcombine.low %v3467, %v3474
      %v3490 = vcombine.low %v3481, %v3488
      %v3492 = vunpack.c.l.s4 1966171168
      %v3493 = vunpack.c.0.s8 %v3492
      %v3494 = vlaneseq
      %v3495 = vshrl.u32 %v3494, 7
      %v3496 = vsub.s32 %v3493, %v3495
      %v3497 = vrot.slane %v3489, %v3496
      %v3499 = vunpack.c.l.s4 1966171168
      %v3500 = vunpack.c.0.s8 %v3499
      %v3501 = vlaneseq
      %v3502 = vshrl.u32 %v3501, 7
      %v3503 = vsub.s32 %v3500, %v3502
      %v3504 = vrot.slane %v3490, %v3503
      %v3505 = vcombine.low %v3497, %v3504
      %v3506 = vcombine.low %v629, %v630
      %v3507 = vcombine.low %v631, %v646
      %v3508 = vcombine.low %v653, %v654
      %v3509 = vcombine.low %v898, %v676
      %v3511 = vunpack.c.l.s4 1966171168
      %v3512 = vunpack.c.0.s8 %v3511
      %v3513 = vlaneseq
      %v3514 = vshrl.u32 %v3513, 7
      %v3515 = vsub.s32 %v3512, %v3514
      %v3516 = vrot.slane %v3506, %v3515
      %v3518 = vunpack.c.l.s4 1966171168
      %v3519 = vunpack.c.0.s8 %v3518
      %v3520 = vlaneseq
      %v3521 = vshrl.u32 %v3520, 7
      %v3522 = vsub.s32 %v3519, %v3521
      %v3523 = vrot.slane %v3507, %v3522
      %v3525 = vunpack.c.l.s4 1966171168
      %v3526 = vunpack.c.0.s8 %v3525
      %v3527 = vlaneseq
      %v3528 = vshrl.u32 %v3527, 7
      %v3529 = vsub.s32 %v3526, %v3528
      %v3530 = vrot.slane %v3508, %v3529
      %v3532 = vunpack.c.l.s4 1966171168
      %v3533 = vunpack.c.0.s8 %v3532
      %v3534 = vlaneseq
      %v3535 = vshrl.u32 %v3534, 7
      %v3536 = vsub.s32 %v3533, %v3535
      %v3537 = vrot.slane %v3509, %v3536
      %v3538 = vcombine.low %v3516, %v3523
      %v3539 = vcombine.low %v3530, %v3537
      %v3541 = vunpack.c.l.s4 1966171168
      %v3542 = vunpack.c.0.s8 %v3541
      %v3543 = vlaneseq
      %v3544 = vshrl.u32 %v3543, 7
      %v3545 = vsub.s32 %v3542, %v3544
      %v3546 = vrot.slane %v3538, %v3545
      %v3548 = vunpack.c.l.s4 1966171168
      %v3549 = vunpack.c.0.s8 %v3548
      %v3550 = vlaneseq
      %v3551 = vshrl.u32 %v3550, 7
      %v3552 = vsub.s32 %v3549, %v3551
      %v3553 = vrot.slane %v3539, %v3552
      %v3554 = vcombine.low %v3546, %v3553
      %v3555 = vcombine.low %v677, %v678
      %v3556 = vcombine.low %v693, %v700
      %v3557 = vcombine.low %v701, %v899
      %v3558 = vcombine.low %v723, %v724
      %v3560 = vunpack.c.l.s4 1966171168
      %v3561 = vunpack.c.0.s8 %v3560
      %v3562 = vlaneseq
      %v3563 = vshrl.u32 %v3562, 7
      %v3564 = vsub.s32 %v3561, %v3563
      %v3565 = vrot.slane %v3555, %v3564
      %v3567 = vunpack.c.l.s4 1966171168
      %v3568 = vunpack.c.0.s8 %v3567
      %v3569 = vlaneseq
      %v3570 = vshrl.u32 %v3569, 7
      %v3571 = vsub.s32 %v3568, %v3570
      %v3572 = vrot.slane %v3556, %v3571
      %v3574 = vunpack.c.l.s4 1966171168
      %v3575 = vunpack.c.0.s8 %v3574
      %v3576 = vlaneseq
      %v3577 = vshrl.u32 %v3576, 7
      %v3578 = vsub.s32 %v3575, %v3577
      %v3579 = vrot.slane %v3557, %v3578
      %v3581 = vunpack.c.l.s4 1966171168
      %v3582 = vunpack.c.0.s8 %v3581
      %v3583 = vlaneseq
      %v3584 = vshrl.u32 %v3583, 7
      %v3585 = vsub.s32 %v3582, %v3584
      %v3586 = vrot.slane %v3558, %v3585
      %v3587 = vcombine.low %v3565, %v3572
      %v3588 = vcombine.low %v3579, %v3586
      %v3590 = vunpack.c.l.s4 1966171168
      %v3591 = vunpack.c.0.s8 %v3590
      %v3592 = vlaneseq
      %v3593 = vshrl.u32 %v3592, 7
      %v3594 = vsub.s32 %v3591, %v3593
      %v3595 = vrot.slane %v3587, %v3594
      %v3597 = vunpack.c.l.s4 1966171168
      %v3598 = vunpack.c.0.s8 %v3597
      %v3599 = vlaneseq
      %v3600 = vshrl.u32 %v3599, 7
      %v3601 = vsub.s32 %v3598, %v3600
      %v3602 = vrot.slane %v3588, %v3601
      %v3603 = vcombine.low %v3595, %v3602
      %v3604 = vcombine.low %v725, %v740
      %v3605 = vcombine.low %v747, %v748
      %v3606 = vcombine.low %v900, %v770
      %v3607 = vcombine.low %v771, %v772
      %v3609 = vunpack.c.l.s4 1966171168
      %v3610 = vunpack.c.0.s8 %v3609
      %v3611 = vlaneseq
      %v3612 = vshrl.u32 %v3611, 7
      %v3613 = vsub.s32 %v3610, %v3612
      %v3614 = vrot.slane %v3604, %v3613
      %v3616 = vunpack.c.l.s4 1966171168
      %v3617 = vunpack.c.0.s8 %v3616
      %v3618 = vlaneseq
      %v3619 = vshrl.u32 %v3618, 7
      %v3620 = vsub.s32 %v3617, %v3619
      %v3621 = vrot.slane %v3605, %v3620
      %v3623 = vunpack.c.l.s4 1966171168
      %v3624 = vunpack.c.0.s8 %v3623
      %v3625 = vlaneseq
      %v3626 = vshrl.u32 %v3625, 7
      %v3627 = vsub.s32 %v3624, %v3626
      %v3628 = vrot.slane %v3606, %v3627
      %v3630 = vunpack.c.l.s4 1966171168
      %v3631 = vunpack.c.0.s8 %v3630
      %v3632 = vlaneseq
      %v3633 = vshrl.u32 %v3632, 7
      %v3634 = vsub.s32 %v3631, %v3633
      %v3635 = vrot.slane %v3607, %v3634
      %v3636 = vcombine.low %v3614, %v3621
      %v3637 = vcombine.low %v3628, %v3635
      %v3639 = vunpack.c.l.s4 1966171168
      %v3640 = vunpack.c.0.s8 %v3639
      %v3641 = vlaneseq
      %v3642 = vshrl.u32 %v3641, 7
      %v3643 = vsub.s32 %v3640, %v3642
      %v3644 = vrot.slane %v3636, %v3643
      %v3646 = vunpack.c.l.s4 1966171168
      %v3647 = vunpack.c.0.s8 %v3646
      %v3648 = vlaneseq
      %v3649 = vshrl.u32 %v3648, 7
      %v3650 = vsub.s32 %v3647, %v3649
      %v3651 = vrot.slane %v3637, %v3650
      %v3652 = vcombine.low %v3644, %v3651
      %v3653 = vcombine.low %v787, %v794
      %v3654 = vcombine.low %v795, %v901
      %v3655 = vcombine.low %v817, %v818
      %v3656 = vcombine.low %v819, %v834
      %v3658 = vunpack.c.l.s4 1966171168
      %v3659 = vunpack.c.0.s8 %v3658
      %v3660 = vlaneseq
      %v3661 = vshrl.u32 %v3660, 7
      %v3662 = vsub.s32 %v3659, %v3661
      %v3663 = vrot.slane %v3653, %v3662
      %v3665 = vunpack.c.l.s4 1966171168
      %v3666 = vunpack.c.0.s8 %v3665
      %v3667 = vlaneseq
      %v3668 = vshrl.u32 %v3667, 7
      %v3669 = vsub.s32 %v3666, %v3668
      %v3670 = vrot.slane %v3654, %v3669
      %v3672 = vunpack.c.l.s4 1966171168
      %v3673 = vunpack.c.0.s8 %v3672
      %v3674 = vlaneseq
      %v3675 = vshrl.u32 %v3674, 7
      %v3676 = vsub.s32 %v3673, %v3675
      %v3677 = vrot.slane %v3655, %v3676
      %v3679 = vunpack.c.l.s4 1966171168
      %v3680 = vunpack.c.0.s8 %v3679
      %v3681 = vlaneseq
      %v3682 = vshrl.u32 %v3681, 7
      %v3683 = vsub.s32 %v3680, %v3682
      %v3684 = vrot.slane %v3656, %v3683
      %v3685 = vcombine.low %v3663, %v3670
      %v3686 = vcombine.low %v3677, %v3684
      %v3688 = vunpack.c.l.s4 1966171168
      %v3689 = vunpack.c.0.s8 %v3688
      %v3690 = vlaneseq
      %v3691 = vshrl.u32 %v3690, 7
      %v3692 = vsub.s32 %v3689, %v3691
      %v3693 = vrot.slane %v3685, %v3692
      %v3695 = vunpack.c.l.s4 1966171168
      %v3696 = vunpack.c.0.s8 %v3695
      %v3697 = vlaneseq
      %v3698 = vshrl.u32 %v3697, 7
      %v3699 = vsub.s32 %v3696, %v3698
      %v3700 = vrot.slane %v3686, %v3699
      %v3701 = vcombine.low %v3693, %v3700
      %v3702 = vcombine.low %v841, %v842
      %v3703 = vcombine.low %v902, %v864
      %v3704 = vcombine.low %v865, %v866
      %v3705 = vcombine.low %v881, %v888
      %v3707 = vunpack.c.l.s4 1966171168
      %v3708 = vunpack.c.0.s8 %v3707
      %v3709 = vlaneseq
      %v3710 = vshrl.u32 %v3709, 7
      %v3711 = vsub.s32 %v3708, %v3710
      %v3712 = vrot.slane %v3702, %v3711
      %v3714 = vunpack.c.l.s4 1966171168
      %v3715 = vunpack.c.0.s8 %v3714
      %v3716 = vlaneseq
      %v3717 = vshrl.u32 %v3716, 7
      %v3718 = vsub.s32 %v3715, %v3717
      %v3719 = vrot.slane %v3703, %v3718
      %v3721 = vunpack.c.l.s4 1966171168
      %v3722 = vunpack.c.0.s8 %v3721
      %v3723 = vlaneseq
      %v3724 = vshrl.u32 %v3723, 7
      %v3725 = vsub.s32 %v3722, %v3724
      %v3726 = vrot.slane %v3704, %v3725
      %v3728 = vunpack.c.l.s4 1966171168
      %v3729 = vunpack.c.0.s8 %v3728
      %v3730 = vlaneseq
      %v3731 = vshrl.u32 %v3730, 7
      %v3732 = vsub.s32 %v3729, %v3731
      %v3733 = vrot.slane %v3705, %v3732
      %v3734 = vcombine.low %v3712, %v3719
      %v3735 = vcombine.low %v3726, %v3733
      %v3737 = vunpack.c.l.s4 1966171168
      %v3738 = vunpack.c.0.s8 %v3737
      %v3739 = vlaneseq
      %v3740 = vshrl.u32 %v3739, 7
      %v3741 = vsub.s32 %v3738, %v3740
      %v3742 = vrot.slane %v3734, %v3741
      %v3744 = vunpack.c.l.s4 1966171168
      %v3745 = vunpack.c.0.s8 %v3744
      %v3746 = vlaneseq
      %v3747 = vshrl.u32 %v3746, 7
      %v3748 = vsub.s32 %v3745, %v3747
      %v3749 = vrot.slane %v3735, %v3748
      %v3750 = vcombine.low %v3742, %v3749
      %v3751 = vcombine.low %v889, %v903
      %v3753 = vunpack.c.l.s4 1966171168
      %v3754 = vunpack.c.0.s8 %v3753
      %v3755 = vlaneseq
      %v3756 = vshrl.u32 %v3755, 7
      %v3757 = vsub.s32 %v3754, %v3756
      %v3758 = vrot.slane %v3751, %v3757
      %v3760 = vunpack.c.l.s4 1966171168
      %v3761 = vunpack.c.0.s8 %v3760
      %v3762 = vlaneseq
      %v3763 = vshrl.u32 %v3762, 7
      %v3764 = vsub.s32 %v3761, %v3763
      %v3765 = vrot.slane %v3758, %v3764
      %3766 = vrot.lane.b32.xlu0 %v3211, 8
      %v3767 = vpop.permute.xlu0 %3766
      %3768 = vrot.lane.b32.xlu0 %v3260, 8
      %v3769 = vpop.permute.xlu0 %3768
      %3770 = vrot.lane.b32.xlu0 %v3309, 8
      %v3771 = vpop.permute.xlu0 %3770
      %3772 = vrot.lane.b32.xlu0 %v3358, 8
      %v3773 = vpop.permute.xlu0 %3772
      %3774 = vrot.lane.b32.xlu0 %v3407, 8
      %v3775 = vpop.permute.xlu0 %3774
      %3776 = vrot.lane.b32.xlu0 %v3456, 8
      %v3777 = vpop.permute.xlu0 %3776
      %3778 = vrot.lane.b32.xlu0 %v3505, 8
      %v3779 = vpop.permute.xlu0 %3778
      %3780 = vrot.lane.b32.xlu0 %v3554, 8
      %v3781 = vpop.permute.xlu0 %3780
      %3782 = vrot.lane.b32.xlu0 %v3603, 8
      %v3783 = vpop.permute.xlu0 %3782
      %3784 = vrot.lane.b32.xlu0 %v3652, 8
      %v3785 = vpop.permute.xlu0 %3784
      %3786 = vrot.lane.b32.xlu0 %v3701, 8
      %v3787 = vpop.permute.xlu0 %3786
      %3788 = vrot.lane.b32.xlu0 %v3750, 8
      %v3789 = vpop.permute.xlu0 %3788
      %3790 = vrot.lane.b32.xlu0 %v3765, 8
      %v3791 = vpop.permute.xlu0 %3790
      %v3792 = vcombine.low %v293, %v300
      %v3793 = vcombine.low %v325, %v340
      %v3795 = vunpack.c.l.s4 1966171168
      %v3796 = vunpack.c.0.s8 %v3795
      %v3797 = vlaneseq
      %v3798 = vshrl.u32 %v3797, 7
      %v3799 = vsub.s32 %v3796, %v3798
      %v3800 = vrot.slane %v3792, %v3799
      %v3802 = vunpack.c.l.s4 1966171168
      %v3803 = vunpack.c.0.s8 %v3802
      %v3804 = vlaneseq
      %v3805 = vshrl.u32 %v3804, 7
      %v3806 = vsub.s32 %v3803, %v3805
      %v3807 = vrot.slane %v3793, %v3806
      %v3808 = vcombine.low %v3800, %v3222
      %v3809 = vcombine.low %v3229, %v3807
      %v3811 = vunpack.c.l.s4 1966171168
      %v3812 = vunpack.c.0.s8 %v3811
      %v3813 = vlaneseq
      %v3814 = vshrl.u32 %v3813, 7
      %v3815 = vsub.s32 %v3812, %v3814
      %v3816 = vrot.slane %v3808, %v3815
      %v3818 = vunpack.c.l.s4 1966171168
      %v3819 = vunpack.c.0.s8 %v3818
      %v3820 = vlaneseq
      %v3821 = vshrl.u32 %v3820, 7
      %v3822 = vsub.s32 %v3819, %v3821
      %v3823 = vrot.slane %v3809, %v3822
      %v3824 = vcombine.low %v3816, %v3823
      %v3825 = vcombine.low %v387, %v394
      %v3827 = vunpack.c.l.s4 1966171168
      %v3828 = vunpack.c.0.s8 %v3827
      %v3829 = vlaneseq
      %v3830 = vshrl.u32 %v3829, 7
      %v3831 = vsub.s32 %v3828, %v3830
      %v3832 = vrot.slane %v3825, %v3831
      %v3833 = vcombine.low %v3243, %v3271
      %v3834 = vcombine.low %v3278, %v3832
      %v3836 = vunpack.c.l.s4 1966171168
      %v3837 = vunpack.c.0.s8 %v3836
      %v3838 = vlaneseq
      %v3839 = vshrl.u32 %v3838, 7
      %v3840 = vsub.s32 %v3837, %v3839
      %v3841 = vrot.slane %v3833, %v3840
      %v3843 = vunpack.c.l.s4 1966171168
      %v3844 = vunpack.c.0.s8 %v3843
      %v3845 = vlaneseq
      %v3846 = vshrl.u32 %v3845, 7
      %v3847 = vsub.s32 %v3844, %v3846
      %v3848 = vrot.slane %v3834, %v3847
      %v3849 = vcombine.low %v3841, %v3848
      %v3850 = vcombine.low %v419, %v434
      %v3852 = vunpack.c.l.s4 1966171168
      %v3853 = vunpack.c.0.s8 %v3852
      %v3854 = vlaneseq
      %v3855 = vshrl.u32 %v3854, 7
      %v3856 = vsub.s32 %v3853, %v3855
      %v3857 = vrot.slane %v3850, %v3856
      %v3858 = vcombine.low %v3292, %v3320
      %v3859 = vcombine.low %v3857, %v3334
      %v3861 = vunpack.c.l.s4 1966171168
      %v3862 = vunpack.c.0.s8 %v3861
      %v3863 = vlaneseq
      %v3864 = vshrl.u32 %v3863, 7
      %v3865 = vsub.s32 %v3862, %v3864
      %v3866 = vrot.slane %v3858, %v3865
      %v3868 = vunpack.c.l.s4 1966171168
      %v3869 = vunpack.c.0.s8 %v3868
      %v3870 = vlaneseq
      %v3871 = vshrl.u32 %v3870, 7
      %v3872 = vsub.s32 %v3869, %v3871
      %v3873 = vrot.slane %v3859, %v3872
      %v3874 = vcombine.low %v3866, %v3873
      %v3875 = vcombine.low %v481, %v488
      %v3877 = vunpack.c.l.s4 1966171168
      %v3878 = vunpack.c.0.s8 %v3877
      %v3879 = vlaneseq
      %v3880 = vshrl.u32 %v3879, 7
      %v3881 = vsub.s32 %v3878, %v3880
      %v3882 = vrot.slane %v3875, %v3881
      %v3883 = vcombine.low %v3341, %v3369
      %v3884 = vcombine.low %v3882, %v3383
      %v3886 = vunpack.c.l.s4 1966171168
      %v3887 = vunpack.c.0.s8 %v3886
      %v3888 = vlaneseq
      %v3889 = vshrl.u32 %v3888, 7
      %v3890 = vsub.s32 %v3887, %v3889
      %v3891 = vrot.slane %v3883, %v3890
      %v3893 = vunpack.c.l.s4 1966171168
      %v3894 = vunpack.c.0.s8 %v3893
      %v3895 = vlaneseq
      %v3896 = vshrl.u32 %v3895, 7
      %v3897 = vsub.s32 %v3894, %v3896
      %v3898 = vrot.slane %v3884, %v3897
      %v3899 = vcombine.low %v3891, %v3898
      %v3900 = vcombine.low %v513, %v528
      %v3902 = vunpack.c.l.s4 1966171168
      %v3903 = vunpack.c.0.s8 %v3902
      %v3904 = vlaneseq
      %v3905 = vshrl.u32 %v3904, 7
      %v3906 = vsub.s32 %v3903, %v3905
      %v3907 = vrot.slane %v3900, %v3906
      %v3908 = vcombine.low %v3390, %v3907
      %v3909 = vcombine.low %v3425, %v3432
      %v3911 = vunpack.c.l.s4 1966171168
      %v3912 = vunpack.c.0.s8 %v3911
      %v3913 = vlaneseq
      %v3914 = vshrl.u32 %v3913, 7
      %v3915 = vsub.s32 %v3912, %v3914
      %v3916 = vrot.slane %v3908, %v3915
      %v3918 = vunpack.c.l.s4 1966171168
      %v3919 = vunpack.c.0.s8 %v3918
      %v3920 = vlaneseq
      %v3921 = vshrl.u32 %v3920, 7
      %v3922 = vsub.s32 %v3919, %v3921
      %v3923 = vrot.slane %v3909, %v3922
      %v3924 = vcombine.low %v3916, %v3923
      %v3925 = vcombine.low %v575, %v582
      %v3927 = vunpack.c.l.s4 1966171168
      %v3928 = vunpack.c.0.s8 %v3927
      %v3929 = vlaneseq
      %v3930 = vshrl.u32 %v3929, 7
      %v3931 = vsub.s32 %v3928, %v3930
      %v3932 = vrot.slane %v3925, %v3931
      %v3933 = vcombine.low %v3439, %v3932
      %v3934 = vcombine.low %v3474, %v3481
      %v3936 = vunpack.c.l.s4 1966171168
      %v3937 = vunpack.c.0.s8 %v3936
      %v3938 = vlaneseq
      %v3939 = vshrl.u32 %v3938, 7
      %v3940 = vsub.s32 %v3937, %v3939
      %v3941 = vrot.slane %v3933, %v3940
      %v3943 = vunpack.c.l.s4 1966171168
      %v3944 = vunpack.c.0.s8 %v3943
      %v3945 = vlaneseq
      %v3946 = vshrl.u32 %v3945, 7
      %v3947 = vsub.s32 %v3944, %v3946
      %v3948 = vrot.slane %v3934, %v3947
      %v3949 = vcombine.low %v3941, %v3948
      %v3950 = vcombine.low %v607, %v622
      %v3952 = vunpack.c.l.s4 1966171168
      %v3953 = vunpack.c.0.s8 %v3952
      %v3954 = vlaneseq
      %v3955 = vshrl.u32 %v3954, 7
      %v3956 = vsub.s32 %v3953, %v3955
      %v3957 = vrot.slane %v3950, %v3956
      %v3958 = vcombine.low %v3957, %v3516
      %v3959 = vcombine.low %v3523, %v3530
      %v3961 = vunpack.c.l.s4 1966171168
      %v3962 = vunpack.c.0.s8 %v3961
      %v3963 = vlaneseq
      %v3964 = vshrl.u32 %v3963, 7
      %v3965 = vsub.s32 %v3962, %v3964
      %v3966 = vrot.slane %v3958, %v3965
      %v3968 = vunpack.c.l.s4 1966171168
      %v3969 = vunpack.c.0.s8 %v3968
      %v3970 = vlaneseq
      %v3971 = vshrl.u32 %v3970, 7
      %v3972 = vsub.s32 %v3969, %v3971
      %v3973 = vrot.slane %v3959, %v3972
      %v3974 = vcombine.low %v3966, %v3973
      %v3975 = vcombine.low %v669, %v676
      %v3976 = vcombine.low %v701, %v716
      %v3978 = vunpack.c.l.s4 1966171168
      %v3979 = vunpack.c.0.s8 %v3978
      %v3980 = vlaneseq
      %v3981 = vshrl.u32 %v3980, 7
      %v3982 = vsub.s32 %v3979, %v3981
      %v3983 = vrot.slane %v3975, %v3982
      %v3985 = vunpack.c.l.s4 1966171168
      %v3986 = vunpack.c.0.s8 %v3985
      %v3987 = vlaneseq
      %v3988 = vshrl.u32 %v3987, 7
      %v3989 = vsub.s32 %v3986, %v3988
      %v3990 = vrot.slane %v3976, %v3989
      %v3991 = vcombine.low %v3983, %v3565
      %v3992 = vcombine.low %v3572, %v3990
      %v3994 = vunpack.c.l.s4 1966171168
      %v3995 = vunpack.c.0.s8 %v3994
      %v3996 = vlaneseq
      %v3997 = vshrl.u32 %v3996, 7
      %v3998 = vsub.s32 %v3995, %v3997
      %v3999 = vrot.slane %v3991, %v3998
      %v4001 = vunpack.c.l.s4 1966171168
      %v4002 = vunpack.c.0.s8 %v4001
      %v4003 = vlaneseq
      %v4004 = vshrl.u32 %v4003, 7
      %v4005 = vsub.s32 %v4002, %v4004
      %v4006 = vrot.slane %v3992, %v4005
      %v4007 = vcombine.low %v3999, %v4006
      %v4008 = vcombine.low %v763, %v770
      %v4010 = vunpack.c.l.s4 1966171168
      %v4011 = vunpack.c.0.s8 %v4010
      %v4012 = vlaneseq
      %v4013 = vshrl.u32 %v4012, 7
      %v4014 = vsub.s32 %v4011, %v4013
      %v4015 = vrot.slane %v4008, %v4014
      %v4016 = vcombine.low %v3586, %v3614
      %v4017 = vcombine.low %v3621, %v4015
      %v4019 = vunpack.c.l.s4 1966171168
      %v4020 = vunpack.c.0.s8 %v4019
      %v4021 = vlaneseq
      %v4022 = vshrl.u32 %v4021, 7
      %v4023 = vsub.s32 %v4020, %v4022
      %v4024 = vrot.slane %v4016, %v4023
      %v4026 = vunpack.c.l.s4 1966171168
      %v4027 = vunpack.c.0.s8 %v4026
      %v4028 = vlaneseq
      %v4029 = vshrl.u32 %v4028, 7
      %v4030 = vsub.s32 %v4027, %v4029
      %v4031 = vrot.slane %v4017, %v4030
      %v4032 = vcombine.low %v4024, %v4031
      %v4033 = vcombine.low %v795, %v810
      %v4035 = vunpack.c.l.s4 1966171168
      %v4036 = vunpack.c.0.s8 %v4035
      %v4037 = vlaneseq
      %v4038 = vshrl.u32 %v4037, 7
      %v4039 = vsub.s32 %v4036, %v4038
      %v4040 = vrot.slane %v4033, %v4039
      %v4041 = vcombine.low %v3635, %v3663
      %v4042 = vcombine.low %v4040, %v3677
      %v4044 = vunpack.c.l.s4 1966171168
      %v4045 = vunpack.c.0.s8 %v4044
      %v4046 = vlaneseq
      %v4047 = vshrl.u32 %v4046, 7
      %v4048 = vsub.s32 %v4045, %v4047
      %v4049 = vrot.slane %v4041, %v4048
      %v4051 = vunpack.c.l.s4 1966171168
      %v4052 = vunpack.c.0.s8 %v4051
      %v4053 = vlaneseq
      %v4054 = vshrl.u32 %v4053, 7
      %v4055 = vsub.s32 %v4052, %v4054
      %v4056 = vrot.slane %v4042, %v4055
      %v4057 = vcombine.low %v4049, %v4056
      %v4058 = vcombine.low %v857, %v864
      %v4060 = vunpack.c.l.s4 1966171168
      %v4061 = vunpack.c.0.s8 %v4060
      %v4062 = vlaneseq
      %v4063 = vshrl.u32 %v4062, 7
      %v4064 = vsub.s32 %v4061, %v4063
      %v4065 = vrot.slane %v4058, %v4064
      %v4066 = vcombine.low %v3684, %v3712
      %v4067 = vcombine.low %v4065, %v3726
      %v4069 = vunpack.c.l.s4 1966171168
      %v4070 = vunpack.c.0.s8 %v4069
      %v4071 = vlaneseq
      %v4072 = vshrl.u32 %v4071, 7
      %v4073 = vsub.s32 %v4070, %v4072
      %v4074 = vrot.slane %v4066, %v4073
      %v4076 = vunpack.c.l.s4 1966171168
      %v4077 = vunpack.c.0.s8 %v4076
      %v4078 = vlaneseq
      %v4079 = vshrl.u32 %v4078, 7
      %v4080 = vsub.s32 %v4077, %v4079
      %v4081 = vrot.slane %v4067, %v4080
      %v4082 = vcombine.low %v4074, %v4081
      %v4083 = vcombine.low %v889, %v1733
      %v4084 = vcombine.low %v1740, %v1741
      %v4085 = vcombine.low %v1742, %v1757
      %v4087 = vunpack.c.l.s4 1966171168
      %v4088 = vunpack.c.0.s8 %v4087
      %v4089 = vlaneseq
      %v4090 = vshrl.u32 %v4089, 7
      %v4091 = vsub.s32 %v4088, %v4090
      %v4092 = vrot.slane %v4083, %v4091
      %v4094 = vunpack.c.l.s4 1966171168
      %v4095 = vunpack.c.0.s8 %v4094
      %v4096 = vlaneseq
      %v4097 = vshrl.u32 %v4096, 7
      %v4098 = vsub.s32 %v4095, %v4097
      %v4099 = vrot.slane %v4084, %v4098
      %v4101 = vunpack.c.l.s4 1966171168
      %v4102 = vunpack.c.0.s8 %v4101
      %v4103 = vlaneseq
      %v4104 = vshrl.u32 %v4103, 7
      %v4105 = vsub.s32 %v4102, %v4104
      %v4106 = vrot.slane %v4085, %v4105
      %v4107 = vcombine.low %v3733, %v4092
      %v4108 = vcombine.low %v4099, %v4106
      %v4110 = vunpack.c.l.s4 1966171168
      %v4111 = vunpack.c.0.s8 %v4110
      %v4112 = vlaneseq
      %v4113 = vshrl.u32 %v4112, 7
      %v4114 = vsub.s32 %v4111, %v4113
      %v4115 = vrot.slane %v4107, %v4114
      %v4117 = vunpack.c.l.s4 1966171168
      %v4118 = vunpack.c.0.s8 %v4117
      %v4119 = vlaneseq
      %v4120 = vshrl.u32 %v4119, 7
      %v4121 = vsub.s32 %v4118, %v4120
      %v4122 = vrot.slane %v4108, %v4121
      %v4123 = vcombine.low %v4115, %v4122
      %v4124 = vcombine.low %v1764, %v1765
      %v4126 = vunpack.c.l.s4 1966171168
      %v4127 = vunpack.c.0.s8 %v4126
      %v4128 = vlaneseq
      %v4129 = vshrl.u32 %v4128, 7
      %v4130 = vsub.s32 %v4127, %v4129
      %v4131 = vrot.slane %v4124, %v4130
      %v4133 = vunpack.c.l.s4 1966171168
      %v4134 = vunpack.c.0.s8 %v4133
      %v4135 = vlaneseq
      %v4136 = vshrl.u32 %v4135, 7
      %v4137 = vsub.s32 %v4134, %v4136
      %v4138 = vrot.slane %v4131, %v4137
      %4139 = vrot.lane.b32.xlu0 %v3824, 12
      %v4140 = vpop.permute.xlu0 %4139
      %4141 = vrot.lane.b32.xlu0 %v3849, 12
      %v4142 = vpop.permute.xlu0 %4141
      %4143 = vrot.lane.b32.xlu0 %v3874, 12
      %v4144 = vpop.permute.xlu0 %4143
      %4145 = vrot.lane.b32.xlu0 %v3899, 12
      %v4146 = vpop.permute.xlu0 %4145
      %4147 = vrot.lane.b32.xlu0 %v3924, 12
      %v4148 = vpop.permute.xlu0 %4147
      %4149 = vrot.lane.b32.xlu0 %v3949, 12
      %v4150 = vpop.permute.xlu0 %4149
      %4151 = vrot.lane.b32.xlu0 %v3974, 12
      %v4152 = vpop.permute.xlu0 %4151
      %4153 = vrot.lane.b32.xlu0 %v4007, 12
      %v4154 = vpop.permute.xlu0 %4153
      %4155 = vrot.lane.b32.xlu0 %v4032, 12
      %v4156 = vpop.permute.xlu0 %4155
      %4157 = vrot.lane.b32.xlu0 %v4057, 12
      %v4158 = vpop.permute.xlu0 %4157
      %4159 = vrot.lane.b32.xlu0 %v4082, 12
      %v4160 = vpop.permute.xlu0 %4159
      %4161 = vrot.lane.b32.xlu0 %v4123, 12
      %v4162 = vpop.permute.xlu0 %4161
      %4163 = vrot.lane.b32.xlu0 %v4138, 12
      %v4164 = vpop.permute.xlu0 %4163
      %v4165 = vcombine.low %v984, %v992
      %v4166 = vcombine.low %v1000, %v1008
      %v4167 = vcombine.low %v1016, %v1024
      %v4168 = vcombine.low %v1032, %v1041
      %v4170 = vunpack.c.l.s4 1966171168
      %v4171 = vunpack.c.0.s8 %v4170
      %v4172 = vlaneseq
      %v4173 = vshrl.u32 %v4172, 7
      %v4174 = vsub.s32 %v4171, %v4173
      %v4175 = vrot.slane %v4165, %v4174
      %v4177 = vunpack.c.l.s4 1966171168
      %v4178 = vunpack.c.0.s8 %v4177
      %v4179 = vlaneseq
      %v4180 = vshrl.u32 %v4179, 7
      %v4181 = vsub.s32 %v4178, %v4180
      %v4182 = vrot.slane %v4166, %v4181
      %v4184 = vunpack.c.l.s4 1966171168
      %v4185 = vunpack.c.0.s8 %v4184
      %v4186 = vlaneseq
      %v4187 = vshrl.u32 %v4186, 7
      %v4188 = vsub.s32 %v4185, %v4187
      %v4189 = vrot.slane %v4167, %v4188
      %v4191 = vunpack.c.l.s4 1966171168
      %v4192 = vunpack.c.0.s8 %v4191
      %v4193 = vlaneseq
      %v4194 = vshrl.u32 %v4193, 7
      %v4195 = vsub.s32 %v4192, %v4194
      %v4196 = vrot.slane %v4168, %v4195
      %v4197 = vcombine.low %v4175, %v4182
      %v4198 = vcombine.low %v4189, %v4196
      %v4200 = vunpack.c.l.s4 1966171168
      %v4201 = vunpack.c.0.s8 %v4200
      %v4202 = vlaneseq
      %v4203 = vshrl.u32 %v4202, 7
      %v4204 = vsub.s32 %v4201, %v4203
      %v4205 = vrot.slane %v4197, %v4204
      %v4207 = vunpack.c.l.s4 1966171168
      %v4208 = vunpack.c.0.s8 %v4207
      %v4209 = vlaneseq
      %v4210 = vshrl.u32 %v4209, 7
      %v4211 = vsub.s32 %v4208, %v4210
      %v4212 = vrot.slane %v4198, %v4211
      %v4213 = vcombine.low %v4205, %v4212
      %v4214 = vcombine.low %v1049, %v1057
      %v4215 = vcombine.low %v1065, %v1073
      %v4216 = vcombine.low %v1081, %v1089
      %v4217 = vcombine.low %v1098, %v1106
      %v4219 = vunpack.c.l.s4 1966171168
      %v4220 = vunpack.c.0.s8 %v4219
      %v4221 = vlaneseq
      %v4222 = vshrl.u32 %v4221, 7
      %v4223 = vsub.s32 %v4220, %v4222
      %v4224 = vrot.slane %v4214, %v4223
      %v4226 = vunpack.c.l.s4 1966171168
      %v4227 = vunpack.c.0.s8 %v4226
      %v4228 = vlaneseq
      %v4229 = vshrl.u32 %v4228, 7
      %v4230 = vsub.s32 %v4227, %v4229
      %v4231 = vrot.slane %v4215, %v4230
      %v4233 = vunpack.c.l.s4 1966171168
      %v4234 = vunpack.c.0.s8 %v4233
      %v4235 = vlaneseq
      %v4236 = vshrl.u32 %v4235, 7
      %v4237 = vsub.s32 %v4234, %v4236
      %v4238 = vrot.slane %v4216, %v4237
      %v4240 = vunpack.c.l.s4 1966171168
      %v4241 = vunpack.c.0.s8 %v4240
      %v4242 = vlaneseq
      %v4243 = vshrl.u32 %v4242, 7
      %v4244 = vsub.s32 %v4241, %v4243
      %v4245 = vrot.slane %v4217, %v4244
      %v4246 = vcombine.low %v4224, %v4231
      %v4247 = vcombine.low %v4238, %v4245
      %v4249 = vunpack.c.l.s4 1966171168
      %v4250 = vunpack.c.0.s8 %v4249
      %v4251 = vlaneseq
      %v4252 = vshrl.u32 %v4251, 7
      %v4253 = vsub.s32 %v4250, %v4252
      %v4254 = vrot.slane %v4246, %v4253
      %v4256 = vunpack.c.l.s4 1966171168
      %v4257 = vunpack.c.0.s8 %v4256
      %v4258 = vlaneseq
      %v4259 = vshrl.u32 %v4258, 7
      %v4260 = vsub.s32 %v4257, %v4259
      %v4261 = vrot.slane %v4247, %v4260
      %v4262 = vcombine.low %v4254, %v4261
      %v4263 = vcombine.low %v1114, %v1122
      %v4264 = vcombine.low %v1130, %v1138
      %v4265 = vcombine.low %v1146, %v1155
      %v4266 = vcombine.low %v1163, %v1171
      %v4268 = vunpack.c.l.s4 1966171168
      %v4269 = vunpack.c.0.s8 %v4268
      %v4270 = vlaneseq
      %v4271 = vshrl.u32 %v4270, 7
      %v4272 = vsub.s32 %v4269, %v4271
      %v4273 = vrot.slane %v4263, %v4272
      %v4275 = vunpack.c.l.s4 1966171168
      %v4276 = vunpack.c.0.s8 %v4275
      %v4277 = vlaneseq
      %v4278 = vshrl.u32 %v4277, 7
      %v4279 = vsub.s32 %v4276, %v4278
      %v4280 = vrot.slane %v4264, %v4279
      %v4282 = vunpack.c.l.s4 1966171168
      %v4283 = vunpack.c.0.s8 %v4282
      %v4284 = vlaneseq
      %v4285 = vshrl.u32 %v4284, 7
      %v4286 = vsub.s32 %v4283, %v4285
      %v4287 = vrot.slane %v4265, %v4286
      %v4289 = vunpack.c.l.s4 1966171168
      %v4290 = vunpack.c.0.s8 %v4289
      %v4291 = vlaneseq
      %v4292 = vshrl.u32 %v4291, 7
      %v4293 = vsub.s32 %v4290, %v4292
      %v4294 = vrot.slane %v4266, %v4293
      %v4295 = vcombine.low %v4273, %v4280
      %v4296 = vcombine.low %v4287, %v4294
      %v4298 = vunpack.c.l.s4 1966171168
      %v4299 = vunpack.c.0.s8 %v4298
      %v4300 = vlaneseq
      %v4301 = vshrl.u32 %v4300, 7
      %v4302 = vsub.s32 %v4299, %v4301
      %v4303 = vrot.slane %v4295, %v4302
      %v4305 = vunpack.c.l.s4 1966171168
      %v4306 = vunpack.c.0.s8 %v4305
      %v4307 = vlaneseq
      %v4308 = vshrl.u32 %v4307, 7
      %v4309 = vsub.s32 %v4306, %v4308
      %v4310 = vrot.slane %v4296, %v4309
      %v4311 = vcombine.low %v4303, %v4310
      %v4312 = vcombine.low %v1179, %v1187
      %v4313 = vcombine.low %v1195, %v1203
      %v4314 = vcombine.low %v1212, %v1220
      %v4315 = vcombine.low %v1228, %v1236
      %v4317 = vunpack.c.l.s4 1966171168
      %v4318 = vunpack.c.0.s8 %v4317
      %v4319 = vlaneseq
      %v4320 = vshrl.u32 %v4319, 7
      %v4321 = vsub.s32 %v4318, %v4320
      %v4322 = vrot.slane %v4312, %v4321
      %v4324 = vunpack.c.l.s4 1966171168
      %v4325 = vunpack.c.0.s8 %v4324
      %v4326 = vlaneseq
      %v4327 = vshrl.u32 %v4326, 7
      %v4328 = vsub.s32 %v4325, %v4327
      %v4329 = vrot.slane %v4313, %v4328
      %v4331 = vunpack.c.l.s4 1966171168
      %v4332 = vunpack.c.0.s8 %v4331
      %v4333 = vlaneseq
      %v4334 = vshrl.u32 %v4333, 7
      %v4335 = vsub.s32 %v4332, %v4334
      %v4336 = vrot.slane %v4314, %v4335
      %v4338 = vunpack.c.l.s4 1966171168
      %v4339 = vunpack.c.0.s8 %v4338
      %v4340 = vlaneseq
      %v4341 = vshrl.u32 %v4340, 7
      %v4342 = vsub.s32 %v4339, %v4341
      %v4343 = vrot.slane %v4315, %v4342
      %v4344 = vcombine.low %v4322, %v4329
      %v4345 = vcombine.low %v4336, %v4343
      %v4347 = vunpack.c.l.s4 1966171168
      %v4348 = vunpack.c.0.s8 %v4347
      %v4349 = vlaneseq
      %v4350 = vshrl.u32 %v4349, 7
      %v4351 = vsub.s32 %v4348, %v4350
      %v4352 = vrot.slane %v4344, %v4351
      %v4354 = vunpack.c.l.s4 1966171168
      %v4355 = vunpack.c.0.s8 %v4354
      %v4356 = vlaneseq
      %v4357 = vshrl.u32 %v4356, 7
      %v4358 = vsub.s32 %v4355, %v4357
      %v4359 = vrot.slane %v4345, %v4358
      %v4360 = vcombine.low %v4352, %v4359
      %v4361 = vcombine.low %v1244, %v1252
      %v4362 = vcombine.low %v1260, %v1269
      %v4363 = vcombine.low %v1277, %v1285
      %v4364 = vcombine.low %v1293, %v1301
      %v4366 = vunpack.c.l.s4 1966171168
      %v4367 = vunpack.c.0.s8 %v4366
      %v4368 = vlaneseq
      %v4369 = vshrl.u32 %v4368, 7
      %v4370 = vsub.s32 %v4367, %v4369
      %v4371 = vrot.slane %v4361, %v4370
      %v4373 = vunpack.c.l.s4 1966171168
      %v4374 = vunpack.c.0.s8 %v4373
      %v4375 = vlaneseq
      %v4376 = vshrl.u32 %v4375, 7
      %v4377 = vsub.s32 %v4374, %v4376
      %v4378 = vrot.slane %v4362, %v4377
      %v4380 = vunpack.c.l.s4 1966171168
      %v4381 = vunpack.c.0.s8 %v4380
      %v4382 = vlaneseq
      %v4383 = vshrl.u32 %v4382, 7
      %v4384 = vsub.s32 %v4381, %v4383
      %v4385 = vrot.slane %v4363, %v4384
      %v4387 = vunpack.c.l.s4 1966171168
      %v4388 = vunpack.c.0.s8 %v4387
      %v4389 = vlaneseq
      %v4390 = vshrl.u32 %v4389, 7
      %v4391 = vsub.s32 %v4388, %v4390
      %v4392 = vrot.slane %v4364, %v4391
      %v4393 = vcombine.low %v4371, %v4378
      %v4394 = vcombine.low %v4385, %v4392
      %v4396 = vunpack.c.l.s4 1966171168
      %v4397 = vunpack.c.0.s8 %v4396
      %v4398 = vlaneseq
      %v4399 = vshrl.u32 %v4398, 7
      %v4400 = vsub.s32 %v4397, %v4399
      %v4401 = vrot.slane %v4393, %v4400
      %v4403 = vunpack.c.l.s4 1966171168
      %v4404 = vunpack.c.0.s8 %v4403
      %v4405 = vlaneseq
      %v4406 = vshrl.u32 %v4405, 7
      %v4407 = vsub.s32 %v4404, %v4406
      %v4408 = vrot.slane %v4394, %v4407
      %v4409 = vcombine.low %v4401, %v4408
      %v4410 = vcombine.low %v1309, %v1317
      %v4411 = vcombine.low %v1326, %v1334
      %v4412 = vcombine.low %v1342, %v1350
      %v4413 = vcombine.low %v1358, %v1366
      %v4415 = vunpack.c.l.s4 1966171168
      %v4416 = vunpack.c.0.s8 %v4415
      %v4417 = vlaneseq
      %v4418 = vshrl.u32 %v4417, 7
      %v4419 = vsub.s32 %v4416, %v4418
      %v4420 = vrot.slane %v4410, %v4419
      %v4422 = vunpack.c.l.s4 1966171168
      %v4423 = vunpack.c.0.s8 %v4422
      %v4424 = vlaneseq
      %v4425 = vshrl.u32 %v4424, 7
      %v4426 = vsub.s32 %v4423, %v4425
      %v4427 = vrot.slane %v4411, %v4426
      %v4429 = vunpack.c.l.s4 1966171168
      %v4430 = vunpack.c.0.s8 %v4429
      %v4431 = vlaneseq
      %v4432 = vshrl.u32 %v4431, 7
      %v4433 = vsub.s32 %v4430, %v4432
      %v4434 = vrot.slane %v4412, %v4433
      %v4436 = vunpack.c.l.s4 1966171168
      %v4437 = vunpack.c.0.s8 %v4436
      %v4438 = vlaneseq
      %v4439 = vshrl.u32 %v4438, 7
      %v4440 = vsub.s32 %v4437, %v4439
      %v4441 = vrot.slane %v4413, %v4440
      %v4442 = vcombine.low %v4420, %v4427
      %v4443 = vcombine.low %v4434, %v4441
      %v4445 = vunpack.c.l.s4 1966171168
      %v4446 = vunpack.c.0.s8 %v4445
      %v4447 = vlaneseq
      %v4448 = vshrl.u32 %v4447, 7
      %v4449 = vsub.s32 %v4446, %v4448
      %v4450 = vrot.slane %v4442, %v4449
      %v4452 = vunpack.c.l.s4 1966171168
      %v4453 = vunpack.c.0.s8 %v4452
      %v4454 = vlaneseq
      %v4455 = vshrl.u32 %v4454, 7
      %v4456 = vsub.s32 %v4453, %v4455
      %v4457 = vrot.slane %v4443, %v4456
      %v4458 = vcombine.low %v4450, %v4457
      %v4459 = vcombine.low %v1374, %v1383
      %v4460 = vcombine.low %v1391, %v1399
      %v4461 = vcombine.low %v1407, %v1415
      %v4462 = vcombine.low %v1423, %v1431
      %v4464 = vunpack.c.l.s4 1966171168
      %v4465 = vunpack.c.0.s8 %v4464
      %v4466 = vlaneseq
      %v4467 = vshrl.u32 %v4466, 7
      %v4468 = vsub.s32 %v4465, %v4467
      %v4469 = vrot.slane %v4459, %v4468
      %v4471 = vunpack.c.l.s4 1966171168
      %v4472 = vunpack.c.0.s8 %v4471
      %v4473 = vlaneseq
      %v4474 = vshrl.u32 %v4473, 7
      %v4475 = vsub.s32 %v4472, %v4474
      %v4476 = vrot.slane %v4460, %v4475
      %v4478 = vunpack.c.l.s4 1966171168
      %v4479 = vunpack.c.0.s8 %v4478
      %v4480 = vlaneseq
      %v4481 = vshrl.u32 %v4480, 7
      %v4482 = vsub.s32 %v4479, %v4481
      %v4483 = vrot.slane %v4461, %v4482
      %v4485 = vunpack.c.l.s4 1966171168
      %v4486 = vunpack.c.0.s8 %v4485
      %v4487 = vlaneseq
      %v4488 = vshrl.u32 %v4487, 7
      %v4489 = vsub.s32 %v4486, %v4488
      %v4490 = vrot.slane %v4462, %v4489
      %v4491 = vcombine.low %v4469, %v4476
      %v4492 = vcombine.low %v4483, %v4490
      %v4494 = vunpack.c.l.s4 1966171168
      %v4495 = vunpack.c.0.s8 %v4494
      %v4496 = vlaneseq
      %v4497 = vshrl.u32 %v4496, 7
      %v4498 = vsub.s32 %v4495, %v4497
      %v4499 = vrot.slane %v4491, %v4498
      %v4501 = vunpack.c.l.s4 1966171168
      %v4502 = vunpack.c.0.s8 %v4501
      %v4503 = vlaneseq
      %v4504 = vshrl.u32 %v4503, 7
      %v4505 = vsub.s32 %v4502, %v4504
      %v4506 = vrot.slane %v4492, %v4505
      %v4507 = vcombine.low %v4499, %v4506
      %v4508 = vcombine.low %v1440, %v1448
      %v4509 = vcombine.low %v1456, %v1464
      %v4510 = vcombine.low %v1472, %v1480
      %v4511 = vcombine.low %v1488, %v1497
      %v4513 = vunpack.c.l.s4 1966171168
      %v4514 = vunpack.c.0.s8 %v4513
      %v4515 = vlaneseq
      %v4516 = vshrl.u32 %v4515, 7
      %v4517 = vsub.s32 %v4514, %v4516
      %v4518 = vrot.slane %v4508, %v4517
      %v4520 = vunpack.c.l.s4 1966171168
      %v4521 = vunpack.c.0.s8 %v4520
      %v4522 = vlaneseq
      %v4523 = vshrl.u32 %v4522, 7
      %v4524 = vsub.s32 %v4521, %v4523
      %v4525 = vrot.slane %v4509, %v4524
      %v4527 = vunpack.c.l.s4 1966171168
      %v4528 = vunpack.c.0.s8 %v4527
      %v4529 = vlaneseq
      %v4530 = vshrl.u32 %v4529, 7
      %v4531 = vsub.s32 %v4528, %v4530
      %v4532 = vrot.slane %v4510, %v4531
      %v4534 = vunpack.c.l.s4 1966171168
      %v4535 = vunpack.c.0.s8 %v4534
      %v4536 = vlaneseq
      %v4537 = vshrl.u32 %v4536, 7
      %v4538 = vsub.s32 %v4535, %v4537
      %v4539 = vrot.slane %v4511, %v4538
      %v4540 = vcombine.low %v4518, %v4525
      %v4541 = vcombine.low %v4532, %v4539
      %v4543 = vunpack.c.l.s4 1966171168
      %v4544 = vunpack.c.0.s8 %v4543
      %v4545 = vlaneseq
      %v4546 = vshrl.u32 %v4545, 7
      %v4547 = vsub.s32 %v4544, %v4546
      %v4548 = vrot.slane %v4540, %v4547
      %v4550 = vunpack.c.l.s4 1966171168
      %v4551 = vunpack.c.0.s8 %v4550
      %v4552 = vlaneseq
      %v4553 = vshrl.u32 %v4552, 7
      %v4554 = vsub.s32 %v4551, %v4553
      %v4555 = vrot.slane %v4541, %v4554
      %v4556 = vcombine.low %v4548, %v4555
      %v4557 = vcombine.low %v1505, %v1513
      %v4558 = vcombine.low %v1521, %v1529
      %v4559 = vcombine.low %v1537, %v1545
      %v4560 = vcombine.low %v1554, %v1562
      %v4562 = vunpack.c.l.s4 1966171168
      %v4563 = vunpack.c.0.s8 %v4562
      %v4564 = vlaneseq
      %v4565 = vshrl.u32 %v4564, 7
      %v4566 = vsub.s32 %v4563, %v4565
      %v4567 = vrot.slane %v4557, %v4566
      %v4569 = vunpack.c.l.s4 1966171168
      %v4570 = vunpack.c.0.s8 %v4569
      %v4571 = vlaneseq
      %v4572 = vshrl.u32 %v4571, 7
      %v4573 = vsub.s32 %v4570, %v4572
      %v4574 = vrot.slane %v4558, %v4573
      %v4576 = vunpack.c.l.s4 1966171168
      %v4577 = vunpack.c.0.s8 %v4576
      %v4578 = vlaneseq
      %v4579 = vshrl.u32 %v4578, 7
      %v4580 = vsub.s32 %v4577, %v4579
      %v4581 = vrot.slane %v4559, %v4580
      %v4583 = vunpack.c.l.s4 1966171168
      %v4584 = vunpack.c.0.s8 %v4583
      %v4585 = vlaneseq
      %v4586 = vshrl.u32 %v4585, 7
      %v4587 = vsub.s32 %v4584, %v4586
      %v4588 = vrot.slane %v4560, %v4587
      %v4589 = vcombine.low %v4567, %v4574
      %v4590 = vcombine.low %v4581, %v4588
      %v4592 = vunpack.c.l.s4 1966171168
      %v4593 = vunpack.c.0.s8 %v4592
      %v4594 = vlaneseq
      %v4595 = vshrl.u32 %v4594, 7
      %v4596 = vsub.s32 %v4593, %v4595
      %v4597 = vrot.slane %v4589, %v4596
      %v4599 = vunpack.c.l.s4 1966171168
      %v4600 = vunpack.c.0.s8 %v4599
      %v4601 = vlaneseq
      %v4602 = vshrl.u32 %v4601, 7
      %v4603 = vsub.s32 %v4600, %v4602
      %v4604 = vrot.slane %v4590, %v4603
      %v4605 = vcombine.low %v4597, %v4604
      %v4606 = vcombine.low %v1570, %v1578
      %v4607 = vcombine.low %v1586, %v1594
      %v4608 = vcombine.low %v1602, %v1611
      %v4609 = vcombine.low %v1619, %v1627
      %v4611 = vunpack.c.l.s4 1966171168
      %v4612 = vunpack.c.0.s8 %v4611
      %v4613 = vlaneseq
      %v4614 = vshrl.u32 %v4613, 7
      %v4615 = vsub.s32 %v4612, %v4614
      %v4616 = vrot.slane %v4606, %v4615
      %v4618 = vunpack.c.l.s4 1966171168
      %v4619 = vunpack.c.0.s8 %v4618
      %v4620 = vlaneseq
      %v4621 = vshrl.u32 %v4620, 7
      %v4622 = vsub.s32 %v4619, %v4621
      %v4623 = vrot.slane %v4607, %v4622
      %v4625 = vunpack.c.l.s4 1966171168
      %v4626 = vunpack.c.0.s8 %v4625
      %v4627 = vlaneseq
      %v4628 = vshrl.u32 %v4627, 7
      %v4629 = vsub.s32 %v4626, %v4628
      %v4630 = vrot.slane %v4608, %v4629
      %v4632 = vunpack.c.l.s4 1966171168
      %v4633 = vunpack.c.0.s8 %v4632
      %v4634 = vlaneseq
      %v4635 = vshrl.u32 %v4634, 7
      %v4636 = vsub.s32 %v4633, %v4635
      %v4637 = vrot.slane %v4609, %v4636
      %v4638 = vcombine.low %v4616, %v4623
      %v4639 = vcombine.low %v4630, %v4637
      %v4641 = vunpack.c.l.s4 1966171168
      %v4642 = vunpack.c.0.s8 %v4641
      %v4643 = vlaneseq
      %v4644 = vshrl.u32 %v4643, 7
      %v4645 = vsub.s32 %v4642, %v4644
      %v4646 = vrot.slane %v4638, %v4645
      %v4648 = vunpack.c.l.s4 1966171168
      %v4649 = vunpack.c.0.s8 %v4648
      %v4650 = vlaneseq
      %v4651 = vshrl.u32 %v4650, 7
      %v4652 = vsub.s32 %v4649, %v4651
      %v4653 = vrot.slane %v4639, %v4652
      %v4654 = vcombine.low %v4646, %v4653
      %v4655 = vcombine.low %v1635, %v1643
      %v4656 = vcombine.low %v1651, %v1659
      %v4657 = vcombine.low %v1668, %v1676
      %v4658 = vcombine.low %v1684, %v1692
      %v4660 = vunpack.c.l.s4 1966171168
      %v4661 = vunpack.c.0.s8 %v4660
      %v4662 = vlaneseq
      %v4663 = vshrl.u32 %v4662, 7
      %v4664 = vsub.s32 %v4661, %v4663
      %v4665 = vrot.slane %v4655, %v4664
      %v4667 = vunpack.c.l.s4 1966171168
      %v4668 = vunpack.c.0.s8 %v4667
      %v4669 = vlaneseq
      %v4670 = vshrl.u32 %v4669, 7
      %v4671 = vsub.s32 %v4668, %v4670
      %v4672 = vrot.slane %v4656, %v4671
      %v4674 = vunpack.c.l.s4 1966171168
      %v4675 = vunpack.c.0.s8 %v4674
      %v4676 = vlaneseq
      %v4677 = vshrl.u32 %v4676, 7
      %v4678 = vsub.s32 %v4675, %v4677
      %v4679 = vrot.slane %v4657, %v4678
      %v4681 = vunpack.c.l.s4 1966171168
      %v4682 = vunpack.c.0.s8 %v4681
      %v4683 = vlaneseq
      %v4684 = vshrl.u32 %v4683, 7
      %v4685 = vsub.s32 %v4682, %v4684
      %v4686 = vrot.slane %v4658, %v4685
      %v4687 = vcombine.low %v4665, %v4672
      %v4688 = vcombine.low %v4679, %v4686
      %v4690 = vunpack.c.l.s4 1966171168
      %v4691 = vunpack.c.0.s8 %v4690
      %v4692 = vlaneseq
      %v4693 = vshrl.u32 %v4692, 7
      %v4694 = vsub.s32 %v4691, %v4693
      %v4695 = vrot.slane %v4687, %v4694
      %v4697 = vunpack.c.l.s4 1966171168
      %v4698 = vunpack.c.0.s8 %v4697
      %v4699 = vlaneseq
      %v4700 = vshrl.u32 %v4699, 7
      %v4701 = vsub.s32 %v4698, %v4700
      %v4702 = vrot.slane %v4688, %v4701
      %v4703 = vcombine.low %v4695, %v4702
      %v4704 = vcombine.low %v1700, %v1708
      %v4705 = vcombine.low %v1716, %v1775
      %v4706 = vcombine.low %v1783, %v1791
      %v4707 = vcombine.low %v1799, %v1807
      %v4709 = vunpack.c.l.s4 1966171168
      %v4710 = vunpack.c.0.s8 %v4709
      %v4711 = vlaneseq
      %v4712 = vshrl.u32 %v4711, 7
      %v4713 = vsub.s32 %v4710, %v4712
      %v4714 = vrot.slane %v4704, %v4713
      %v4716 = vunpack.c.l.s4 1966171168
      %v4717 = vunpack.c.0.s8 %v4716
      %v4718 = vlaneseq
      %v4719 = vshrl.u32 %v4718, 7
      %v4720 = vsub.s32 %v4717, %v4719
      %v4721 = vrot.slane %v4705, %v4720
      %v4723 = vunpack.c.l.s4 1966171168
      %v4724 = vunpack.c.0.s8 %v4723
      %v4725 = vlaneseq
      %v4726 = vshrl.u32 %v4725, 7
      %v4727 = vsub.s32 %v4724, %v4726
      %v4728 = vrot.slane %v4706, %v4727
      %v4730 = vunpack.c.l.s4 1966171168
      %v4731 = vunpack.c.0.s8 %v4730
      %v4732 = vlaneseq
      %v4733 = vshrl.u32 %v4732, 7
      %v4734 = vsub.s32 %v4731, %v4733
      %v4735 = vrot.slane %v4707, %v4734
      %v4736 = vcombine.low %v4714, %v4721
      %v4737 = vcombine.low %v4728, %v4735
      %v4739 = vunpack.c.l.s4 1966171168
      %v4740 = vunpack.c.0.s8 %v4739
      %v4741 = vlaneseq
      %v4742 = vshrl.u32 %v4741, 7
      %v4743 = vsub.s32 %v4740, %v4742
      %v4744 = vrot.slane %v4736, %v4743
      %v4746 = vunpack.c.l.s4 1966171168
      %v4747 = vunpack.c.0.s8 %v4746
      %v4748 = vlaneseq
      %v4749 = vshrl.u32 %v4748, 7
      %v4750 = vsub.s32 %v4747, %v4749
      %v4751 = vrot.slane %v4737, %v4750
      %v4752 = vcombine.low %v4744, %v4751
      %v4753 = vcombine.low %v1815, %v1823
      %v4755 = vunpack.c.l.s4 1966171168
      %v4756 = vunpack.c.0.s8 %v4755
      %v4757 = vlaneseq
      %v4758 = vshrl.u32 %v4757, 7
      %v4759 = vsub.s32 %v4756, %v4758
      %v4760 = vrot.slane %v4753, %v4759
      %v4762 = vunpack.c.l.s4 1966171168
      %v4763 = vunpack.c.0.s8 %v4762
      %v4764 = vlaneseq
      %v4765 = vshrl.u32 %v4764, 7
      %v4766 = vsub.s32 %v4763, %v4765
      %v4767 = vrot.slane %v4760, %v4766
      %4768 = vrot.lane.b32.xlu0 %v4213, 16
      %v4769 = vpop.permute.xlu0 %4768
      %4770 = vrot.lane.b32.xlu0 %v4262, 16
      %v4771 = vpop.permute.xlu0 %4770
      %4772 = vrot.lane.b32.xlu0 %v4311, 16
      %v4773 = vpop.permute.xlu0 %4772
      %4774 = vrot.lane.b32.xlu0 %v4360, 16
      %v4775 = vpop.permute.xlu0 %4774
      %4776 = vrot.lane.b32.xlu0 %v4409, 16
      %v4777 = vpop.permute.xlu0 %4776
      %4778 = vrot.lane.b32.xlu0 %v4458, 16
      %v4779 = vpop.permute.xlu0 %4778
      %4780 = vrot.lane.b32.xlu0 %v4507, 16
      %v4781 = vpop.permute.xlu0 %4780
      %4782 = vrot.lane.b32.xlu0 %v4556, 16
      %v4783 = vpop.permute.xlu0 %4782
      %4784 = vrot.lane.b32.xlu0 %v4605, 16
      %v4785 = vpop.permute.xlu0 %4784
      %4786 = vrot.lane.b32.xlu0 %v4654, 16
      %v4787 = vpop.permute.xlu0 %4786
      %4788 = vrot.lane.b32.xlu0 %v4703, 16
      %v4789 = vpop.permute.xlu0 %4788
      %4790 = vrot.lane.b32.xlu0 %v4752, 16
      %v4791 = vpop.permute.xlu0 %4790
      %4792 = vrot.lane.b32.xlu0 %v4767, 16
      %v4793 = vpop.permute.xlu0 %4792
      %v4794 = vcombine.low %v891, %v347
      %v4796 = vunpack.c.l.s4 1966171168
      %v4797 = vunpack.c.0.s8 %v4796
      %v4798 = vlaneseq
      %v4799 = vshrl.u32 %v4798, 7
      %v4800 = vsub.s32 %v4797, %v4799
      %v4801 = vrot.slane %v4794, %v4800
      %v4802 = vcombine.low %v2004, %v4801
      %v4804 = vunpack.c.l.s4 1966171168
      %v4805 = vunpack.c.0.s8 %v4804
      %v4806 = vlaneseq
      %v4807 = vshrl.u32 %v4806, 7
      %v4808 = vsub.s32 %v4805, %v4807
      %v4809 = vrot.slane %v4802, %v4808
      %v4810 = vcombine.low %v2020, %v4809
      %v4811 = vcombine.low %v372, %v892
      %v4813 = vunpack.c.l.s4 1966171168
      %v4814 = vunpack.c.0.s8 %v4813
      %v4815 = vlaneseq
      %v4816 = vshrl.u32 %v4815, 7
      %v4817 = vsub.s32 %v4814, %v4816
      %v4818 = vrot.slane %v4811, %v4817
      %v4819 = vcombine.low %v4818, %v2060
      %v4821 = vunpack.c.l.s4 1966171168
      %v4822 = vunpack.c.0.s8 %v4821
      %v4823 = vlaneseq
      %v4824 = vshrl.u32 %v4823, 7
      %v4825 = vsub.s32 %v4822, %v4824
      %v4826 = vrot.slane %v4819, %v4825
      %v4827 = vcombine.low %v2069, %v4826
      %v4828 = vcombine.low %v893, %v441
      %v4830 = vunpack.c.l.s4 1966171168
      %v4831 = vunpack.c.0.s8 %v4830
      %v4832 = vlaneseq
      %v4833 = vshrl.u32 %v4832, 7
      %v4834 = vsub.s32 %v4831, %v4833
      %v4835 = vrot.slane %v4828, %v4834
      %v4836 = vcombine.low %v4835, %v2109
      %v4838 = vunpack.c.l.s4 1966171168
      %v4839 = vunpack.c.0.s8 %v4838
      %v4840 = vlaneseq
      %v4841 = vshrl.u32 %v4840, 7
      %v4842 = vsub.s32 %v4839, %v4841
      %v4843 = vrot.slane %v4836, %v4842
      %v4844 = vcombine.low %v2118, %v4843
      %v4845 = vcombine.low %v466, %v894
      %v4847 = vunpack.c.l.s4 1966171168
      %v4848 = vunpack.c.0.s8 %v4847
      %v4849 = vlaneseq
      %v4850 = vshrl.u32 %v4849, 7
      %v4851 = vsub.s32 %v4848, %v4850
      %v4852 = vrot.slane %v4845, %v4851
      %v4853 = vcombine.low %v2137, %v4852
      %v4855 = vunpack.c.l.s4 1966171168
      %v4856 = vunpack.c.0.s8 %v4855
      %v4857 = vlaneseq
      %v4858 = vshrl.u32 %v4857, 7
      %v4859 = vsub.s32 %v4856, %v4858
      %v4860 = vrot.slane %v4853, %v4859
      %v4861 = vcombine.low %v4860, %v2174
      %v4862 = vcombine.low %v895, %v535
      %v4864 = vunpack.c.l.s4 1966171168
      %v4865 = vunpack.c.0.s8 %v4864
      %v4866 = vlaneseq
      %v4867 = vshrl.u32 %v4866, 7
      %v4868 = vsub.s32 %v4865, %v4867
      %v4869 = vrot.slane %v4862, %v4868
      %v4870 = vcombine.low %v2186, %v4869
      %v4872 = vunpack.c.l.s4 1966171168
      %v4873 = vunpack.c.0.s8 %v4872
      %v4874 = vlaneseq
      %v4875 = vshrl.u32 %v4874, 7
      %v4876 = vsub.s32 %v4873, %v4875
      %v4877 = vrot.slane %v4870, %v4876
      %v4878 = vcombine.low %v4877, %v2223
      %v4879 = vcombine.low %v560, %v896
      %v4881 = vunpack.c.l.s4 1966171168
      %v4882 = vunpack.c.0.s8 %v4881
      %v4883 = vlaneseq
      %v4884 = vshrl.u32 %v4883, 7
      %v4885 = vsub.s32 %v4882, %v4884
      %v4886 = vrot.slane %v4879, %v4885
      %v4887 = vcombine.low %v4886, %v2242
      %v4889 = vunpack.c.l.s4 1966171168
      %v4890 = vunpack.c.0.s8 %v4889
      %v4891 = vlaneseq
      %v4892 = vshrl.u32 %v4891, 7
      %v4893 = vsub.s32 %v4890, %v4892
      %v4894 = vrot.slane %v4887, %v4893
      %v4895 = vcombine.low %v4894, %v2272
      %v4896 = vcombine.low %v897, %v629
      %v4897 = vcombine.low %v654, %v898
      %v4899 = vunpack.c.l.s4 1966171168
      %v4900 = vunpack.c.0.s8 %v4899
      %v4901 = vlaneseq
      %v4902 = vshrl.u32 %v4901, 7
      %v4903 = vsub.s32 %v4900, %v4902
      %v4904 = vrot.slane %v4896, %v4903
      %v4906 = vunpack.c.l.s4 1966171168
      %v4907 = vunpack.c.0.s8 %v4906
      %v4908 = vlaneseq
      %v4909 = vshrl.u32 %v4908, 7
      %v4910 = vsub.s32 %v4907, %v4909
      %v4911 = vrot.slane %v4897, %v4910
      %v4912 = vcombine.low %v4904, %v2291
      %v4913 = vcombine.low %v2298, %v4911
      %v4915 = vunpack.c.l.s4 1966171168
      %v4916 = vunpack.c.0.s8 %v4915
      %v4917 = vlaneseq
      %v4918 = vshrl.u32 %v4917, 7
      %v4919 = vsub.s32 %v4916, %v4918
      %v4920 = vrot.slane %v4912, %v4919
      %v4922 = vunpack.c.l.s4 1966171168
      %v4923 = vunpack.c.0.s8 %v4922
      %v4924 = vlaneseq
      %v4925 = vshrl.u32 %v4924, 7
      %v4926 = vsub.s32 %v4923, %v4925
      %v4927 = vrot.slane %v4913, %v4926
      %v4928 = vcombine.low %v4920, %v4927
      %v4929 = vcombine.low %v899, %v723
      %v4931 = vunpack.c.l.s4 1966171168
      %v4932 = vunpack.c.0.s8 %v4931
      %v4933 = vlaneseq
      %v4934 = vshrl.u32 %v4933, 7
      %v4935 = vsub.s32 %v4932, %v4934
      %v4936 = vrot.slane %v4929, %v4935
      %v4937 = vcombine.low %v2347, %v4936
      %v4939 = vunpack.c.l.s4 1966171168
      %v4940 = vunpack.c.0.s8 %v4939
      %v4941 = vlaneseq
      %v4942 = vshrl.u32 %v4941, 7
      %v4943 = vsub.s32 %v4940, %v4942
      %v4944 = vrot.slane %v4937, %v4943
      %v4945 = vcombine.low %v2363, %v4944
      %v4946 = vcombine.low %v748, %v900
      %v4948 = vunpack.c.l.s4 1966171168
      %v4949 = vunpack.c.0.s8 %v4948
      %v4950 = vlaneseq
      %v4951 = vshrl.u32 %v4950, 7
      %v4952 = vsub.s32 %v4949, %v4951
      %v4953 = vrot.slane %v4946, %v4952
      %v4954 = vcombine.low %v4953, %v2403
      %v4956 = vunpack.c.l.s4 1966171168
      %v4957 = vunpack.c.0.s8 %v4956
      %v4958 = vlaneseq
      %v4959 = vshrl.u32 %v4958, 7
      %v4960 = vsub.s32 %v4957, %v4959
      %v4961 = vrot.slane %v4954, %v4960
      %v4962 = vcombine.low %v2412, %v4961
      %v4963 = vcombine.low %v901, %v817
      %v4965 = vunpack.c.l.s4 1966171168
      %v4966 = vunpack.c.0.s8 %v4965
      %v4967 = vlaneseq
      %v4968 = vshrl.u32 %v4967, 7
      %v4969 = vsub.s32 %v4966, %v4968
      %v4970 = vrot.slane %v4963, %v4969
      %v4971 = vcombine.low %v4970, %v2452
      %v4973 = vunpack.c.l.s4 1966171168
      %v4974 = vunpack.c.0.s8 %v4973
      %v4975 = vlaneseq
      %v4976 = vshrl.u32 %v4975, 7
      %v4977 = vsub.s32 %v4974, %v4976
      %v4978 = vrot.slane %v4971, %v4977
      %v4979 = vcombine.low %v2461, %v4978
      %v4980 = vcombine.low %v842, %v902
      %v4982 = vunpack.c.l.s4 1966171168
      %v4983 = vunpack.c.0.s8 %v4982
      %v4984 = vlaneseq
      %v4985 = vshrl.u32 %v4984, 7
      %v4986 = vsub.s32 %v4983, %v4985
      %v4987 = vrot.slane %v4980, %v4986
      %v4988 = vcombine.low %v2480, %v4987
      %v4990 = vunpack.c.l.s4 1966171168
      %v4991 = vunpack.c.0.s8 %v4990
      %v4992 = vlaneseq
      %v4993 = vshrl.u32 %v4992, 7
      %v4994 = vsub.s32 %v4991, %v4993
      %v4995 = vrot.slane %v4988, %v4994
      %v4996 = vcombine.low %v4995, %v2517
      %v4997 = vcombine.low %v903, %v1740
      %v4998 = vcombine.low %v1741, %v1742
      %v4999 = vcombine.low %v1757, %v1764
      %v5001 = vunpack.c.l.s4 1966171168
      %v5002 = vunpack.c.0.s8 %v5001
      %v5003 = vlaneseq
      %v5004 = vshrl.u32 %v5003, 7
      %v5005 = vsub.s32 %v5002, %v5004
      %v5006 = vrot.slane %v4997, %v5005
      %v5008 = vunpack.c.l.s4 1966171168
      %v5009 = vunpack.c.0.s8 %v5008
      %v5010 = vlaneseq
      %v5011 = vshrl.u32 %v5010, 7
      %v5012 = vsub.s32 %v5009, %v5011
      %v5013 = vrot.slane %v4998, %v5012
      %v5015 = vunpack.c.l.s4 1966171168
      %v5016 = vunpack.c.0.s8 %v5015
      %v5017 = vlaneseq
      %v5018 = vshrl.u32 %v5017, 7
      %v5019 = vsub.s32 %v5016, %v5018
      %v5020 = vrot.slane %v4999, %v5019
      %v5021 = vcombine.low %v2526, %v5006
      %v5022 = vcombine.low %v5013, %v5020
      %v5024 = vunpack.c.l.s4 1966171168
      %v5025 = vunpack.c.0.s8 %v5024
      %v5026 = vlaneseq
      %v5027 = vshrl.u32 %v5026, 7
      %v5028 = vsub.s32 %v5025, %v5027
      %v5029 = vrot.slane %v5021, %v5028
      %v5031 = vunpack.c.l.s4 1966171168
      %v5032 = vunpack.c.0.s8 %v5031
      %v5033 = vlaneseq
      %v5034 = vshrl.u32 %v5033, 7
      %v5035 = vsub.s32 %v5032, %v5034
      %v5036 = vrot.slane %v5022, %v5035
      %v5037 = vcombine.low %v5029, %v5036
      %v5038 = vcombine.low %v1765, %v1766
      %v5040 = vunpack.c.l.s4 1966171168
      %v5041 = vunpack.c.0.s8 %v5040
      %v5042 = vlaneseq
      %v5043 = vshrl.u32 %v5042, 7
      %v5044 = vsub.s32 %v5041, %v5043
      %v5045 = vrot.slane %v5038, %v5044
      %v5047 = vunpack.c.l.s4 1966171168
      %v5048 = vunpack.c.0.s8 %v5047
      %v5049 = vlaneseq
      %v5050 = vshrl.u32 %v5049, 7
      %v5051 = vsub.s32 %v5048, %v5050
      %v5052 = vrot.slane %v5045, %v5051
      %5053 = vrot.lane.b32.xlu0 %v4810, 20
      %v5054 = vpop.permute.xlu0 %5053
      %5055 = vrot.lane.b32.xlu0 %v4827, 20
      %v5056 = vpop.permute.xlu0 %5055
      %5057 = vrot.lane.b32.xlu0 %v4844, 20
      %v5058 = vpop.permute.xlu0 %5057
      %5059 = vrot.lane.b32.xlu0 %v4861, 20
      %v5060 = vpop.permute.xlu0 %5059
      %5061 = vrot.lane.b32.xlu0 %v4878, 20
      %v5062 = vpop.permute.xlu0 %5061
      %5063 = vrot.lane.b32.xlu0 %v4895, 20
      %v5064 = vpop.permute.xlu0 %5063
      %5065 = vrot.lane.b32.xlu0 %v4928, 20
      %v5066 = vpop.permute.xlu0 %5065
      %5067 = vrot.lane.b32.xlu0 %v4945, 20
      %v5068 = vpop.permute.xlu0 %5067
      %5069 = vrot.lane.b32.xlu0 %v4962, 20
      %v5070 = vpop.permute.xlu0 %5069
      %5071 = vrot.lane.b32.xlu0 %v4979, 20
      %v5072 = vpop.permute.xlu0 %5071
      %5073 = vrot.lane.b32.xlu0 %v4996, 20
      %v5074 = vpop.permute.xlu0 %5073
      %5075 = vrot.lane.b32.xlu0 %v5037, 20
      %v5076 = vpop.permute.xlu0 %5075
      %5077 = vrot.lane.b32.xlu0 %v5052, 20
      %v5078 = vpop.permute.xlu0 %5077
      %v5079 = vcombine.low %v2011, %v2039
      %v5080 = vcombine.low %v2046, %v2053
      %v5082 = vunpack.c.l.s4 1966171168
      %v5083 = vunpack.c.0.s8 %v5082
      %v5084 = vlaneseq
      %v5085 = vshrl.u32 %v5084, 7
      %v5086 = vsub.s32 %v5083, %v5085
      %v5087 = vrot.slane %v5079, %v5086
      %v5089 = vunpack.c.l.s4 1966171168
      %v5090 = vunpack.c.0.s8 %v5089
      %v5091 = vlaneseq
      %v5092 = vshrl.u32 %v5091, 7
      %v5093 = vsub.s32 %v5090, %v5092
      %v5094 = vrot.slane %v5080, %v5093
      %v5095 = vcombine.low %v5087, %v5094
      %v5096 = vcombine.low %v2060, %v2088
      %v5097 = vcombine.low %v2095, %v2102
      %v5099 = vunpack.c.l.s4 1966171168
      %v5100 = vunpack.c.0.s8 %v5099
      %v5101 = vlaneseq
      %v5102 = vshrl.u32 %v5101, 7
      %v5103 = vsub.s32 %v5100, %v5102
      %v5104 = vrot.slane %v5096, %v5103
      %v5106 = vunpack.c.l.s4 1966171168
      %v5107 = vunpack.c.0.s8 %v5106
      %v5108 = vlaneseq
      %v5109 = vshrl.u32 %v5108, 7
      %v5110 = vsub.s32 %v5107, %v5109
      %v5111 = vrot.slane %v5097, %v5110
      %v5112 = vcombine.low %v5104, %v5111
      %v5113 = vcombine.low %v2109, %v2137
      %v5114 = vcombine.low %v2144, %v2151
      %v5116 = vunpack.c.l.s4 1966171168
      %v5117 = vunpack.c.0.s8 %v5116
      %v5118 = vlaneseq
      %v5119 = vshrl.u32 %v5118, 7
      %v5120 = vsub.s32 %v5117, %v5119
      %v5121 = vrot.slane %v5113, %v5120
      %v5123 = vunpack.c.l.s4 1966171168
      %v5124 = vunpack.c.0.s8 %v5123
      %v5125 = vlaneseq
      %v5126 = vshrl.u32 %v5125, 7
      %v5127 = vsub.s32 %v5124, %v5126
      %v5128 = vrot.slane %v5114, %v5127
      %v5129 = vcombine.low %v5121, %v5128
      %v5130 = vcombine.low %v2158, %v2186
      %v5131 = vcombine.low %v2193, %v2200
      %v5133 = vunpack.c.l.s4 1966171168
      %v5134 = vunpack.c.0.s8 %v5133
      %v5135 = vlaneseq
      %v5136 = vshrl.u32 %v5135, 7
      %v5137 = vsub.s32 %v5134, %v5136
      %v5138 = vrot.slane %v5130, %v5137
      %v5140 = vunpack.c.l.s4 1966171168
      %v5141 = vunpack.c.0.s8 %v5140
      %v5142 = vlaneseq
      %v5143 = vshrl.u32 %v5142, 7
      %v5144 = vsub.s32 %v5141, %v5143
      %v5145 = vrot.slane %v5131, %v5144
      %v5146 = vcombine.low %v5138, %v5145
      %v5147 = vcombine.low %v2207, %v2235
      %v5148 = vcombine.low %v2242, %v2249
      %v5150 = vunpack.c.l.s4 1966171168
      %v5151 = vunpack.c.0.s8 %v5150
      %v5152 = vlaneseq
      %v5153 = vshrl.u32 %v5152, 7
      %v5154 = vsub.s32 %v5151, %v5153
      %v5155 = vrot.slane %v5147, %v5154
      %v5157 = vunpack.c.l.s4 1966171168
      %v5158 = vunpack.c.0.s8 %v5157
      %v5159 = vlaneseq
      %v5160 = vshrl.u32 %v5159, 7
      %v5161 = vsub.s32 %v5158, %v5160
      %v5162 = vrot.slane %v5148, %v5161
      %v5163 = vcombine.low %v5155, %v5162
      %v5164 = vcombine.low %v2256, %v2284
      %v5165 = vcombine.low %v2291, %v2298
      %v5167 = vunpack.c.l.s4 1966171168
      %v5168 = vunpack.c.0.s8 %v5167
      %v5169 = vlaneseq
      %v5170 = vshrl.u32 %v5169, 7
      %v5171 = vsub.s32 %v5168, %v5170
      %v5172 = vrot.slane %v5164, %v5171
      %v5174 = vunpack.c.l.s4 1966171168
      %v5175 = vunpack.c.0.s8 %v5174
      %v5176 = vlaneseq
      %v5177 = vshrl.u32 %v5176, 7
      %v5178 = vsub.s32 %v5175, %v5177
      %v5179 = vrot.slane %v5165, %v5178
      %v5180 = vcombine.low %v5172, %v5179
      %v5181 = vcombine.low %v2305, %v2333
      %v5182 = vcombine.low %v2340, %v2347
      %v5184 = vunpack.c.l.s4 1966171168
      %v5185 = vunpack.c.0.s8 %v5184
      %v5186 = vlaneseq
      %v5187 = vshrl.u32 %v5186, 7
      %v5188 = vsub.s32 %v5185, %v5187
      %v5189 = vrot.slane %v5181, %v5188
      %v5191 = vunpack.c.l.s4 1966171168
      %v5192 = vunpack.c.0.s8 %v5191
      %v5193 = vlaneseq
      %v5194 = vshrl.u32 %v5193, 7
      %v5195 = vsub.s32 %v5192, %v5194
      %v5196 = vrot.slane %v5182, %v5195
      %v5197 = vcombine.low %v5189, %v5196
      %v5198 = vcombine.low %v2354, %v2382
      %v5199 = vcombine.low %v2389, %v2396
      %v5201 = vunpack.c.l.s4 1966171168
      %v5202 = vunpack.c.0.s8 %v5201
      %v5203 = vlaneseq
      %v5204 = vshrl.u32 %v5203, 7
      %v5205 = vsub.s32 %v5202, %v5204
      %v5206 = vrot.slane %v5198, %v5205
      %v5208 = vunpack.c.l.s4 1966171168
      %v5209 = vunpack.c.0.s8 %v5208
      %v5210 = vlaneseq
      %v5211 = vshrl.u32 %v5210, 7
      %v5212 = vsub.s32 %v5209, %v5211
      %v5213 = vrot.slane %v5199, %v5212
      %v5214 = vcombine.low %v5206, %v5213
      %v5215 = vcombine.low %v2403, %v2431
      %v5216 = vcombine.low %v2438, %v2445
      %v5218 = vunpack.c.l.s4 1966171168
      %v5219 = vunpack.c.0.s8 %v5218
      %v5220 = vlaneseq
      %v5221 = vshrl.u32 %v5220, 7
      %v5222 = vsub.s32 %v5219, %v5221
      %v5223 = vrot.slane %v5215, %v5222
      %v5225 = vunpack.c.l.s4 1966171168
      %v5226 = vunpack.c.0.s8 %v5225
      %v5227 = vlaneseq
      %v5228 = vshrl.u32 %v5227, 7
      %v5229 = vsub.s32 %v5226, %v5228
      %v5230 = vrot.slane %v5216, %v5229
      %v5231 = vcombine.low %v5223, %v5230
      %v5232 = vcombine.low %v2452, %v2480
      %v5233 = vcombine.low %v2487, %v2494
      %v5235 = vunpack.c.l.s4 1966171168
      %v5236 = vunpack.c.0.s8 %v5235
      %v5237 = vlaneseq
      %v5238 = vshrl.u32 %v5237, 7
      %v5239 = vsub.s32 %v5236, %v5238
      %v5240 = vrot.slane %v5232, %v5239
      %v5242 = vunpack.c.l.s4 1966171168
      %v5243 = vunpack.c.0.s8 %v5242
      %v5244 = vlaneseq
      %v5245 = vshrl.u32 %v5244, 7
      %v5246 = vsub.s32 %v5243, %v5245
      %v5247 = vrot.slane %v5233, %v5246
      %v5248 = vcombine.low %v5240, %v5247
      %v5249 = vcombine.low %v1733, %v1740
      %v5251 = vunpack.c.l.s4 1966171168
      %v5252 = vunpack.c.0.s8 %v5251
      %v5253 = vlaneseq
      %v5254 = vshrl.u32 %v5253, 7
      %v5255 = vsub.s32 %v5252, %v5254
      %v5256 = vrot.slane %v5249, %v5255
      %v5257 = vcombine.low %v2501, %v2526
      %v5258 = vcombine.low %v5256, %v5013
      %v5260 = vunpack.c.l.s4 1966171168
      %v5261 = vunpack.c.0.s8 %v5260
      %v5262 = vlaneseq
      %v5263 = vshrl.u32 %v5262, 7
      %v5264 = vsub.s32 %v5261, %v5263
      %v5265 = vrot.slane %v5257, %v5264
      %v5267 = vunpack.c.l.s4 1966171168
      %v5268 = vunpack.c.0.s8 %v5267
      %v5269 = vlaneseq
      %v5270 = vshrl.u32 %v5269, 7
      %v5271 = vsub.s32 %v5268, %v5270
      %v5272 = vrot.slane %v5258, %v5271
      %v5273 = vcombine.low %v5265, %v5272
      %v5274 = vcombine.low %v1765, %v1840
      %v5275 = vcombine.low %v1847, %v1848
      %v5276 = vcombine.low %v1849, %v1864
      %v5278 = vunpack.c.l.s4 1966171168
      %v5279 = vunpack.c.0.s8 %v5278
      %v5280 = vlaneseq
      %v5281 = vshrl.u32 %v5280, 7
      %v5282 = vsub.s32 %v5279, %v5281
      %v5283 = vrot.slane %v5274, %v5282
      %v5285 = vunpack.c.l.s4 1966171168
      %v5286 = vunpack.c.0.s8 %v5285
      %v5287 = vlaneseq
      %v5288 = vshrl.u32 %v5287, 7
      %v5289 = vsub.s32 %v5286, %v5288
      %v5290 = vrot.slane %v5275, %v5289
      %v5292 = vunpack.c.l.s4 1966171168
      %v5293 = vunpack.c.0.s8 %v5292
      %v5294 = vlaneseq
      %v5295 = vshrl.u32 %v5294, 7
      %v5296 = vsub.s32 %v5293, %v5295
      %v5297 = vrot.slane %v5276, %v5296
      %v5298 = vcombine.low %v5020, %v5283
      %v5299 = vcombine.low %v5290, %v5297
      %v5301 = vunpack.c.l.s4 1966171168
      %v5302 = vunpack.c.0.s8 %v5301
      %v5303 = vlaneseq
      %v5304 = vshrl.u32 %v5303, 7
      %v5305 = vsub.s32 %v5302, %v5304
      %v5306 = vrot.slane %v5298, %v5305
      %v5308 = vunpack.c.l.s4 1966171168
      %v5309 = vunpack.c.0.s8 %v5308
      %v5310 = vlaneseq
      %v5311 = vshrl.u32 %v5310, 7
      %v5312 = vsub.s32 %v5309, %v5311
      %v5313 = vrot.slane %v5299, %v5312
      %v5314 = vcombine.low %v5306, %v5313
      %v5315 = vcombine.low %v1871, %v1872
      %v5317 = vunpack.c.l.s4 1966171168
      %v5318 = vunpack.c.0.s8 %v5317
      %v5319 = vlaneseq
      %v5320 = vshrl.u32 %v5319, 7
      %v5321 = vsub.s32 %v5318, %v5320
      %v5322 = vrot.slane %v5315, %v5321
      %v5324 = vunpack.c.l.s4 1966171168
      %v5325 = vunpack.c.0.s8 %v5324
      %v5326 = vlaneseq
      %v5327 = vshrl.u32 %v5326, 7
      %v5328 = vsub.s32 %v5325, %v5327
      %v5329 = vrot.slane %v5322, %v5328
      %5330 = vrot.lane.b32.xlu0 %v5095, 24
      %v5331 = vpop.permute.xlu0 %5330
      %5332 = vrot.lane.b32.xlu0 %v5112, 24
      %v5333 = vpop.permute.xlu0 %5332
      %5334 = vrot.lane.b32.xlu0 %v5129, 24
      %v5335 = vpop.permute.xlu0 %5334
      %5336 = vrot.lane.b32.xlu0 %v5146, 24
      %v5337 = vpop.permute.xlu0 %5336
      %5338 = vrot.lane.b32.xlu0 %v5163, 24
      %v5339 = vpop.permute.xlu0 %5338
      %5340 = vrot.lane.b32.xlu0 %v5180, 24
      %v5341 = vpop.permute.xlu0 %5340
      %5342 = vrot.lane.b32.xlu0 %v5197, 24
      %v5343 = vpop.permute.xlu0 %5342
      %5344 = vrot.lane.b32.xlu0 %v5214, 24
      %v5345 = vpop.permute.xlu0 %5344
      %5346 = vrot.lane.b32.xlu0 %v5231, 24
      %v5347 = vpop.permute.xlu0 %5346
      %5348 = vrot.lane.b32.xlu0 %v5248, 24
      %v5349 = vpop.permute.xlu0 %5348
      %5350 = vrot.lane.b32.xlu0 %v5273, 24
      %v5351 = vpop.permute.xlu0 %5350
      %5352 = vrot.lane.b32.xlu0 %v5314, 24
      %v5353 = vpop.permute.xlu0 %5352
      %5354 = vrot.lane.b32.xlu0 %v5329, 24
      %v5355 = vpop.permute.xlu0 %5354
      %v5356 = vcombine.low %v2614, %v2642
      %v5357 = vcombine.low %v2649, %v2656
      %v5359 = vunpack.c.l.s4 1966171168
      %v5360 = vunpack.c.0.s8 %v5359
      %v5361 = vlaneseq
      %v5362 = vshrl.u32 %v5361, 7
      %v5363 = vsub.s32 %v5360, %v5362
      %v5364 = vrot.slane %v5356, %v5363
      %v5366 = vunpack.c.l.s4 1966171168
      %v5367 = vunpack.c.0.s8 %v5366
      %v5368 = vlaneseq
      %v5369 = vshrl.u32 %v5368, 7
      %v5370 = vsub.s32 %v5367, %v5369
      %v5371 = vrot.slane %v5357, %v5370
      %v5372 = vcombine.low %v5364, %v5371
      %v5373 = vcombine.low %v2663, %v2691
      %v5374 = vcombine.low %v2698, %v2705
      %v5376 = vunpack.c.l.s4 1966171168
      %v5377 = vunpack.c.0.s8 %v5376
      %v5378 = vlaneseq
      %v5379 = vshrl.u32 %v5378, 7
      %v5380 = vsub.s32 %v5377, %v5379
      %v5381 = vrot.slane %v5373, %v5380
      %v5383 = vunpack.c.l.s4 1966171168
      %v5384 = vunpack.c.0.s8 %v5383
      %v5385 = vlaneseq
      %v5386 = vshrl.u32 %v5385, 7
      %v5387 = vsub.s32 %v5384, %v5386
      %v5388 = vrot.slane %v5374, %v5387
      %v5389 = vcombine.low %v5381, %v5388
      %v5390 = vcombine.low %v2712, %v2740
      %v5391 = vcombine.low %v2747, %v2754
      %v5393 = vunpack.c.l.s4 1966171168
      %v5394 = vunpack.c.0.s8 %v5393
      %v5395 = vlaneseq
      %v5396 = vshrl.u32 %v5395, 7
      %v5397 = vsub.s32 %v5394, %v5396
      %v5398 = vrot.slane %v5390, %v5397
      %v5400 = vunpack.c.l.s4 1966171168
      %v5401 = vunpack.c.0.s8 %v5400
      %v5402 = vlaneseq
      %v5403 = vshrl.u32 %v5402, 7
      %v5404 = vsub.s32 %v5401, %v5403
      %v5405 = vrot.slane %v5391, %v5404
      %v5406 = vcombine.low %v5398, %v5405
      %v5407 = vcombine.low %v2761, %v2789
      %v5408 = vcombine.low %v2796, %v2803
      %v5410 = vunpack.c.l.s4 1966171168
      %v5411 = vunpack.c.0.s8 %v5410
      %v5412 = vlaneseq
      %v5413 = vshrl.u32 %v5412, 7
      %v5414 = vsub.s32 %v5411, %v5413
      %v5415 = vrot.slane %v5407, %v5414
      %v5417 = vunpack.c.l.s4 1966171168
      %v5418 = vunpack.c.0.s8 %v5417
      %v5419 = vlaneseq
      %v5420 = vshrl.u32 %v5419, 7
      %v5421 = vsub.s32 %v5418, %v5420
      %v5422 = vrot.slane %v5408, %v5421
      %v5423 = vcombine.low %v5415, %v5422
      %v5424 = vcombine.low %v2810, %v2838
      %v5425 = vcombine.low %v2845, %v2852
      %v5427 = vunpack.c.l.s4 1966171168
      %v5428 = vunpack.c.0.s8 %v5427
      %v5429 = vlaneseq
      %v5430 = vshrl.u32 %v5429, 7
      %v5431 = vsub.s32 %v5428, %v5430
      %v5432 = vrot.slane %v5424, %v5431
      %v5434 = vunpack.c.l.s4 1966171168
      %v5435 = vunpack.c.0.s8 %v5434
      %v5436 = vlaneseq
      %v5437 = vshrl.u32 %v5436, 7
      %v5438 = vsub.s32 %v5435, %v5437
      %v5439 = vrot.slane %v5425, %v5438
      %v5440 = vcombine.low %v5432, %v5439
      %v5441 = vcombine.low %v2859, %v2887
      %v5442 = vcombine.low %v2894, %v2901
      %v5444 = vunpack.c.l.s4 1966171168
      %v5445 = vunpack.c.0.s8 %v5444
      %v5446 = vlaneseq
      %v5447 = vshrl.u32 %v5446, 7
      %v5448 = vsub.s32 %v5445, %v5447
      %v5449 = vrot.slane %v5441, %v5448
      %v5451 = vunpack.c.l.s4 1966171168
      %v5452 = vunpack.c.0.s8 %v5451
      %v5453 = vlaneseq
      %v5454 = vshrl.u32 %v5453, 7
      %v5455 = vsub.s32 %v5452, %v5454
      %v5456 = vrot.slane %v5442, %v5455
      %v5457 = vcombine.low %v5449, %v5456
      %v5458 = vcombine.low %v2908, %v2936
      %v5459 = vcombine.low %v2943, %v2950
      %v5461 = vunpack.c.l.s4 1966171168
      %v5462 = vunpack.c.0.s8 %v5461
      %v5463 = vlaneseq
      %v5464 = vshrl.u32 %v5463, 7
      %v5465 = vsub.s32 %v5462, %v5464
      %v5466 = vrot.slane %v5458, %v5465
      %v5468 = vunpack.c.l.s4 1966171168
      %v5469 = vunpack.c.0.s8 %v5468
      %v5470 = vlaneseq
      %v5471 = vshrl.u32 %v5470, 7
      %v5472 = vsub.s32 %v5469, %v5471
      %v5473 = vrot.slane %v5459, %v5472
      %v5474 = vcombine.low %v5466, %v5473
      %v5475 = vcombine.low %v2957, %v2985
      %v5476 = vcombine.low %v2992, %v2999
      %v5478 = vunpack.c.l.s4 1966171168
      %v5479 = vunpack.c.0.s8 %v5478
      %v5480 = vlaneseq
      %v5481 = vshrl.u32 %v5480, 7
      %v5482 = vsub.s32 %v5479, %v5481
      %v5483 = vrot.slane %v5475, %v5482
      %v5485 = vunpack.c.l.s4 1966171168
      %v5486 = vunpack.c.0.s8 %v5485
      %v5487 = vlaneseq
      %v5488 = vshrl.u32 %v5487, 7
      %v5489 = vsub.s32 %v5486, %v5488
      %v5490 = vrot.slane %v5476, %v5489
      %v5491 = vcombine.low %v5483, %v5490
      %v5492 = vcombine.low %v3006, %v3034
      %v5493 = vcombine.low %v3041, %v3048
      %v5495 = vunpack.c.l.s4 1966171168
      %v5496 = vunpack.c.0.s8 %v5495
      %v5497 = vlaneseq
      %v5498 = vshrl.u32 %v5497, 7
      %v5499 = vsub.s32 %v5496, %v5498
      %v5500 = vrot.slane %v5492, %v5499
      %v5502 = vunpack.c.l.s4 1966171168
      %v5503 = vunpack.c.0.s8 %v5502
      %v5504 = vlaneseq
      %v5505 = vshrl.u32 %v5504, 7
      %v5506 = vsub.s32 %v5503, %v5505
      %v5507 = vrot.slane %v5493, %v5506
      %v5508 = vcombine.low %v5500, %v5507
      %v5509 = vcombine.low %v3055, %v3083
      %v5510 = vcombine.low %v3090, %v3097
      %v5512 = vunpack.c.l.s4 1966171168
      %v5513 = vunpack.c.0.s8 %v5512
      %v5514 = vlaneseq
      %v5515 = vshrl.u32 %v5514, 7
      %v5516 = vsub.s32 %v5513, %v5515
      %v5517 = vrot.slane %v5509, %v5516
      %v5519 = vunpack.c.l.s4 1966171168
      %v5520 = vunpack.c.0.s8 %v5519
      %v5521 = vlaneseq
      %v5522 = vshrl.u32 %v5521, 7
      %v5523 = vsub.s32 %v5520, %v5522
      %v5524 = vrot.slane %v5510, %v5523
      %v5525 = vcombine.low %v5517, %v5524
      %v5526 = vcombine.low %v1775, %v1783
      %v5527 = vcombine.low %v1791, %v1799
      %v5529 = vunpack.c.l.s4 1966171168
      %v5530 = vunpack.c.0.s8 %v5529
      %v5531 = vlaneseq
      %v5532 = vshrl.u32 %v5531, 7
      %v5533 = vsub.s32 %v5530, %v5532
      %v5534 = vrot.slane %v5526, %v5533
      %v5536 = vunpack.c.l.s4 1966171168
      %v5537 = vunpack.c.0.s8 %v5536
      %v5538 = vlaneseq
      %v5539 = vshrl.u32 %v5538, 7
      %v5540 = vsub.s32 %v5537, %v5539
      %v5541 = vrot.slane %v5527, %v5540
      %v5542 = vcombine.low %v3104, %v3129
      %v5543 = vcombine.low %v5534, %v5541
      %v5545 = vunpack.c.l.s4 1966171168
      %v5546 = vunpack.c.0.s8 %v5545
      %v5547 = vlaneseq
      %v5548 = vshrl.u32 %v5547, 7
      %v5549 = vsub.s32 %v5546, %v5548
      %v5550 = vrot.slane %v5542, %v5549
      %v5552 = vunpack.c.l.s4 1966171168
      %v5553 = vunpack.c.0.s8 %v5552
      %v5554 = vlaneseq
      %v5555 = vshrl.u32 %v5554, 7
      %v5556 = vsub.s32 %v5553, %v5555
      %v5557 = vrot.slane %v5543, %v5556
      %v5558 = vcombine.low %v5550, %v5557
      %v5559 = vcombine.low %v1807, %v1815
      %v5560 = vcombine.low %v1823, %v1882
      %v5561 = vcombine.low %v1890, %v1898
      %v5562 = vcombine.low %v1906, %v1914
      %v5564 = vunpack.c.l.s4 1966171168
      %v5565 = vunpack.c.0.s8 %v5564
      %v5566 = vlaneseq
      %v5567 = vshrl.u32 %v5566, 7
      %v5568 = vsub.s32 %v5565, %v5567
      %v5569 = vrot.slane %v5559, %v5568
      %v5571 = vunpack.c.l.s4 1966171168
      %v5572 = vunpack.c.0.s8 %v5571
      %v5573 = vlaneseq
      %v5574 = vshrl.u32 %v5573, 7
      %v5575 = vsub.s32 %v5572, %v5574
      %v5576 = vrot.slane %v5560, %v5575
      %v5578 = vunpack.c.l.s4 1966171168
      %v5579 = vunpack.c.0.s8 %v5578
      %v5580 = vlaneseq
      %v5581 = vshrl.u32 %v5580, 7
      %v5582 = vsub.s32 %v5579, %v5581
      %v5583 = vrot.slane %v5561, %v5582
      %v5585 = vunpack.c.l.s4 1966171168
      %v5586 = vunpack.c.0.s8 %v5585
      %v5587 = vlaneseq
      %v5588 = vshrl.u32 %v5587, 7
      %v5589 = vsub.s32 %v5586, %v5588
      %v5590 = vrot.slane %v5562, %v5589
      %v5591 = vcombine.low %v5569, %v5576
      %v5592 = vcombine.low %v5583, %v5590
      %v5594 = vunpack.c.l.s4 1966171168
      %v5595 = vunpack.c.0.s8 %v5594
      %v5596 = vlaneseq
      %v5597 = vshrl.u32 %v5596, 7
      %v5598 = vsub.s32 %v5595, %v5597
      %v5599 = vrot.slane %v5591, %v5598
      %v5601 = vunpack.c.l.s4 1966171168
      %v5602 = vunpack.c.0.s8 %v5601
      %v5603 = vlaneseq
      %v5604 = vshrl.u32 %v5603, 7
      %v5605 = vsub.s32 %v5602, %v5604
      %v5606 = vrot.slane %v5592, %v5605
      %v5607 = vcombine.low %v5599, %v5606
      %v5608 = vcombine.low %v1922, %v1930
      %v5610 = vunpack.c.l.s4 1966171168
      %v5611 = vunpack.c.0.s8 %v5610
      %v5612 = vlaneseq
      %v5613 = vshrl.u32 %v5612, 7
      %v5614 = vsub.s32 %v5611, %v5613
      %v5615 = vrot.slane %v5608, %v5614
      %v5617 = vunpack.c.l.s4 1966171168
      %v5618 = vunpack.c.0.s8 %v5617
      %v5619 = vlaneseq
      %v5620 = vshrl.u32 %v5619, 7
      %v5621 = vsub.s32 %v5618, %v5620
      %v5622 = vrot.slane %v5615, %v5621
      %5623 = vrot.lane.b32.xlu0 %v5372, 28
      %v5624 = vpop.permute.xlu0 %5623
      %5625 = vrot.lane.b32.xlu0 %v5389, 28
      %v5626 = vpop.permute.xlu0 %5625
      %5627 = vrot.lane.b32.xlu0 %v5406, 28
      %v5628 = vpop.permute.xlu0 %5627
      %5629 = vrot.lane.b32.xlu0 %v5423, 28
      %v5630 = vpop.permute.xlu0 %5629
      %5631 = vrot.lane.b32.xlu0 %v5440, 28
      %v5632 = vpop.permute.xlu0 %5631
      %5633 = vrot.lane.b32.xlu0 %v5457, 28
      %v5634 = vpop.permute.xlu0 %5633
      %5635 = vrot.lane.b32.xlu0 %v5474, 28
      %v5636 = vpop.permute.xlu0 %5635
      %5637 = vrot.lane.b32.xlu0 %v5491, 28
      %v5638 = vpop.permute.xlu0 %5637
      %5639 = vrot.lane.b32.xlu0 %v5508, 28
      %v5640 = vpop.permute.xlu0 %5639
      %5641 = vrot.lane.b32.xlu0 %v5525, 28
      %v5642 = vpop.permute.xlu0 %5641
      %5643 = vrot.lane.b32.xlu0 %v5558, 28
      %v5644 = vpop.permute.xlu0 %5643
      %5645 = vrot.lane.b32.xlu0 %v5607, 28
      %v5646 = vpop.permute.xlu0 %5645
      %5647 = vrot.lane.b32.xlu0 %v5622, 28
      %v5648 = vpop.permute.xlu0 %5647
      %v5649 = vcombine.low %v3278, %v3285
      %v5651 = vunpack.c.l.s4 1966171168
      %v5652 = vunpack.c.0.s8 %v5651
      %v5653 = vlaneseq
      %v5654 = vshrl.u32 %v5653, 7
      %v5655 = vsub.s32 %v5652, %v5654
      %v5656 = vrot.slane %v5649, %v5655
      %v5657 = vcombine.low %v3841, %v5656
      %v5658 = vcombine.low %v3327, %v3334
      %v5660 = vunpack.c.l.s4 1966171168
      %v5661 = vunpack.c.0.s8 %v5660
      %v5662 = vlaneseq
      %v5663 = vshrl.u32 %v5662, 7
      %v5664 = vsub.s32 %v5661, %v5663
      %v5665 = vrot.slane %v5658, %v5664
      %v5666 = vcombine.low %v3866, %v5665
      %v5667 = vcombine.low %v3376, %v3383
      %v5669 = vunpack.c.l.s4 1966171168
      %v5670 = vunpack.c.0.s8 %v5669
      %v5671 = vlaneseq
      %v5672 = vshrl.u32 %v5671, 7
      %v5673 = vsub.s32 %v5670, %v5672
      %v5674 = vrot.slane %v5667, %v5673
      %v5675 = vcombine.low %v3891, %v5674
      %v5676 = vcombine.low %v3390, %v3418
      %v5678 = vunpack.c.l.s4 1966171168
      %v5679 = vunpack.c.0.s8 %v5678
      %v5680 = vlaneseq
      %v5681 = vshrl.u32 %v5680, 7
      %v5682 = vsub.s32 %v5679, %v5681
      %v5683 = vrot.slane %v5676, %v5682
      %v5684 = vcombine.low %v5683, %v3923
      %v5685 = vcombine.low %v3439, %v3467
      %v5687 = vunpack.c.l.s4 1966171168
      %v5688 = vunpack.c.0.s8 %v5687
      %v5689 = vlaneseq
      %v5690 = vshrl.u32 %v5689, 7
      %v5691 = vsub.s32 %v5688, %v5690
      %v5692 = vrot.slane %v5685, %v5691
      %v5693 = vcombine.low %v5692, %v3948
      %v5694 = vcombine.low %v3488, %v3516
      %v5696 = vunpack.c.l.s4 1966171168
      %v5697 = vunpack.c.0.s8 %v5696
      %v5698 = vlaneseq
      %v5699 = vshrl.u32 %v5698, 7
      %v5700 = vsub.s32 %v5697, %v5699
      %v5701 = vrot.slane %v5694, %v5700
      %v5702 = vcombine.low %v5701, %v3973
      %v5703 = vcombine.low %v3537, %v3565
      %v5704 = vcombine.low %v3572, %v3579
      %v5706 = vunpack.c.l.s4 1966171168
      %v5707 = vunpack.c.0.s8 %v5706
      %v5708 = vlaneseq
      %v5709 = vshrl.u32 %v5708, 7
      %v5710 = vsub.s32 %v5707, %v5709
      %v5711 = vrot.slane %v5703, %v5710
      %v5713 = vunpack.c.l.s4 1966171168
      %v5714 = vunpack.c.0.s8 %v5713
      %v5715 = vlaneseq
      %v5716 = vshrl.u32 %v5715, 7
      %v5717 = vsub.s32 %v5714, %v5716
      %v5718 = vrot.slane %v5704, %v5717
      %v5719 = vcombine.low %v5711, %v5718
      %v5720 = vcombine.low %v3621, %v3628
      %v5722 = vunpack.c.l.s4 1966171168
      %v5723 = vunpack.c.0.s8 %v5722
      %v5724 = vlaneseq
      %v5725 = vshrl.u32 %v5724, 7
      %v5726 = vsub.s32 %v5723, %v5725
      %v5727 = vrot.slane %v5720, %v5726
      %v5728 = vcombine.low %v4024, %v5727
      %v5729 = vcombine.low %v3670, %v3677
      %v5731 = vunpack.c.l.s4 1966171168
      %v5732 = vunpack.c.0.s8 %v5731
      %v5733 = vlaneseq
      %v5734 = vshrl.u32 %v5733, 7
      %v5735 = vsub.s32 %v5732, %v5734
      %v5736 = vrot.slane %v5729, %v5735
      %v5737 = vcombine.low %v4049, %v5736
      %v5738 = vcombine.low %v3719, %v3726
      %v5740 = vunpack.c.l.s4 1966171168
      %v5741 = vunpack.c.0.s8 %v5740
      %v5742 = vlaneseq
      %v5743 = vshrl.u32 %v5742, 7
      %v5744 = vsub.s32 %v5741, %v5743
      %v5745 = vrot.slane %v5738, %v5744
      %v5746 = vcombine.low %v4074, %v5745
      %v5747 = vcombine.low %v3733, %v3758
      %v5749 = vunpack.c.l.s4 1966171168
      %v5750 = vunpack.c.0.s8 %v5749
      %v5751 = vlaneseq
      %v5752 = vshrl.u32 %v5751, 7
      %v5753 = vsub.s32 %v5750, %v5752
      %v5754 = vrot.slane %v5747, %v5753
      %v5755 = vcombine.low %v5754, %v4122
      %v5756 = vcombine.low %v1766, %v1847
      %v5757 = vcombine.low %v1848, %v1849
      %v5758 = vcombine.low %v1864, %v1871
      %v5760 = vunpack.c.l.s4 1966171168
      %v5761 = vunpack.c.0.s8 %v5760
      %v5762 = vlaneseq
      %v5763 = vshrl.u32 %v5762, 7
      %v5764 = vsub.s32 %v5761, %v5763
      %v5765 = vrot.slane %v5756, %v5764
      %v5767 = vunpack.c.l.s4 1966171168
      %v5768 = vunpack.c.0.s8 %v5767
      %v5769 = vlaneseq
      %v5770 = vshrl.u32 %v5769, 7
      %v5771 = vsub.s32 %v5768, %v5770
      %v5772 = vrot.slane %v5757, %v5771
      %v5774 = vunpack.c.l.s4 1966171168
      %v5775 = vunpack.c.0.s8 %v5774
      %v5776 = vlaneseq
      %v5777 = vshrl.u32 %v5776, 7
      %v5778 = vsub.s32 %v5775, %v5777
      %v5779 = vrot.slane %v5758, %v5778
      %v5780 = vcombine.low %v4131, %v5765
      %v5781 = vcombine.low %v5772, %v5779
      %v5783 = vunpack.c.l.s4 1966171168
      %v5784 = vunpack.c.0.s8 %v5783
      %v5785 = vlaneseq
      %v5786 = vshrl.u32 %v5785, 7
      %v5787 = vsub.s32 %v5784, %v5786
      %v5788 = vrot.slane %v5780, %v5787
      %v5790 = vunpack.c.l.s4 1966171168
      %v5791 = vunpack.c.0.s8 %v5790
      %v5792 = vlaneseq
      %v5793 = vshrl.u32 %v5792, 7
      %v5794 = vsub.s32 %v5791, %v5793
      %v5795 = vrot.slane %v5781, %v5794
      %v5796 = vcombine.low %v5788, %v5795
      %v5797 = vcombine.low %v1872, %v1873
      %v5799 = vunpack.c.l.s4 1966171168
      %v5800 = vunpack.c.0.s8 %v5799
      %v5801 = vlaneseq
      %v5802 = vshrl.u32 %v5801, 7
      %v5803 = vsub.s32 %v5800, %v5802
      %v5804 = vrot.slane %v5797, %v5803
      %v5806 = vunpack.c.l.s4 1966171168
      %v5807 = vunpack.c.0.s8 %v5806
      %v5808 = vlaneseq
      %v5809 = vshrl.u32 %v5808, 7
      %v5810 = vsub.s32 %v5807, %v5809
      %v5811 = vrot.slane %v5804, %v5810
      %5812 = vrot.lane.b32.xlu0 %v5657, 32
      %v5813 = vpop.permute.xlu0 %5812
      %5814 = vrot.lane.b32.xlu0 %v5666, 32
      %v5815 = vpop.permute.xlu0 %5814
      %5816 = vrot.lane.b32.xlu0 %v5675, 32
      %v5817 = vpop.permute.xlu0 %5816
      %5818 = vrot.lane.b32.xlu0 %v5684, 32
      %v5819 = vpop.permute.xlu0 %5818
      %5820 = vrot.lane.b32.xlu0 %v5693, 32
      %v5821 = vpop.permute.xlu0 %5820
      %5822 = vrot.lane.b32.xlu0 %v5702, 32
      %v5823 = vpop.permute.xlu0 %5822
      %5824 = vrot.lane.b32.xlu0 %v5719, 32
      %v5825 = vpop.permute.xlu0 %5824
      %5826 = vrot.lane.b32.xlu0 %v5728, 32
      %v5827 = vpop.permute.xlu0 %5826
      %5828 = vrot.lane.b32.xlu0 %v5737, 32
      %v5829 = vpop.permute.xlu0 %5828
      %5830 = vrot.lane.b32.xlu0 %v5746, 32
      %v5831 = vpop.permute.xlu0 %5830
      %5832 = vrot.lane.b32.xlu0 %v5755, 32
      %v5833 = vpop.permute.xlu0 %5832
      %5834 = vrot.lane.b32.xlu0 %v5796, 32
      %v5835 = vpop.permute.xlu0 %5834
      %5836 = vrot.lane.b32.xlu0 %v5811, 32
      %v5837 = vpop.permute.xlu0 %5836
      %vm5838 = vcmask 31744
      %v5841 = vsel %vm5838, %v1979, %v3138
      %v5844 = vsel %vm5838, %v2028, %v3140
      %v5847 = vsel %vm5838, %v2077, %v3142
      %v5850 = vsel %vm5838, %v2126, %v3144
      %v5853 = vsel %vm5838, %v2175, %v3146
      %v5856 = vsel %vm5838, %v2224, %v3148
      %v5859 = vsel %vm5838, %v2273, %v3150
      %v5862 = vsel %vm5838, %v2322, %v3152
      %v5865 = vsel %vm5838, %v2371, %v3154
      %v5868 = vsel %vm5838, %v2420, %v3156
      %v5871 = vsel %vm5838, %v2469, %v3158
      %v5874 = vsel %vm5838, %v2518, %v3160
      %v5877 = vsel %vm5838, %v2533, %v3162
      %vm5878 = vcmask 64512
      %v5880 = vsel %vm5878, %v5841, %v3767
      %v5882 = vsel %vm5878, %v5844, %v3769
      %v5884 = vsel %vm5878, %v5847, %v3771
      %v5886 = vsel %vm5878, %v5850, %v3773
      %v5888 = vsel %vm5878, %v5853, %v3775
      %v5890 = vsel %vm5878, %v5856, %v3777
      %v5892 = vsel %vm5878, %v5859, %v3779
      %v5894 = vsel %vm5878, %v5862, %v3781
      %v5896 = vsel %vm5878, %v5865, %v3783
      %v5898 = vsel %vm5878, %v5868, %v3785
      %v5900 = vsel %vm5878, %v5871, %v3787
      %v5902 = vsel %vm5878, %v5874, %v3789
      %v5904 = vsel %vm5878, %v5877, %v3791
      %vm5905 = vcmask 97280
      %v5907 = vsel %vm5905, %v5880, %v4140
      %v5909 = vsel %vm5905, %v5882, %v4142
      %v5911 = vsel %vm5905, %v5884, %v4144
      %v5913 = vsel %vm5905, %v5886, %v4146
      %v5915 = vsel %vm5905, %v5888, %v4148
      %v5917 = vsel %vm5905, %v5890, %v4150
      %v5919 = vsel %vm5905, %v5892, %v4152
      %v5921 = vsel %vm5905, %v5894, %v4154
      %v5923 = vsel %vm5905, %v5896, %v4156
      %v5925 = vsel %vm5905, %v5898, %v4158
      %v5927 = vsel %vm5905, %v5900, %v4160
      %v5929 = vsel %vm5905, %v5902, %v4162
      %v5931 = vsel %vm5905, %v5904, %v4164
      %vm5932 = vcmask 130048
      %v5934 = vsel %vm5932, %v5907, %v4769
      %v5936 = vsel %vm5932, %v5909, %v4771
      %v5938 = vsel %vm5932, %v5911, %v4773
      %v5940 = vsel %vm5932, %v5913, %v4775
      %v5942 = vsel %vm5932, %v5915, %v4777
      %v5944 = vsel %vm5932, %v5917, %v4779
      %v5946 = vsel %vm5932, %v5919, %v4781
      %v5948 = vsel %vm5932, %v5921, %v4783
      %v5950 = vsel %vm5932, %v5923, %v4785
      %v5952 = vsel %vm5932, %v5925, %v4787
      %v5954 = vsel %vm5932, %v5927, %v4789
      %v5956 = vsel %vm5932, %v5929, %v4791
      %v5958 = vsel %vm5932, %v5931, %v4793
      %vm5959 = vcmask 162816
      %v5961 = vsel %vm5959, %v5934, %v5054
      %v5963 = vsel %vm5959, %v5936, %v5056
      %v5965 = vsel %vm5959, %v5938, %v5058
      %v5967 = vsel %vm5959, %v5940, %v5060
      %v5969 = vsel %vm5959, %v5942, %v5062
      %v5971 = vsel %vm5959, %v5944, %v5064
      %v5973 = vsel %vm5959, %v5946, %v5066
      %v5975 = vsel %vm5959, %v5948, %v5068
      %v5977 = vsel %vm5959, %v5950, %v5070
      %v5979 = vsel %vm5959, %v5952, %v5072
      %v5981 = vsel %vm5959, %v5954, %v5074
      %v5983 = vsel %vm5959, %v5956, %v5076
      %v5985 = vsel %vm5959, %v5958, %v5078
      %vm5986 = vcmask 195584
      %v5988 = vsel %vm5986, %v5961, %v5331
      %v5990 = vsel %vm5986, %v5963, %v5333
      %v5992 = vsel %vm5986, %v5965, %v5335
      %v5994 = vsel %vm5986, %v5967, %v5337
      %v5996 = vsel %vm5986, %v5969, %v5339
      %v5998 = vsel %vm5986, %v5971, %v5341
      %v6000 = vsel %vm5986, %v5973, %v5343
      %v6002 = vsel %vm5986, %v5975, %v5345
      %v6004 = vsel %vm5986, %v5977, %v5347
      %v6006 = vsel %vm5986, %v5979, %v5349
      %v6008 = vsel %vm5986, %v5981, %v5351
      %v6010 = vsel %vm5986, %v5983, %v5353
      %v6012 = vsel %vm5986, %v5985, %v5355
      %vm6013 = vcmask 228352
      %v6015 = vsel %vm6013, %v5988, %v5624
      %v6017 = vsel %vm6013, %v5990, %v5626
      %v6019 = vsel %vm6013, %v5992, %v5628
      %v6021 = vsel %vm6013, %v5994, %v5630
      %v6023 = vsel %vm6013, %v5996, %v5632
      %v6025 = vsel %vm6013, %v5998, %v5634
      %v6027 = vsel %vm6013, %v6000, %v5636
      %v6029 = vsel %vm6013, %v6002, %v5638
      %v6031 = vsel %vm6013, %v6004, %v5640
      %v6033 = vsel %vm6013, %v6006, %v5642
      %v6035 = vsel %vm6013, %v6008, %v5644
      %v6037 = vsel %vm6013, %v6010, %v5646
      %v6039 = vsel %vm6013, %v6012, %v5648
      %vm6040 = vcmask 261120
      %v6042 = vsel %vm6040, %v6015, %v5813
      %v6044 = vsel %vm6040, %v6017, %v5815
      %v6046 = vsel %vm6040, %v6019, %v5817
      %v6048 = vsel %vm6040, %v6021, %v5819
      %v6050 = vsel %vm6040, %v6023, %v5821
      %v6052 = vsel %vm6040, %v6025, %v5823
      %v6054 = vsel %vm6040, %v6027, %v5825
      %v6056 = vsel %vm6040, %v6029, %v5827
      %v6058 = vsel %vm6040, %v6031, %v5829
      %v6060 = vsel %vm6040, %v6033, %v5831
      %v6062 = vsel %vm6040, %v6035, %v5833
      %v6064 = vsel %vm6040, %v6037, %v5835
      %v6066 = vsel %vm6040, %v6039, %v5837
      %v6067 = vld [vmem:[%s1] sm:$0xf]
      %v6068 = vld [vmem:[%s1 + $0x4] sm:$0xf]
      %v6069 = vld [vmem:[%s1 + $0x8] sm:$0xf]
      %v6070 = vld [vmem:[%s1 + $0xc] sm:$0xf]
      %v6071 = vld [vmem:[%s1 + $0x10] sm:$0x3]
      %v6072 = vld [vmem:[%s2] sm:$0x1]
      %v6074 = vlaneseq
      %v6075 = vshrl.u32 %v6074, 7
      %v6076 = vsub.s32 0, %v6075
      %v6077 = vrot.slane %v6072, %v6076
      %v6084 = vunpack.c.l.b16 %v6067
      %v6085 = vunpack.c.l.b16 %v6068
      %v6086 = vunpack.c.l.b16 %v6069
      %v6087 = vunpack.c.l.b16 %v6070
      %v6088 = vunpack.c.l.b16 %v6071
      %v6089 = vpack.c.b16 %v6085, %v6084
      %v6090 = vpack.c.b16 %v6087, %v6086
      %v6091 = vpack.c.b16 %v6088, %v6088
      %vm6094 = vcmask 293888
      %v6095 = vsel %vm6094, %v6042, 0
      %v6097 = vsel %vm6094, %v6044, 0
      %v6099 = vsel %vm6094, %v6046, 0
      %v6101 = vsel %vm6094, %v6048, 0
      %v6103 = vsel %vm6094, %v6050, 0
      %v6105 = vsel %vm6094, %v6052, 0
      %v6107 = vsel %vm6094, %v6054, 0
      %v6109 = vsel %vm6094, %v6056, 0
      %v6111 = vsel %vm6094, %v6058, 0
      %v6113 = vsel %vm6094, %v6060, 0
      %v6115 = vsel %vm6094, %v6062, 0
      %v6117 = vsel %vm6094, %v6064, 0
      %v6119 = vsel %vm6094, %v6066, 0
      %vm6121 = vcmask 1041408
      %v6123 = vsel %vm6121, %v6091, 0
      %6125 = vmatprep.subr.bf16.mxu0 0
      %6126 = vmatpush1.bf16.msra.mxu0 0
      %6127 = vmatprep.subr.bf16.mxu0 0
      %6128 = vmatpush1.bf16.msra.mxu0 0
      %6129 = vmatprep.subr.bf16.mxu0 0
      %6130 = vmatpush1.bf16.msra.mxu0 0
      %6131 = vmatprep.subr.bf16.mxu0 0
      %6132 = vmatpush1.bf16.msra.mxu0 0
      %6133 = vmatprep.subr.bf16.mxu0 0
      %6134 = vmatpush1.bf16.msra.mxu0 0
      %6135 = vmatprep.subr.bf16.mxu0 0
      %6136 = vmatpush1.bf16.msra.mxu0 %v6123
      %6137 = vmatprep.subr.bf16.mxu0 0
      %6138 = vmatpush1.bf16.msra.mxu0 %v6090
      %6139 = vmatprep.subr.bf16.mxu0 0
      %6140 = vmatpush1.bf16.msra.mxu0 %v6089
      %6141 = vmatprep.subr.bf16.mxu0 0
      %6142 = vmatpush2.bf16.msra.mxu0 0
      %6143 = vmatprep.subr.bf16.mxu0 0
      %6144 = vmatpush2.bf16.msra.mxu0 0
      %6145 = vmatprep.subr.bf16.mxu0 0
      %6146 = vmatpush2.bf16.msra.mxu0 0
      %6147 = vmatprep.subr.bf16.mxu0 0
      %6148 = vmatpush2.bf16.msra.mxu0 0
      %6149 = vmatprep.subr.bf16.mxu0 0
      %6150 = vmatpush2.bf16.msra.mxu0 0
      %6151 = vmatprep.subr.bf16.mxu0 0
      %6152 = vmatpush2.bf16.msra.mxu0 0
      %6153 = vmatprep.subr.bf16.mxu0 0
      %6154 = vmatpush2.bf16.msra.mxu0 0
      %6155 = vmatprep.subr.bf16.mxu0 0
      %6156 = vmatpush2.bf16.msra.mxu0 0
      %6157 = vmatprep.mubr.bf16.mxu0 0
      %6158 = vmatmul.mubr.bf16.gmra.mxu0 %v6095
      %v6159 = vpop.f32.mrf.mxu0
      %v6160 = vadd.f32 %v6077, %v6159
      %v6161 = vpop.f32.mrf.mxu0
      %v6162 = vpop.f32.mrf.mxu0
      %v6163 = vadd.f32 %v6077, %v6162
      %v6164 = vpop.f32.mrf.mxu0
      %6165 = vmatprep.mubr.bf16.mxu0 0
      %6166 = vmatmul.mubr.bf16.gmra.mxu0 %v6097
      %v6167 = vpop.f32.mrf.mxu0
      %v6168 = vadd.f32 %v6077, %v6167
      %v6169 = vpop.f32.mrf.mxu0
      %v6170 = vpop.f32.mrf.mxu0
      %v6171 = vadd.f32 %v6077, %v6170
      %v6172 = vpop.f32.mrf.mxu0
      %6173 = vmatprep.mubr.bf16.mxu0 0
      %6174 = vmatmul.mubr.bf16.gmra.mxu0 %v6099
      %v6175 = vpop.f32.mrf.mxu0
      %v6176 = vadd.f32 %v6077, %v6175
      %v6177 = vpop.f32.mrf.mxu0
      %v6178 = vpop.f32.mrf.mxu0
      %v6179 = vadd.f32 %v6077, %v6178
      %v6180 = vpop.f32.mrf.mxu0
      %6181 = vmatprep.mubr.bf16.mxu0 0
      %6182 = vmatmul.mubr.bf16.gmra.mxu0 %v6101
      %v6183 = vpop.f32.mrf.mxu0
      %v6184 = vadd.f32 %v6077, %v6183
      %v6185 = vpop.f32.mrf.mxu0
      %v6186 = vpop.f32.mrf.mxu0
      %v6187 = vadd.f32 %v6077, %v6186
      %v6188 = vpop.f32.mrf.mxu0
      %6189 = vmatprep.mubr.bf16.mxu0 0
      %6190 = vmatmul.mubr.bf16.gmra.mxu0 %v6103
      %v6191 = vpop.f32.mrf.mxu0
      %v6192 = vadd.f32 %v6077, %v6191
      %v6193 = vpop.f32.mrf.mxu0
      %v6194 = vpop.f32.mrf.mxu0
      %v6195 = vadd.f32 %v6077, %v6194
      %v6196 = vpop.f32.mrf.mxu0
      %6197 = vmatprep.mubr.bf16.mxu0 0
      %6198 = vmatmul.mubr.bf16.gmra.mxu0 %v6105
      %v6199 = vpop.f32.mrf.mxu0
      %v6200 = vadd.f32 %v6077, %v6199
      %v6201 = vpop.f32.mrf.mxu0
      %v6202 = vpop.f32.mrf.mxu0
      %v6203 = vadd.f32 %v6077, %v6202
      %v6204 = vpop.f32.mrf.mxu0
      %6205 = vmatprep.mubr.bf16.mxu0 0
      %6206 = vmatmul.mubr.bf16.gmra.mxu0 %v6107
      %v6207 = vpop.f32.mrf.mxu0
      %v6208 = vadd.f32 %v6077, %v6207
      %v6209 = vpop.f32.mrf.mxu0
      %v6210 = vpop.f32.mrf.mxu0
      %v6211 = vadd.f32 %v6077, %v6210
      %v6212 = vpop.f32.mrf.mxu0
      %6213 = vmatprep.mubr.bf16.mxu0 0
      %6214 = vmatmul.mubr.bf16.gmra.mxu0 %v6109
      %v6215 = vpop.f32.mrf.mxu0
      %v6216 = vadd.f32 %v6077, %v6215
      %v6217 = vpop.f32.mrf.mxu0
      %v6218 = vpop.f32.mrf.mxu0
      %v6219 = vadd.f32 %v6077, %v6218
      %v6220 = vpop.f32.mrf.mxu0
      %6221 = vmatprep.mubr.bf16.mxu0 0
      %6222 = vmatmul.mubr.bf16.gmra.mxu0 %v6111
      %v6223 = vpop.f32.mrf.mxu0
      %v6224 = vadd.f32 %v6077, %v6223
      %v6225 = vpop.f32.mrf.mxu0
      %v6226 = vpop.f32.mrf.mxu0
      %v6227 = vadd.f32 %v6077, %v6226
      %v6228 = vpop.f32.mrf.mxu0
      %6229 = vmatprep.mubr.bf16.mxu0 0
      %6230 = vmatmul.mubr.bf16.gmra.mxu0 %v6113
      %v6231 = vpop.f32.mrf.mxu0
      %v6232 = vadd.f32 %v6077, %v6231
      %v6233 = vpop.f32.mrf.mxu0
      %v6234 = vpop.f32.mrf.mxu0
      %v6235 = vadd.f32 %v6077, %v6234
      %v6236 = vpop.f32.mrf.mxu0
      %6237 = vmatprep.mubr.bf16.mxu0 0
      %6238 = vmatmul.mubr.bf16.gmra.mxu0 %v6115
      %v6239 = vpop.f32.mrf.mxu0
      %v6240 = vadd.f32 %v6077, %v6239
      %v6241 = vpop.f32.mrf.mxu0
      %v6242 = vpop.f32.mrf.mxu0
      %v6243 = vadd.f32 %v6077, %v6242
      %v6244 = vpop.f32.mrf.mxu0
      %6245 = vmatprep.mubr.bf16.mxu0 0
      %6246 = vmatmul.mubr.bf16.gmra.mxu0 %v6117
      %v6247 = vpop.f32.mrf.mxu0
      %v6248 = vadd.f32 %v6077, %v6247
      %v6249 = vpop.f32.mrf.mxu0
      %v6250 = vpop.f32.mrf.mxu0
      %v6251 = vadd.f32 %v6077, %v6250
      %v6252 = vpop.f32.mrf.mxu0
      %6253 = vmatprep.mubr.bf16.mxu0 0
      %6254 = vmatmul.mubr.bf16.gmra.mxu0 %v6119
      %v6255 = vpop.f32.mrf.mxu0
      %v6256 = vadd.f32 %v6077, %v6255
      %v6257 = vpop.f32.mrf.mxu0
      %v6258 = vpop.f32.mrf.mxu0
      %v6259 = vpop.f32.mrf.mxu0
      %6260 = vdwg.mxu0
      %6261 = vst [vmem:[%s170] sm:$0xff] %v6160
      %6262 = vst [vmem:[%s170 + $0x8] sm:$0xff] %v6163
      %6263 = vst [vmem:[%s170 + $0x10] sm:$0xff] %v6168
      %6264 = vst [vmem:[%s170 + $0x18] sm:$0xff] %v6171
      %6265 = vst [vmem:[%s170 + $0x20] sm:$0xff] %v6176
      %6266 = vst [vmem:[%s170 + $0x28] sm:$0xff] %v6179
      %6267 = vst [vmem:[%s170 + $0x30] sm:$0xff] %v6184
      %6268 = vst [vmem:[%s170 + $0x38] sm:$0xff] %v6187
      %6269 = vst [vmem:[%s170 + $0x40] sm:$0xff] %v6192
      %6270 = vst [vmem:[%s170 + $0x48] sm:$0xff] %v6195
      %6271 = vst [vmem:[%s170 + $0x50] sm:$0xff] %v6200
      %6272 = vst [vmem:[%s170 + $0x58] sm:$0xff] %v6203
      %6273 = vst [vmem:[%s170 + $0x60] sm:$0xff] %v6208
      %6274 = vst [vmem:[%s170 + $0x68] sm:$0xff] %v6211
      %6275 = vst [vmem:[%s170 + $0x70] sm:$0xff] %v6216
      %6276 = vst [vmem:[%s170 + $0x78] sm:$0xff] %v6219
      %6277 = vst [vmem:[%s170 + $0x80] sm:$0xff] %v6224
      %6278 = vst [vmem:[%s170 + $0x88] sm:$0xff] %v6227
      %6279 = vst [vmem:[%s170 + $0x90] sm:$0xff] %v6232
      %6280 = vst [vmem:[%s170 + $0x98] sm:$0xff] %v6235
      %6281 = vst [vmem:[%s170 + $0xa0] sm:$0xff] %v6240
      %6282 = vst [vmem:[%s170 + $0xa8] sm:$0xff] %v6243
      %6283 = vst [vmem:[%s170 + $0xb0] sm:$0xff] %v6248
      %6284 = vst [vmem:[%s170 + $0xb8] sm:$0xff] %v6251
      %6285 = vst [vmem:[%s170 + $0xc0] sm:$0xf] %v6256
      %p6286 = scmp.lt.s32.totalorder %s14, 1
      %s6287 = scalar_select %p6286, %s14, 1
      %s6288 = smul.addr %s6287, 25
      %s6289 = smul.addr %s6288, 8
      %s6290 = scalar_lea.vmem %s3, %s6289
      // Predicated region
      $region33: #{tpu_custom_call.1} parent=31 // pred_check
        %p6291 = pneg %p100
      $region34: #{tpu_custom_call.1} parent=31 // pred_check_branch
        %6293 = sbr.rel (%p6291) target = $region36
      $region35: #{tpu_custom_call.1} parent=31 // pred_region
        _
      $region36: #{tpu_custom_call.1} parent=31 // pred_fallthru
        _
    $region32: #{tpu_custom_call.1} parent=5 // pred_fallthru
      _
    %p6294 = scmp.le.s32.totalorder 2, %s9
    // Predicated region
    $region37: #{tpu_custom_call.1} parent=5 // pred_check
      %p6295 = pneg %p6294
    $region38: #{tpu_custom_call.1} parent=5 // pred_check_branch
      %6297 = sbr.rel (%p6295) target = $region40
    $region39: #{tpu_custom_call.1} parent=5 // pred_region
      %s6298 = ssub.s32 %s9, 2
      // Predicated region
      $region41: #{tpu_custom_call.1} parent=39 // pred_check
        %p6299 = pneg %p106
      $region42: #{tpu_custom_call.1} parent=39 // pred_check_branch
        %6301 = sbr.rel (%p6299) target = $region44
      $region43: #{tpu_custom_call.1} parent=39 // pred_region
        %p6302 = scmp.lt.s32.totalorder %s15, 1
        %s6303 = scalar_select %p6302, %s15, 1
        %s6304 = smul.addr %s6303, 25
        %s6305 = smul.addr %s6304, 8
        %s6306 = scalar_lea.vmem %s3, %s6305
      $region44: #{tpu_custom_call.1} parent=39 // pred_fallthru
        _
    $region40: #{tpu_custom_call.1} parent=5 // pred_fallthru
      _
  $region6: #{tpu_custom_call.1} parent=0 // loop_footer
    %s13 = sadd.s32 1, %s9
  $region7: #{tpu_custom_call.1} parent=0 // loop_footer_branch
    %8 = sbr.rel target = $region3
  $region8: #{tpu_custom_call.1} parent=0 // loop_exit
    _

</llo_original>
